<compile_context>
chip_gen: v7x
topology: tpu7x:2x2x1
jax: 0.10.0
libtpu: 0.0.40
codegen_flags: <defaults>
</compile_context>

<pallas_src>
import functools
import math

import jax
import jax.numpy as jnp
from jax.experimental import pallas as pl
from jax.experimental.pallas import tpu as pltpu


_VMEM_LIMIT = 32 * 1024 * 1024   # explicit scoped-VMEM budget (v5e default is only 16 MiB)


def _round_up(x, m):
    return (x + m - 1) // m * m


def _row_tile(m, tm):
    tm_eff = tm if m >= tm else _round_up(m, 8)
    return tm_eff, _round_up(m, tm_eff)


# --------------------------------------------------------------------------- kernels

def _ln_qkv_kernel(x_ref, gb_ref, w_ref, b_ref, y_ref, o_ref, *, eps, c_true):
    """Fused LayerNorm (over true channels) + QKV projection; also writes the LN output."""
    x = x_ref[...].astype(jnp.float32)                        # (tm, Cp); padded cols are zero
    inv_c = 1.0 / c_true
    mean = jnp.sum(x, axis=-1, keepdims=True) * inv_c
    mean_sq = jnp.sum(x * x, axis=-1, keepdims=True) * inv_c
    inv = jax.lax.rsqrt(mean_sq - mean * mean + eps)
    gb = gb_ref[...].astype(jnp.float32)                      # (2, Cp): [gamma; beta], zero-padded
    y = (x - mean) * inv * gb[0:1, :] + gb[1:2, :]            # padded cols stay exactly zero
    y_ref[...] = y.astype(y_ref.dtype)
    acc = jnp.dot(y.astype(jnp.bfloat16), w_ref[...],
                  preferred_element_type=jnp.float32)         # (tm, 3Cp_pad)
    o_ref[...] = (acc + b_ref[...].astype(jnp.float32)).astype(o_ref.dtype)


def _proj_residual_kernel(x_ref, r_ref, w_ref, b_ref, o_ref):
    """out = x @ W + b + r   (attention out-proj fused with the SwinAttention_tp residual)."""
    acc = jnp.dot(x_ref[...].astype(jnp.bfloat16), w_ref[...],
                  preferred_element_type=jnp.float32)
    acc = acc + b_ref[...].astype(jnp.float32) + r_ref[...].astype(jnp.float32)
    o_ref[...] = acc.astype(o_ref.dtype)


def _ln_mlp_kernel(x_ref, gb_ref, w1_ref, b1_ref, w2_ref, b2_ref, o_ref, *, eps, c_true):
    """Fused  LN_after -> FC1 -> GELU -> FC2  plus both residuals:  out = x + y2 + mlp."""
    x = x_ref[...].astype(jnp.float32)                        # (tm, Cp); padded cols are zero
    inv_c = 1.0 / c_true
    mean = jnp.sum(x, axis=-1, keepdims=True) * inv_c
    mean_sq = jnp.sum(x * x, axis=-1, keepdims=True) * inv_c
    inv = jax.lax.rsqrt(mean_sq - mean * mean + eps)
    gb = gb_ref[...].astype(jnp.float32)
    y = (x - mean) * inv * gb[0:1, :] + gb[1:2, :]            # padded cols stay zero
    h1 = jnp.dot(y.astype(jnp.bfloat16), w1_ref[...],
                 preferred_element_type=jnp.float32)          # (tm, Hp)
    h1 = jax.nn.gelu(h1 + b1_ref[...].astype(jnp.float32), approximate=True)
    mlp = jnp.dot(h1.astype(jnp.bfloat16), w2_ref[...],
                  preferred_element_type=jnp.float32)         # (tm, Cp)
    mlp = mlp + b2_ref[...].astype(jnp.float32)
    o_ref[...] = (x + y + mlp).astype(o_ref.dtype)            # padded cols stay zero


def _window_attn_kernel(q_ref, k_ref, v_ref, o_ref, *, scale):
    """Full softmax attention over a block of (window*head) rows; ws*ws fits in one tile."""
    q = (q_ref[...].astype(jnp.float32) * scale).astype(jnp.bfloat16)
    k = k_ref[...].astype(jnp.bfloat16)
    v = v_ref[...].astype(jnp.bfloat16)
    s = jnp.einsum("bqd,bkd->bqk", q, k, preferred_element_type=jnp.float32)
    m = jnp.max(s, axis=-1, keepdims=True)
    p = jnp.exp(s - m)
    p = p * pl.reciprocal(jnp.sum(p, axis=-1, keepdims=True), approx=True)
    o = jnp.einsum("bqk,bkd->bqd", p.astype(jnp.bfloat16), v,
                   preferred_element_type=jnp.float32)
    o_ref[...] = o.astype(o_ref.dtype)


# --------------------------------------------------------------------------- wrappers

def pallas_ln_qkv(x2d, gb, w_p, b_p, *, eps, c_true, tm=256):
    m, cp = x2d.shape
    n = w_p.shape[1]
    tm_eff, m_pad = _row_tile(m, tm)
    x_p = jnp.pad(x2d, ((0, m_pad - m), (0, 0)))
    y, out = pl.pallas_call(
        functools.partial(_ln_qkv_kernel, eps=eps, c_true=c_true),
        out_shape=(jax.ShapeDtypeStruct((m_pad, cp), x2d.dtype),
                   jax.ShapeDtypeStruct((m_pad, n), x2d.dtype)),
        grid_spec=pltpu.PrefetchScalarGridSpec(
            num_scalar_prefetch=0,
            grid=(m_pad // tm_eff,),
            in_specs=[
                pl.BlockSpec((tm_eff, cp), lambda i: (i, 0)),
                pl.BlockSpec((2, cp), lambda i: (0, 0)),
                pl.BlockSpec((cp, n), lambda i: (0, 0)),
                pl.BlockSpec((1, n), lambda i: (0, 0)),
            ],
            out_specs=[
                pl.BlockSpec((tm_eff, cp), lambda i: (i, 0)),
                pl.BlockSpec((tm_eff, n), lambda i: (i, 0)),
            ],
        ),
        compiler_params=pltpu.CompilerParams(
            dimension_semantics=("parallel",),
            vmem_limit_bytes=_VMEM_LIMIT,
        ),
    )(x_p, gb, w_p, b_p)
    return y[:m], out[:m]


def pallas_proj_residual(x2d, res2d, w_p, b_p, *, tm=256):
    m, cp = x2d.shape
    n = w_p.shape[1]
    tm_eff, m_pad = _row_tile(m, tm)
    x_p = jnp.pad(x2d, ((0, m_pad - m), (0, 0)))
    r_p = jnp.pad(res2d, ((0, m_pad - m), (0, 0)))
    out = pl.pallas_call(
        _proj_residual_kernel,
        out_shape=jax.ShapeDtypeStruct((m_pad, n), x2d.dtype),
        grid_spec=pltpu.PrefetchScalarGridSpec(
            num_scalar_prefetch=0,
            grid=(m_pad // tm_eff,),
            in_specs=[
                pl.BlockSpec((tm_eff, cp), lambda i: (i, 0)),
                pl.BlockSpec((tm_eff, n), lambda i: (i, 0)),
                pl.BlockSpec((cp, n), lambda i: (0, 0)),
                pl.BlockSpec((1, n), lambda i: (0, 0)),
            ],
            out_specs=pl.BlockSpec((tm_eff, n), lambda i: (i, 0)),
        ),
        compiler_params=pltpu.CompilerParams(
            dimension_semantics=("parallel",),
            vmem_limit_bytes=_VMEM_LIMIT,
        ),
    )(x_p, r_p, w_p, b_p)
    return out[:m]


def pallas_ln_mlp(x2d, gb, w1_p, b1_p, w2_p, b2_p, *, eps, c_true, tm=256):
    m, cp = x2d.shape
    hp = w1_p.shape[1]
    tm_eff, m_pad = _row_tile(m, tm)
    x_p = jnp.pad(x2d, ((0, m_pad - m), (0, 0)))
    out = pl.pallas_call(
        functools.partial(_ln_mlp_kernel, eps=eps, c_true=c_true),
        out_shape=jax.ShapeDtypeStruct((m_pad, cp), x2d.dtype),
        grid_spec=pltpu.PrefetchScalarGridSpec(
            num_scalar_prefetch=0,
            grid=(m_pad // tm_eff,),
            in_specs=[
                pl.BlockSpec((tm_eff, cp), lambda i: (i, 0)),
                pl.BlockSpec((2, cp), lambda i: (0, 0)),
                pl.BlockSpec((cp, hp), lambda i: (0, 0)),
                pl.BlockSpec((1, hp), lambda i: (0, 0)),
                pl.BlockSpec((hp, cp), lambda i: (0, 0)),
                pl.BlockSpec((1, cp), lambda i: (0, 0)),
            ],
            out_specs=pl.BlockSpec((tm_eff, cp), lambda i: (i, 0)),
        ),
        compiler_params=pltpu.CompilerParams(
            dimension_semantics=("parallel",),
            vmem_limit_bytes=_VMEM_LIMIT,
        ),
    )(x_p, gb, w1_p, b1_p, w2_p, b2_p)
    return out[:m]


def pallas_window_attention(q, k, v, *, scale, gb=8):
    g, s, dh = q.shape                                          # g = windows*batch*heads
    gb_eff = min(gb, g)
    g_pad = _round_up(g, gb_eff)
    pad = ((0, g_pad - g), (0, 0), (0, 0))
    q_p, k_p, v_p = (jnp.pad(t, pad) for t in (q, k, v))
    out = pl.pallas_call(
        functools.partial(_window_attn_kernel, scale=scale),
        out_shape=jax.ShapeDtypeStruct((g_pad, s, dh), q.dtype),
        grid_spec=pltpu.PrefetchScalarGridSpec(
            num_scalar_prefetch=0,
            grid=(g_pad // gb_eff,),
            in_specs=[
                pl.BlockSpec((gb_eff, s, dh), lambda i: (i, 0, 0)),
                pl.BlockSpec((gb_eff, s, dh), lambda i: (i, 0, 0)),
                pl.BlockSpec((gb_eff, s, dh), lambda i: (i, 0, 0)),
            ],
            out_specs=pl.BlockSpec((gb_eff, s, dh), lambda i: (i, 0, 0)),
        ),
        compiler_params=pltpu.CompilerParams(
            dimension_semantics=("parallel",),
            vmem_limit_bytes=_VMEM_LIMIT,
        ),
    )(q_p, k_p, v_p)
    return out[:g]


# --------------------------------------------------------------------------- glue

def window_partition_seqfirst(x, window_size):
    """torch window_partition(..., batch_dim=1): (H, W, B, C) -> (ws, ws, -1, C)."""
    height, width, batch, channels = x.shape
    x = x.reshape(height // window_size, window_size,
                  width // window_size, window_size, batch, channels)
    x = jnp.transpose(x, (0, 2, 1, 3, 4, 5))
    return x.reshape(window_size, window_size, -1, channels)


def window_reverse_seqfirst(windows, window_size, height, width):
    """torch window_reverse: (ws, ws, -1, C) -> (H, W, -1, C)."""
    channels = windows.shape[-1]
    x = windows.reshape(height // window_size, width // window_size,
                        window_size, window_size, -1, channels)
    x = jnp.transpose(x, (0, 2, 1, 3, 4, 5))
    return x.reshape(height, width, -1, channels)


def swin_block_forward(hidden_states, params, *, input_resolution, num_heads,
                       window_size, shift_size=0, eps=1e-5, tm=256):
    height, width = input_resolution
    seq, batch, channels = hidden_states.shape
    assert seq == height * width
    if min(input_resolution) <= window_size:        # same rule as SwinBlock_tp.__init__
        shift_size = 0
        window_size = min(input_resolution)
    ws = window_size
    head_dim = channels // num_heads
    scale = 1.0 / math.sqrt(head_dim)

    c = channels
    cp = _round_up(c, 128)          # lane-dense channel width for all kernel I/O
    n_qkv = _round_up(3 * c, 128)
    hidden_mlp = params["w_fc1"].shape[1]
    hp = _round_up(hidden_mlp, 128)

    # ---- one-time lane-dense padding of activations / params ----------------
    def pad_cols(v, n):
        return jnp.pad(v, (0, n - v.shape[0]))

    gb_before = jnp.stack([pad_cols(params["ln_before_g"], cp),
                           pad_cols(params["ln_before_b"], cp)]).astype(jnp.float32)
    gb_after = jnp.stack([pad_cols(params["ln_after_g"], cp),
                          pad_cols(params["ln_after_b"], cp)]).astype(jnp.float32)
    w_qkv_p = jnp.pad(params["w_qkv"], ((0, cp - c), (0, n_qkv - 3 * c))).astype(jnp.bfloat16)
    b_qkv_p = pad_cols(params["b_qkv"], n_qkv).reshape(1, n_qkv).astype(jnp.float32)
    w_proj_p = jnp.pad(params["w_proj"], ((0, cp - c), (0, cp - c))).astype(jnp.bfloat16)
    b_proj_p = pad_cols(params["b_proj"], cp).reshape(1, cp).astype(jnp.float32)
    w_fc1_p = jnp.pad(params["w_fc1"], ((0, cp - c), (0, hp - hidden_mlp))).astype(jnp.bfloat16)
    b_fc1_p = pad_cols(params["b_fc1"], hp).reshape(1, hp).astype(jnp.float32)
    w_fc2_p = jnp.pad(params["w_fc2"], ((0, hp - hidden_mlp), (0, cp - c))).astype(jnp.bfloat16)
    b_fc2_p = pad_cols(params["b_fc2"], cp).reshape(1, cp).astype(jnp.float32)

    x_pad = jnp.pad(hidden_states, ((0, 0), (0, 0), (0, cp - c)))   # (seq, B, Cp), pad cols zero
    shortcut = x_pad

    # ---- attention stage ----------------------------------------------------
    # Window partition / roll are per-position permutations; LayerNorm is
    # per-position over channels, so it commutes with them.  Window the raw
    # input (C wide, not 3C) and fuse LayerNorm_before into the QKV kernel.
    x4 = x_pad.reshape(height, width, batch, cp)
    if shift_size > 0:
        x4 = jnp.roll(x4, (-shift_size, -shift_size), axis=(0, 1))
        # TODO(synk): shifted-window attention mask (img_mask score masking) is
        #             not wired into the attention kernel.
    xw = window_partition_seqfirst(x4, ws)                     # (ws, ws, Bw, Cp)
    num_win_batch = xw.shape[2]
    seq_w = ws * ws
    xw2 = xw.reshape(seq_w * num_win_batch, cp)

    yw2, qkv = pallas_ln_qkv(xw2, gb_before, w_qkv_p, b_qkv_p,
                             eps=eps, c_true=c, tm=tm)         # (Mw, Cp), (Mw, 3Cpad)

    def split_heads(t):                                        # (Mw, C) -> (Bw*nh, Sw, dh)
        t = t.reshape(seq_w, num_win_batch, num_heads, head_dim)
        return t.transpose(1, 2, 0, 3).reshape(num_win_batch * num_heads, seq_w, head_dim)

    q = split_heads(qkv[:, :c])
    k = split_heads(qkv[:, c:2 * c])
    v = split_heads(qkv[:, 2 * c:3 * c])

    ctx = pallas_window_attention(q, k, v, scale=scale)        # (Bw*nh, Sw, dh)
    ctx = ctx.reshape(num_win_batch, num_heads, seq_w, head_dim)
    ctx = ctx.transpose(2, 0, 1, 3).reshape(seq_w * num_win_batch, c)
    ctx = jnp.pad(ctx, ((0, 0), (0, cp - c)))

    # out-proj + SwinAttention_tp residual fused in one kernel (drop_path = identity)
    attn = pallas_proj_residual(ctx, yw2, w_proj_p, b_proj_p, tm=tm)   # (Mw, Cp)

    attn = attn.reshape(ws, ws, num_win_batch, cp)
    rev = window_reverse_seqfirst(attn, ws, height, width)     # (H, W, B, Cp)
    if shift_size > 0:
        rev = jnp.roll(rev, (shift_size, shift_size), axis=(0, 1))
    hidden = shortcut + rev.reshape(seq, batch, cp)            # residual in SwinBlock_tp

    # ---- MLP stage (fully fused: LN_after + FC1 + GELU + FC2 + both residuals) ----
    h2 = hidden.reshape(seq * batch, cp)
    out2 = pallas_ln_mlp(h2, gb_after, w_fc1_p, b_fc1_p, w_fc2_p, b_fc2_p,
                         eps=eps, c_true=c, tm=tm)             # (M, Cp) = h + y2 + mlp
    return out2[:, :c].reshape(seq, batch, c)


# --------------------------------------------------------------------------- reference

def _reference(hidden_states, params, *, input_resolution, num_heads,
               window_size, shift_size, eps):
    height, width = input_resolution
    seq, batch, channels = hidden_states.shape
    if min(input_resolution) <= window_size:
        shift_size = 0
        window_size = min(input_resolution)
    ws = window_size
    head_dim = channels // num_heads
    scale = 1.0 / math.sqrt(head_dim)
    x = hidden_states.astype(jnp.float32)

    def layer_norm(z, g, b):
        mu = z.mean(-1, keepdims=True)
        var = ((z - mu) ** 2).mean(-1, keepdims=True)
        return (z - mu) / jnp.sqrt(var + eps) * g + b

    shortcut = x
    y = layer_norm(x, params["ln_before_g"], params["ln_before_b"])
    y4 = y.reshape(height, width, batch, channels)
    if shift_size > 0:
        y4 = jnp.roll(y4, (-shift_size, -shift_size), axis=(0, 1))
    yw = window_partition_seqfirst(y4, ws).reshape(ws * ws, -1, channels)
    seq_w, bw, _ = yw.shape

    qkv = jnp.einsum("sbc,cd->sbd", yw, params["w_qkv"]) + params["b_qkv"]

    def split(t):
        return t.reshape(seq_w, bw, num_heads, head_dim).transpose(1, 2, 0, 3)

    q, k, v = (split(qkv[..., i * channels:(i + 1) * channels]) for i in range(3))
    s = jnp.einsum("bhqd,bhkd->bhqk", q, k) * scale
    p = jax.nn.softmax(s, axis=-1)
    ctx = jnp.einsum("bhqk,bhkd->bhqd", p, v)
    ctx = ctx.transpose(2, 0, 1, 3).reshape(seq_w, bw, channels)
    attn = jnp.einsum("sbc,cd->sbd", ctx, params["w_proj"]) + params["b_proj"]
    attn = attn + yw
    rev = window_reverse_seqfirst(attn.reshape(ws, ws, -1, channels), ws, height, width)
    if shift_size > 0:
        rev = jnp.roll(rev, (shift_size, shift_size), axis=(0, 1))
    hidden = shortcut + rev.reshape(seq, batch, channels)

    y2 = layer_norm(hidden, params["ln_after_g"], params["ln_after_b"])
    h1 = jax.nn.gelu(jnp.einsum("sbc,cd->sbd", y2, params["w_fc1"]) + params["b_fc1"],
                     approximate=True)
    mlp = jnp.einsum("sbc,cd->sbd", h1, params["w_fc2"]) + params["b_fc2"]
    return hidden + y2 + mlp


# --------------------------------------------------------------------------- demo

if __name__ == "__main__":
    # Small config consistent with SwinBlock_tp.forward:
    #   input_resolution = (8, 8) -> seq = 64, batch = 2, channels = 32,
    #   num_heads = 2 (head_dim 16), mlp_ratio = 4, window_size >= min(res)
    #   -> single window, shift_size forced to 0 (the module's own rule).
    height, width = 8, 8
    batch = 2
    channels = 32
    num_heads = 2
    window_size_cfg = 8
    mlp_ratio = 4
    eps = 1e-5

    key = jax.random.PRNGKey(0)
    ks = jax.random.split(key, 12)
    hidden_states = jax.random.normal(ks[0], (height * width, batch, channels), jnp.float32)

    hidden_mlp = mlp_ratio * channels
    params = {
        "ln_before_g": 1.0 + 0.1 * jax.random.normal(ks[1], (channels,), jnp.float32),
        "ln_before_b": 0.05 * jax.random.normal(ks[2], (channels,), jnp.float32),
        "w_qkv": 0.02 * jax.random.normal(ks[3], (channels, 3 * channels), jnp.float32),
        "b_qkv": 0.02 * jax.random.normal(ks[4], (3 * channels,), jnp.float32),
        "w_proj": 0.02 * jax.random.normal(ks[5], (channels, channels), jnp.float32),
        "b_proj": 0.02 * jax.random.normal(ks[6], (channels,), jnp.float32),
        "ln_after_g": 1.0 + 0.1 * jax.random.normal(ks[7], (channels,), jnp.float32),
        "ln_after_b": 0.05 * jax.random.normal(ks[8], (channels,), jnp.float32),
        "w_fc1": 0.02 * jax.random.normal(ks[9], (channels, hidden_mlp), jnp.float32),
        "b_fc1": 0.02 * jax.random.normal(ks[10], (hidden_mlp,), jnp.float32),
        "w_fc2": 0.02 * jax.random.normal(ks[11], (hidden_mlp, channels), jnp.float32),
        "b_fc2": jnp.zeros((channels,), jnp.float32),
    }

    fwd = jax.jit(functools.partial(
        swin_block_forward,
        input_resolution=(height, width), num_heads=num_heads,
        window_size=window_size_cfg, shift_size=0, eps=eps))
    out = jax.block_until_ready(fwd(hidden_states, params))

    ref = _reference(hidden_states, params,
                     input_resolution=(height, width), num_heads=num_heads,
                     window_size=window_size_cfg, shift_size=0, eps=eps)

    assert out.shape == (height * width, batch, channels)
    # bf16-fed MXU vs pure-f32 reference -> relaxed tolerance.
    assert jnp.allclose(out, ref, atol=2e-2, rtol=2e-2), float(jnp.max(jnp.abs(out - ref)))
    print("KERNEL_OK")
</pallas_src>

<mosaic_0001>
module attributes {stable_mosaic.version = 11 : i64} {
  func.func @_ln_qkv_kernel(%arg0: i32, %arg1: memref<128x128xf32, #tpu.memory_space<vmem>>, %arg2: memref<2x128xf32, #tpu.memory_space<vmem>>, %arg3: memref<128x128xbf16, #tpu.memory_space<vmem>>, %arg4: memref<1x128xf32, #tpu.memory_space<vmem>>, %arg5: memref<128x128xf32, #tpu.memory_space<vmem>>, %arg6: memref<128x128xf32, #tpu.memory_space<vmem>>) attributes {dimension_semantics = [#tpu.dimension_semantics<parallel>], iteration_bounds = array<i64: 1>, scalar_prefetch = 0 : i64, scratch_operands = 0 : i64, tpu.core_type = #tpu.core_type<tc>, window_params = [{transform_indices = @transform_0, window_bounds = array<i64: 128, 128>}, {pipeline_mode = #tpu.pipeline_mode<synchronous>, transform_indices = @transform_1, window_bounds = array<i64: 2, 128>}, {pipeline_mode = #tpu.pipeline_mode<synchronous>, transform_indices = @transform_2, window_bounds = array<i64: 128, 128>}, {pipeline_mode = #tpu.pipeline_mode<synchronous>, transform_indices = @transform_3, window_bounds = array<i64: 1, 128>}, {transform_indices = @transform_4, window_bounds = array<i64: 128, 128>}, {transform_indices = @transform_5, window_bounds = array<i64: 128, 128>}]} {
    %c0 = arith.constant 0 : index
    %c0_0 = arith.constant 0 : index
    %0 = vector.load %arg1[%c0, %c0_0] : memref<128x128xf32, #tpu.memory_space<vmem>>, vector<128x128xf32>
    %cst = arith.constant dense<0.000000e+00> : vector<128xf32>
    %1 = vector.multi_reduction <add>, %0, %cst [1] : vector<128x128xf32> to vector<128xf32>
    %2 = vector.shape_cast %1 : vector<128xf32> to vector<128x1xf32>
    %cst_1 = arith.constant 3.125000e-02 : f32
    %3 = vector.broadcast %cst_1 : f32 to vector<128x1xf32>
    %4 = arith.mulf %2, %3 : vector<128x1xf32>
    %5 = arith.mulf %0, %0 : vector<128x128xf32>
    %cst_2 = arith.constant dense<0.000000e+00> : vector<128xf32>
    %6 = vector.multi_reduction <add>, %5, %cst_2 [1] : vector<128x128xf32> to vector<128xf32>
    %7 = vector.shape_cast %6 : vector<128xf32> to vector<128x1xf32>
    %cst_3 = arith.constant 3.125000e-02 : f32
    %8 = vector.broadcast %cst_3 : f32 to vector<128x1xf32>
    %9 = arith.mulf %7, %8 : vector<128x1xf32>
    %10 = arith.mulf %4, %4 : vector<128x1xf32>
    %11 = arith.subf %9, %10 : vector<128x1xf32>
    %cst_4 = arith.constant 9.99999974E-6 : f32
    %12 = vector.broadcast %cst_4 : f32 to vector<128x1xf32>
    %13 = arith.addf %11, %12 : vector<128x1xf32>
    %14 = math.rsqrt %13 : vector<128x1xf32>
    %c0_5 = arith.constant 0 : index
    %c0_6 = arith.constant 0 : index
    %15 = vector.load %arg2[%c0_5, %c0_6] : memref<2x128xf32, #tpu.memory_space<vmem>>, vector<2x128xf32>
    %16 = vector.broadcast %4 : vector<128x1xf32> to vector<128x128xf32>
    %17 = arith.subf %0, %16 : vector<128x128xf32>
    %18 = vector.broadcast %14 : vector<128x1xf32> to vector<128x128xf32>
    %19 = arith.mulf %17, %18 : vector<128x128xf32>
    %20 = vector.extract_strided_slice %15 {offsets = [0, 0], sizes = [1, 128], strides = [1, 1]} : vector<2x128xf32> to vector<1x128xf32>
    %21 = vector.broadcast %20 : vector<1x128xf32> to vector<128x128xf32>
    %22 = arith.mulf %19, %21 : vector<128x128xf32>
    %23 = vector.extract_strided_slice %15 {offsets = [1, 0], sizes = [1, 128], strides = [1, 1]} : vector<2x128xf32> to vector<1x128xf32>
    %24 = vector.broadcast %23 : vector<1x128xf32> to vector<128x128xf32>
    %25 = arith.addf %22, %24 : vector<128x128xf32>
    %c0_7 = arith.constant 0 : index
    %c0_8 = arith.constant 0 : index
    %26 = vector.load %arg5[%c0_7, %c0_8] : memref<128x128xf32, #tpu.memory_space<vmem>>, vector<128x128xf32>
    tpu.vector_store %arg5[%c0_7, %c0_8], %25 {strides = array<i32>} : memref<128x128xf32, #tpu.memory_space<vmem>>, vector<128x128xf32>,
    %27 = arith.truncf %25 : vector<128x128xf32> to vector<128x128xbf16>
    %c0_9 = arith.constant 0 : index
    %c0_10 = arith.constant 0 : index
    %28 = vector.load %arg3[%c0_9, %c0_10] : memref<128x128xbf16, #tpu.memory_space<vmem>>, vector<128x128xbf16>
    %cst_11 = arith.constant dense<0.000000e+00> : vector<128x128xf32>
    %29 = tpu.matmul %27, %28, %cst_11 {dimension_numbers = #tpu.dot_dimension_numbers<[1], [0], [0], [1], [0, 0, 1, 1], [], []>} : vector<128x128xbf16>, vector<128x128xbf16>, vector<128x128xf32> -> vector<128x128xf32>
    %c0_12 = arith.constant 0 : index
    %c0_13 = arith.constant 0 : index
    %30 = vector.load %arg4[%c0_12, %c0_13] : memref<1x128xf32, #tpu.memory_space<vmem>>, vector<1x128xf32>
    %31 = vector.broadcast %30 : vector<1x128xf32> to vector<128x128xf32>
    %32 = arith.addf %29, %31 : vector<128x128xf32>
    %c0_14 = arith.constant 0 : index
    %c0_15 = arith.constant 0 : index
    %33 = vector.load %arg6[%c0_14, %c0_15] : memref<128x128xf32, #tpu.memory_space<vmem>>, vector<128x128xf32>
    tpu.vector_store %arg6[%c0_14, %c0_15], %32 {strides = array<i32>} : memref<128x128xf32, #tpu.memory_space<vmem>>, vector<128x128xf32>,
    return
  }
  func.func @transform_0(%arg0: i32) -> (i32, i32) {
    %c0_i32 = arith.constant 0 : i32
    %c0_i32_0 = arith.constant 0 : i32
    return %arg0, %c0_i32 : i32, i32
  }
  func.func @transform_1(%arg0: i32) -> (i32, i32) {
    %c0_i32 = arith.constant 0 : i32
    %c0_i32_0 = arith.constant 0 : i32
    %c0_i32_1 = arith.constant 0 : i32
    return %c0_i32, %c0_i32_0 : i32, i32
  }
  func.func @transform_2(%arg0: i32) -> (i32, i32) {
    %c0_i32 = arith.constant 0 : i32
    %c0_i32_0 = arith.constant 0 : i32
    %c0_i32_1 = arith.constant 0 : i32
    return %c0_i32, %c0_i32_0 : i32, i32
  }
  func.func @transform_3(%arg0: i32) -> (i32, i32) {
    %c0_i32 = arith.constant 0 : i32
    %c0_i32_0 = arith.constant 0 : i32
    %c0_i32_1 = arith.constant 0 : i32
    return %c0_i32, %c0_i32_0 : i32, i32
  }
  func.func @transform_4(%arg0: i32) -> (i32, i32) {
    %c0_i32 = arith.constant 0 : i32
    %c0_i32_0 = arith.constant 0 : i32
    return %arg0, %c0_i32 : i32, i32
  }
  func.func @transform_5(%arg0: i32) -> (i32, i32) {
    %c0_i32 = arith.constant 0 : i32
    %c0_i32_0 = arith.constant 0 : i32
    return %arg0, %c0_i32 : i32, i32
  }
}

module attributes {stable_mosaic.version = 11 : i64} {
  func.func @_window_attn_kernel(%arg0: i32, %arg1: memref<4x64x16xf32, #tpu.memory_space<vmem>>, %arg2: memref<4x64x16xf32, #tpu.memory_space<vmem>>, %arg3: memref<4x64x16xf32, #tpu.memory_space<vmem>>, %arg4: memref<4x64x16xf32, #tpu.memory_space<vmem>>) attributes {dimension_semantics = [#tpu.dimension_semantics<parallel>], iteration_bounds = array<i64: 1>, scalar_prefetch = 0 : i64, scratch_operands = 0 : i64, tpu.core_type = #tpu.core_type<tc>, window_params = [{transform_indices = @transform_0, window_bounds = array<i64: 4, 64, 16>}, {transform_indices = @transform_1, window_bounds = array<i64: 4, 64, 16>}, {transform_indices = @transform_2, window_bounds = array<i64: 4, 64, 16>}, {transform_indices = @transform_3, window_bounds = array<i64: 4, 64, 16>}]} {
    %c0 = arith.constant 0 : index
    %c0_0 = arith.constant 0 : index
    %c0_1 = arith.constant 0 : index
    %0 = vector.load %arg1[%c0, %c0_0, %c0_1] : memref<4x64x16xf32, #tpu.memory_space<vmem>>, vector<4x64x16xf32>
    %cst = arith.constant 2.500000e-01 : f32
    %1 = vector.broadcast %cst : f32 to vector<4x64x16xf32>
    %2 = arith.mulf %0, %1 : vector<4x64x16xf32>
    %3 = arith.truncf %2 : vector<4x64x16xf32> to vector<4x64x16xbf16>
    %c0_2 = arith.constant 0 : index
    %c0_3 = arith.constant 0 : index
    %c0_4 = arith.constant 0 : index
    %4 = vector.load %arg2[%c0_2, %c0_3, %c0_4] : memref<4x64x16xf32, #tpu.memory_space<vmem>>, vector<4x64x16xf32>
    %5 = arith.truncf %4 : vector<4x64x16xf32> to vector<4x64x16xbf16>
    %c0_5 = arith.constant 0 : index
    %c0_6 = arith.constant 0 : index
    %c0_7 = arith.constant 0 : index
    %6 = vector.load %arg3[%c0_5, %c0_6, %c0_7] : memref<4x64x16xf32, #tpu.memory_space<vmem>>, vector<4x64x16xf32>
    %7 = arith.truncf %6 : vector<4x64x16xf32> to vector<4x64x16xbf16>
    "tpu.trace_start"() <{level = 10 : i32, message = "bqd,bkd->bqk"}> : () -> ()
    %cst_8 = arith.constant dense<0.000000e+00> : vector<4x64x64xf32>
    %8 = tpu.matmul %3, %5, %cst_8 {dimension_numbers = #tpu.dot_dimension_numbers<[2], [2], [1], [1], [0, 0, 0, 1, 1, 1], [0], [0]>} : vector<4x64x16xbf16>, vector<4x64x16xbf16>, vector<4x64x64xf32> -> vector<4x64x64xf32>
    "tpu.trace_stop"() : () -> ()
    %cst_9 = arith.constant dense<0xFF800000> : vector<4x64xf32>
    %9 = vector.multi_reduction <maximumf>, %8, %cst_9 [2] : vector<4x64x64xf32> to vector<4x64xf32>
    %10 = vector.shape_cast %9 : vector<4x64xf32> to vector<4x64x1xf32>
    %11 = vector.broadcast %10 : vector<4x64x1xf32> to vector<4x64x64xf32>
    %12 = arith.subf %8, %11 : vector<4x64x64xf32>
    %13 = math.exp %12 : vector<4x64x64xf32>
    %cst_10 = arith.constant dense<0.000000e+00> : vector<4x64xf32>
    %14 = vector.multi_reduction <add>, %13, %cst_10 [2] : vector<4x64x64xf32> to vector<4x64xf32>
    %15 = vector.shape_cast %14 : vector<4x64xf32> to vector<4x64x1xf32>
    %16 = tpu.reciprocal %15 {approx = true} : vector<4x64x1xf32> -> vector<4x64x1xf32>
    %17 = vector.broadcast %16 : vector<4x64x1xf32> to vector<4x64x64xf32>
    %18 = arith.mulf %13, %17 : vector<4x64x64xf32>
    %19 = arith.truncf %18 : vector<4x64x64xf32> to vector<4x64x64xbf16>
    "tpu.trace_start"() <{level = 10 : i32, message = "bqk,bkd->bqd"}> : () -> ()
    %cst_11 = arith.constant dense<0.000000e+00> : vector<4x64x16xf32>
    %20 = tpu.matmul %19, %7, %cst_11 {dimension_numbers = #tpu.dot_dimension_numbers<[2], [1], [1], [2], [0, 0, 0, 1, 1, 2], [0], [0]>} : vector<4x64x64xbf16>, vector<4x64x16xbf16>, vector<4x64x16xf32> -> vector<4x64x16xf32>
    "tpu.trace_stop"() : () -> ()
    %c0_12 = arith.constant 0 : index
    %c0_13 = arith.constant 0 : index
    %c0_14 = arith.constant 0 : index
    %21 = vector.load %arg4[%c0_12, %c0_13, %c0_14] : memref<4x64x16xf32, #tpu.memory_space<vmem>>, vector<4x64x16xf32>
    tpu.vector_store %arg4[%c0_12, %c0_13, %c0_14], %20 {strides = array<i32>} : memref<4x64x16xf32, #tpu.memory_space<vmem>>, vector<4x64x16xf32>,
    return
  }
  func.func @transform_0(%arg0: i32) -> (i32, i32, i32) {
    %c0_i32 = arith.constant 0 : i32
    %c0_i32_0 = arith.constant 0 : i32
    %c0_i32_1 = arith.constant 0 : i32
    return %arg0, %c0_i32, %c0_i32_0 : i32, i32, i32
  }
  func.func @transform_1(%arg0: i32) -> (i32, i32, i32) {
    %c0_i32 = arith.constant 0 : i32
    %c0_i32_0 = arith.constant 0 : i32
    %c0_i32_1 = arith.constant 0 : i32
    return %arg0, %c0_i32, %c0_i32_0 : i32, i32, i32
  }
  func.func @transform_2(%arg0: i32) -> (i32, i32, i32) {
    %c0_i32 = arith.constant 0 : i32
    %c0_i32_0 = arith.constant 0 : i32
    %c0_i32_1 = arith.constant 0 : i32
    return %arg0, %c0_i32, %c0_i32_0 : i32, i32, i32
  }
  func.func @transform_3(%arg0: i32) -> (i32, i32, i32) {
    %c0_i32 = arith.constant 0 : i32
    %c0_i32_0 = arith.constant 0 : i32
    %c0_i32_1 = arith.constant 0 : i32
    return %arg0, %c0_i32, %c0_i32_0 : i32, i32, i32
  }
}

module attributes {stable_mosaic.version = 11 : i64} {
  func.func @_proj_residual_kernel(%arg0: i32, %arg1: memref<128x128xf32, #tpu.memory_space<vmem>>, %arg2: memref<128x128xf32, #tpu.memory_space<vmem>>, %arg3: memref<128x128xbf16, #tpu.memory_space<vmem>>, %arg4: memref<1x128xf32, #tpu.memory_space<vmem>>, %arg5: memref<128x128xf32, #tpu.memory_space<vmem>>) attributes {dimension_semantics = [#tpu.dimension_semantics<parallel>], iteration_bounds = array<i64: 1>, scalar_prefetch = 0 : i64, scratch_operands = 0 : i64, tpu.core_type = #tpu.core_type<tc>, window_params = [{transform_indices = @transform_0, window_bounds = array<i64: 128, 128>}, {transform_indices = @transform_1, window_bounds = array<i64: 128, 128>}, {pipeline_mode = #tpu.pipeline_mode<synchronous>, transform_indices = @transform_2, window_bounds = array<i64: 128, 128>}, {pipeline_mode = #tpu.pipeline_mode<synchronous>, transform_indices = @transform_3, window_bounds = array<i64: 1, 128>}, {transform_indices = @transform_4, window_bounds = array<i64: 128, 128>}]} {
    %c0 = arith.constant 0 : index
    %c0_0 = arith.constant 0 : index
    %0 = vector.load %arg1[%c0, %c0_0] : memref<128x128xf32, #tpu.memory_space<vmem>>, vector<128x128xf32>
    %1 = arith.truncf %0 : vector<128x128xf32> to vector<128x128xbf16>
    %c0_1 = arith.constant 0 : index
    %c0_2 = arith.constant 0 : index
    %2 = vector.load %arg3[%c0_1, %c0_2] : memref<128x128xbf16, #tpu.memory_space<vmem>>, vector<128x128xbf16>
    %cst = arith.constant dense<0.000000e+00> : vector<128x128xf32>
    %3 = tpu.matmul %1, %2, %cst {dimension_numbers = #tpu.dot_dimension_numbers<[1], [0], [0], [1], [0, 0, 1, 1], [], []>} : vector<128x128xbf16>, vector<128x128xbf16>, vector<128x128xf32> -> vector<128x128xf32>
    %c0_3 = arith.constant 0 : index
    %c0_4 = arith.constant 0 : index
    %4 = vector.load %arg4[%c0_3, %c0_4] : memref<1x128xf32, #tpu.memory_space<vmem>>, vector<1x128xf32>
    %5 = vector.broadcast %4 : vector<1x128xf32> to vector<128x128xf32>
    %6 = arith.addf %3, %5 : vector<128x128xf32>
    %c0_5 = arith.constant 0 : index
    %c0_6 = arith.constant 0 : index
    %7 = vector.load %arg2[%c0_5, %c0_6] : memref<128x128xf32, #tpu.memory_space<vmem>>, vector<128x128xf32>
    %8 = arith.addf %6, %7 : vector<128x128xf32>
    %c0_7 = arith.constant 0 : index
    %c0_8 = arith.constant 0 : index
    %9 = vector.load %arg5[%c0_7, %c0_8] : memref<128x128xf32, #tpu.memory_space<vmem>>, vector<128x128xf32>
    tpu.vector_store %arg5[%c0_7, %c0_8], %8 {strides = array<i32>} : memref<128x128xf32, #tpu.memory_space<vmem>>, vector<128x128xf32>,
    return
  }
  func.func @transform_0(%arg0: i32) -> (i32, i32) {
    %c0_i32 = arith.constant 0 : i32
    %c0_i32_0 = arith.constant 0 : i32
    return %arg0, %c0_i32 : i32, i32
  }
  func.func @transform_1(%arg0: i32) -> (i32, i32) {
    %c0_i32 = arith.constant 0 : i32
    %c0_i32_0 = arith.constant 0 : i32
    return %arg0, %c0_i32 : i32, i32
  }
  func.func @transform_2(%arg0: i32) -> (i32, i32) {
    %c0_i32 = arith.constant 0 : i32
    %c0_i32_0 = arith.constant 0 : i32
    %c0_i32_1 = arith.constant 0 : i32
    return %c0_i32, %c0_i32_0 : i32, i32
  }
  func.func @transform_3(%arg0: i32) -> (i32, i32) {
    %c0_i32 = arith.constant 0 : i32
    %c0_i32_0 = arith.constant 0 : i32
    %c0_i32_1 = arith.constant 0 : i32
    return %c0_i32, %c0_i32_0 : i32, i32
  }
  func.func @transform_4(%arg0: i32) -> (i32, i32) {
    %c0_i32 = arith.constant 0 : i32
    %c0_i32_0 = arith.constant 0 : i32
    return %arg0, %c0_i32 : i32, i32
  }
}

module attributes {stable_mosaic.version = 11 : i64} {
  func.func @_ln_mlp_kernel(%arg0: i32, %arg1: memref<128x128xf32, #tpu.memory_space<vmem>>, %arg2: memref<2x128xf32, #tpu.memory_space<vmem>>, %arg3: memref<128x128xbf16, #tpu.memory_space<vmem>>, %arg4: memref<1x128xf32, #tpu.memory_space<vmem>>, %arg5: memref<128x128xbf16, #tpu.memory_space<vmem>>, %arg6: memref<1x128xf32, #tpu.memory_space<vmem>>, %arg7: memref<128x128xf32, #tpu.memory_space<vmem>>) attributes {dimension_semantics = [#tpu.dimension_semantics<parallel>], iteration_bounds = array<i64: 1>, scalar_prefetch = 0 : i64, scratch_operands = 0 : i64, tpu.core_type = #tpu.core_type<tc>, window_params = [{transform_indices = @transform_0, window_bounds = array<i64: 128, 128>}, {pipeline_mode = #tpu.pipeline_mode<synchronous>, transform_indices = @transform_1, window_bounds = array<i64: 2, 128>}, {pipeline_mode = #tpu.pipeline_mode<synchronous>, transform_indices = @transform_2, window_bounds = array<i64: 128, 128>}, {pipeline_mode = #tpu.pipeline_mode<synchronous>, transform_indices = @transform_3, window_bounds = array<i64: 1, 128>}, {pipeline_mode = #tpu.pipeline_mode<synchronous>, transform_indices = @transform_4, window_bounds = array<i64: 128, 128>}, {pipeline_mode = #tpu.pipeline_mode<synchronous>, transform_indices = @transform_5, window_bounds = array<i64: 1, 128>}, {transform_indices = @transform_6, window_bounds = array<i64: 128, 128>}]} {
    %c0 = arith.constant 0 : index
    %c0_0 = arith.constant 0 : index
    %0 = vector.load %arg1[%c0, %c0_0] : memref<128x128xf32, #tpu.memory_space<vmem>>, vector<128x128xf32>
    %cst = arith.constant dense<0.000000e+00> : vector<128xf32>
    %1 = vector.multi_reduction <add>, %0, %cst [1] : vector<128x128xf32> to vector<128xf32>
    %2 = vector.shape_cast %1 : vector<128xf32> to vector<128x1xf32>
    %cst_1 = arith.constant 3.125000e-02 : f32
    %3 = vector.broadcast %cst_1 : f32 to vector<128x1xf32>
    %4 = arith.mulf %2, %3 : vector<128x1xf32>
    %5 = arith.mulf %0, %0 : vector<128x128xf32>
    %cst_2 = arith.constant dense<0.000000e+00> : vector<128xf32>
    %6 = vector.multi_reduction <add>, %5, %cst_2 [1] : vector<128x128xf32> to vector<128xf32>
    %7 = vector.shape_cast %6 : vector<128xf32> to vector<128x1xf32>
    %cst_3 = arith.constant 3.125000e-02 : f32
    %8 = vector.broadcast %cst_3 : f32 to vector<128x1xf32>
    %9 = arith.mulf %7, %8 : vector<128x1xf32>
    %10 = arith.mulf %4, %4 : vector<128x1xf32>
    %11 = arith.subf %9, %10 : vector<128x1xf32>
    %cst_4 = arith.constant 9.99999974E-6 : f32
    %12 = vector.broadcast %cst_4 : f32 to vector<128x1xf32>
    %13 = arith.addf %11, %12 : vector<128x1xf32>
    %14 = math.rsqrt %13 : vector<128x1xf32>
    %c0_5 = arith.constant 0 : index
    %c0_6 = arith.constant 0 : index
    %15 = vector.load %arg2[%c0_5, %c0_6] : memref<2x128xf32, #tpu.memory_space<vmem>>, vector<2x128xf32>
    %16 = vector.broadcast %4 : vector<128x1xf32> to vector<128x128xf32>
    %17 = arith.subf %0, %16 : vector<128x128xf32>
    %18 = vector.broadcast %14 : vector<128x1xf32> to vector<128x128xf32>
    %19 = arith.mulf %17, %18 : vector<128x128xf32>
    %20 = vector.extract_strided_slice %15 {offsets = [0, 0], sizes = [1, 128], strides = [1, 1]} : vector<2x128xf32> to vector<1x128xf32>
    %21 = vector.broadcast %20 : vector<1x128xf32> to vector<128x128xf32>
    %22 = arith.mulf %19, %21 : vector<128x128xf32>
    %23 = vector.extract_strided_slice %15 {offsets = [1, 0], sizes = [1, 128], strides = [1, 1]} : vector<2x128xf32> to vector<1x128xf32>
    %24 = vector.broadcast %23 : vector<1x128xf32> to vector<128x128xf32>
    %25 = arith.addf %22, %24 : vector<128x128xf32>
    %26 = arith.truncf %25 : vector<128x128xf32> to vector<128x128xbf16>
    %c0_7 = arith.constant 0 : index
    %c0_8 = arith.constant 0 : index
    %27 = vector.load %arg3[%c0_7, %c0_8] : memref<128x128xbf16, #tpu.memory_space<vmem>>, vector<128x128xbf16>
    %cst_9 = arith.constant dense<0.000000e+00> : vector<128x128xf32>
    %28 = tpu.matmul %26, %27, %cst_9 {dimension_numbers = #tpu.dot_dimension_numbers<[1], [0], [0], [1], [0, 0, 1, 1], [], []>} : vector<128x128xbf16>, vector<128x128xbf16>, vector<128x128xf32> -> vector<128x128xf32>
    %c0_10 = arith.constant 0 : index
    %c0_11 = arith.constant 0 : index
    %29 = vector.load %arg4[%c0_10, %c0_11] : memref<1x128xf32, #tpu.memory_space<vmem>>, vector<1x128xf32>
    %30 = vector.broadcast %29 : vector<1x128xf32> to vector<128x128xf32>
    %31 = arith.addf %28, %30 : vector<128x128xf32>
    %32 = arith.mulf %31, %31 : vector<128x128xf32>
    %33 = arith.mulf %31, %32 : vector<128x128xf32>
    %cst_12 = arith.constant 4.471500e-02 : f32
    %34 = vector.broadcast %cst_12 : f32 to vector<128x128xf32>
    %35 = arith.mulf %34, %33 : vector<128x128xf32>
    %36 = arith.addf %31, %35 : vector<128x128xf32>
    %cst_13 = arith.constant 0.797884583 : f32
    %37 = vector.broadcast %cst_13 : f32 to vector<128x128xf32>
    %38 = arith.mulf %37, %36 : vector<128x128xf32>
    %39 = math.tanh %38 : vector<128x128xf32>
    %cst_14 = arith.constant 1.000000e+00 : f32
    %40 = vector.broadcast %cst_14 : f32 to vector<128x128xf32>
    %41 = arith.addf %40, %39 : vector<128x128xf32>
    %cst_15 = arith.constant 5.000000e-01 : f32
    %42 = vector.broadcast %cst_15 : f32 to vector<128x128xf32>
    %43 = arith.mulf %42, %41 : vector<128x128xf32>
    %44 = arith.mulf %31, %43 : vector<128x128xf32>
    %45 = arith.truncf %44 : vector<128x128xf32> to vector<128x128xbf16>
    %c0_16 = arith.constant 0 : index
    %c0_17 = arith.constant 0 : index
    %46 = vector.load %arg5[%c0_16, %c0_17] : memref<128x128xbf16, #tpu.memory_space<vmem>>, vector<128x128xbf16>
    %cst_18 = arith.constant dense<0.000000e+00> : vector<128x128xf32>
    %47 = tpu.matmul %45, %46, %cst_18 {dimension_numbers = #tpu.dot_dimension_numbers<[1], [0], [0], [1], [0, 0, 1, 1], [], []>} : vector<128x128xbf16>, vector<128x128xbf16>, vector<128x128xf32> -> vector<128x128xf32>
    %c0_19 = arith.constant 0 : index
    %c0_20 = arith.constant 0 : index
    %48 = vector.load %arg6[%c0_19, %c0_20] : memref<1x128xf32, #tpu.memory_space<vmem>>, vector<1x128xf32>
    %49 = vector.broadcast %48 : vector<1x128xf32> to vector<128x128xf32>
    %50 = arith.addf %47, %49 : vector<128x128xf32>
    %51 = arith.addf %0, %25 : vector<128x128xf32>
    %52 = arith.addf %51, %50 : vector<128x128xf32>
    %c0_21 = arith.constant 0 : index
    %c0_22 = arith.constant 0 : index
    %53 = vector.load %arg7[%c0_21, %c0_22] : memref<128x128xf32, #tpu.memory_space<vmem>>, vector<128x128xf32>
    tpu.vector_store %arg7[%c0_21, %c0_22], %52 {strides = array<i32>} : memref<128x128xf32, #tpu.memory_space<vmem>>, vector<128x128xf32>,
    return
  }
  func.func @transform_0(%arg0: i32) -> (i32, i32) {
    %c0_i32 = arith.constant 0 : i32
    %c0_i32_0 = arith.constant 0 : i32
    return %arg0, %c0_i32 : i32, i32
  }
  func.func @transform_1(%arg0: i32) -> (i32, i32) {
    %c0_i32 = arith.constant 0 : i32
    %c0_i32_0 = arith.constant 0 : i32
    %c0_i32_1 = arith.constant 0 : i32
    return %c0_i32, %c0_i32_0 : i32, i32
  }
  func.func @transform_2(%arg0: i32) -> (i32, i32) {
    %c0_i32 = arith.constant 0 : i32
    %c0_i32_0 = arith.constant 0 : i32
    %c0_i32_1 = arith.constant 0 : i32
    return %c0_i32, %c0_i32_0 : i32, i32
  }
  func.func @transform_3(%arg0: i32) -> (i32, i32) {
    %c0_i32 = arith.constant 0 : i32
    %c0_i32_0 = arith.constant 0 : i32
    %c0_i32_1 = arith.constant 0 : i32
    return %c0_i32, %c0_i32_0 : i32, i32
  }
  func.func @transform_4(%arg0: i32) -> (i32, i32) {
    %c0_i32 = arith.constant 0 : i32
    %c0_i32_0 = arith.constant 0 : i32
    %c0_i32_1 = arith.constant 0 : i32
    return %c0_i32, %c0_i32_0 : i32, i32
  }
  func.func @transform_5(%arg0: i32) -> (i32, i32) {
    %c0_i32 = arith.constant 0 : i32
    %c0_i32_0 = arith.constant 0 : i32
    %c0_i32_1 = arith.constant 0 : i32
    return %c0_i32, %c0_i32_0 : i32, i32
  }
  func.func @transform_6(%arg0: i32) -> (i32, i32) {
    %c0_i32 = arith.constant 0 : i32
    %c0_i32_0 = arith.constant 0 : i32
    return %arg0, %c0_i32 : i32, i32
  }
}

</mosaic_0001>

<llo_original>
// kernel: swin_block_forward.4
$region0: #{swin_block_forward.4}
  #allocation0 [shape = 'u32[]', space=smem, size = 0x4, offset = 0x4, fixed_abs, tag = 'smem constant byte address 0x4 - core index']
  #allocation1 [shape = 'u32[144,128]{1,0:T(1,128)}', space=vmem, size = 0x12000, scoped, tag = 'internal scratch']
  %s0 = inlined_call_operand.vmem [shape: f32[128,128], index: 0, kind: input, shape index: {}]
  %s1 = inlined_call_operand.vmem [shape: f32[2,128], index: 1, kind: input, shape index: {}]
  %s2 = inlined_call_operand.vmem [shape: bf16[128,128], index: 2, kind: input, shape index: {}]
  %s3 = inlined_call_operand.vmem [shape: f32[1,128], index: 3, kind: input, shape index: {}]
  %s4 = inlined_call_operand.vmem [shape: f32[128,128], index: 4, kind: output, shape index: {0}]
  %s5 = inlined_call_operand.vmem [shape: f32[128,128], index: 5, kind: output, shape index: {1}]
  %6 = xla_tuple %s4, %s5
  %s7 = sld [smem:[#allocation0]]
  $region34: #{swin_block_forward.4} parent=0
    _
  %s9 = ssub.s32 1, %s7
  %s10 = scalar_select 0, %s9, %s7
  // Predicated region
  $region2: #{swin_block_forward.4} parent=0 // pred_check
    _
  $region3: #{swin_block_forward.4} parent=0 // pred_check_branch
    %12 = sbr.rel (0) target = $region5
  $region4: #{swin_block_forward.4} parent=0 // pred_region
    _
  $region5: #{swin_block_forward.4} parent=0 // pred_fallthru
    _
  // Predicated region
  $region6: #{swin_block_forward.4} parent=0 // pred_check
    _
  $region7: #{swin_block_forward.4} parent=0 // pred_check_branch
    %14 = sbr.rel (0) target = $region9
  $region8: #{swin_block_forward.4} parent=0 // pred_region
    _
  $region9: #{swin_block_forward.4} parent=0 // pred_fallthru
    _
  // Predicated region
  $region10: #{swin_block_forward.4} parent=0 // pred_check
    _
  $region11: #{swin_block_forward.4} parent=0 // pred_check_branch
    %16 = sbr.rel (0) target = $region13
  $region12: #{swin_block_forward.4} parent=0 // pred_region
    _
  $region13: #{swin_block_forward.4} parent=0 // pred_fallthru
    _
  // Predicated region
  $region14: #{swin_block_forward.4} parent=0 // pred_check
    _
  $region15: #{swin_block_forward.4} parent=0 // pred_check_branch
    %18 = sbr.rel (0) target = $region17
  $region16: #{swin_block_forward.4} parent=0 // pred_region
    _
  $region17: #{swin_block_forward.4} parent=0 // pred_fallthru
    _
  %v20 = vld [vmem:[%s0] sm:$0xff]
  %v21 = vld [vmem:[%s0 + $0x8] sm:$0xff]
  %v22 = vld [vmem:[%s0 + $0x10] sm:$0xff]
  %v23 = vld [vmem:[%s0 + $0x18] sm:$0xff]
  %v24 = vld [vmem:[%s0 + $0x20] sm:$0xff]
  %v25 = vld [vmem:[%s0 + $0x28] sm:$0xff]
  %v26 = vld [vmem:[%s0 + $0x30] sm:$0xff]
  %v27 = vld [vmem:[%s0 + $0x38] sm:$0xff]
  %v28 = vld [vmem:[%s0 + $0x40] sm:$0xff]
  %v29 = vld [vmem:[%s0 + $0x48] sm:$0xff]
  %v30 = vld [vmem:[%s0 + $0x50] sm:$0xff]
  %v31 = vld [vmem:[%s0 + $0x58] sm:$0xff]
  %v32 = vld [vmem:[%s0 + $0x60] sm:$0xff]
  %v33 = vld [vmem:[%s0 + $0x68] sm:$0xff]
  %v34 = vld [vmem:[%s0 + $0x70] sm:$0xff]
  %v35 = vld [vmem:[%s0 + $0x78] sm:$0xff]
  %36 = vadd.xlane.f32.xlu0 %v20
  %v37 = vpop.xlane.xlu0 %36
  %38 = vadd.xlane.f32.xlu0 %v21
  %v39 = vpop.xlane.xlu0 %38
  %40 = vadd.xlane.f32.xlu0 %v22
  %v41 = vpop.xlane.xlu0 %40
  %42 = vadd.xlane.f32.xlu0 %v23
  %v43 = vpop.xlane.xlu0 %42
  %44 = vadd.xlane.f32.xlu0 %v24
  %v45 = vpop.xlane.xlu0 %44
  %46 = vadd.xlane.f32.xlu0 %v25
  %v47 = vpop.xlane.xlu0 %46
  %48 = vadd.xlane.f32.xlu0 %v26
  %v49 = vpop.xlane.xlu0 %48
  %50 = vadd.xlane.f32.xlu0 %v27
  %v51 = vpop.xlane.xlu0 %50
  %52 = vadd.xlane.f32.xlu0 %v28
  %v53 = vpop.xlane.xlu0 %52
  %54 = vadd.xlane.f32.xlu0 %v29
  %v55 = vpop.xlane.xlu0 %54
  %56 = vadd.xlane.f32.xlu0 %v30
  %v57 = vpop.xlane.xlu0 %56
  %58 = vadd.xlane.f32.xlu0 %v31
  %v59 = vpop.xlane.xlu0 %58
  %60 = vadd.xlane.f32.xlu0 %v32
  %v61 = vpop.xlane.xlu0 %60
  %62 = vadd.xlane.f32.xlu0 %v33
  %v63 = vpop.xlane.xlu0 %62
  %64 = vadd.xlane.f32.xlu0 %v34
  %v65 = vpop.xlane.xlu0 %64
  %66 = vadd.xlane.f32.xlu0 %v35
  %v67 = vpop.xlane.xlu0 %66
  %v68 = vmul.f32 %v37, 0.03125
  %v69 = vmul.f32 %v39, 0.03125
  %v70 = vmul.f32 %v41, 0.03125
  %v71 = vmul.f32 %v43, 0.03125
  %v72 = vmul.f32 %v45, 0.03125
  %v73 = vmul.f32 %v47, 0.03125
  %v74 = vmul.f32 %v49, 0.03125
  %v75 = vmul.f32 %v51, 0.03125
  %v76 = vmul.f32 %v53, 0.03125
  %v77 = vmul.f32 %v55, 0.03125
  %v78 = vmul.f32 %v57, 0.03125
  %v79 = vmul.f32 %v59, 0.03125
  %v80 = vmul.f32 %v61, 0.03125
  %v81 = vmul.f32 %v63, 0.03125
  %v82 = vmul.f32 %v65, 0.03125
  %v83 = vmul.f32 %v67, 0.03125
  %v84 = vmul.f32 %v20, %v20
  %v85 = vmul.f32 %v21, %v21
  %v86 = vmul.f32 %v22, %v22
  %v87 = vmul.f32 %v23, %v23
  %v88 = vmul.f32 %v24, %v24
  %v89 = vmul.f32 %v25, %v25
  %v90 = vmul.f32 %v26, %v26
  %v91 = vmul.f32 %v27, %v27
  %v92 = vmul.f32 %v28, %v28
  %v93 = vmul.f32 %v29, %v29
  %v94 = vmul.f32 %v30, %v30
  %v95 = vmul.f32 %v31, %v31
  %v96 = vmul.f32 %v32, %v32
  %v97 = vmul.f32 %v33, %v33
  %v98 = vmul.f32 %v34, %v34
  %v99 = vmul.f32 %v35, %v35
  %100 = vadd.xlane.f32.xlu0 %v84
  %v101 = vpop.xlane.xlu0 %100
  %102 = vadd.xlane.f32.xlu0 %v85
  %v103 = vpop.xlane.xlu0 %102
  %104 = vadd.xlane.f32.xlu0 %v86
  %v105 = vpop.xlane.xlu0 %104
  %106 = vadd.xlane.f32.xlu0 %v87
  %v107 = vpop.xlane.xlu0 %106
  %108 = vadd.xlane.f32.xlu0 %v88
  %v109 = vpop.xlane.xlu0 %108
  %110 = vadd.xlane.f32.xlu0 %v89
  %v111 = vpop.xlane.xlu0 %110
  %112 = vadd.xlane.f32.xlu0 %v90
  %v113 = vpop.xlane.xlu0 %112
  %114 = vadd.xlane.f32.xlu0 %v91
  %v115 = vpop.xlane.xlu0 %114
  %116 = vadd.xlane.f32.xlu0 %v92
  %v117 = vpop.xlane.xlu0 %116
  %118 = vadd.xlane.f32.xlu0 %v93
  %v119 = vpop.xlane.xlu0 %118
  %120 = vadd.xlane.f32.xlu0 %v94
  %v121 = vpop.xlane.xlu0 %120
  %122 = vadd.xlane.f32.xlu0 %v95
  %v123 = vpop.xlane.xlu0 %122
  %124 = vadd.xlane.f32.xlu0 %v96
  %v125 = vpop.xlane.xlu0 %124
  %126 = vadd.xlane.f32.xlu0 %v97
  %v127 = vpop.xlane.xlu0 %126
  %128 = vadd.xlane.f32.xlu0 %v98
  %v129 = vpop.xlane.xlu0 %128
  %130 = vadd.xlane.f32.xlu0 %v99
  %v131 = vpop.xlane.xlu0 %130
  %v132 = vmul.f32 %v101, 0.03125
  %v133 = vmul.f32 %v103, 0.03125
  %v134 = vmul.f32 %v105, 0.03125
  %v135 = vmul.f32 %v107, 0.03125
  %v136 = vmul.f32 %v109, 0.03125
  %v137 = vmul.f32 %v111, 0.03125
  %v138 = vmul.f32 %v113, 0.03125
  %v139 = vmul.f32 %v115, 0.03125
  %v140 = vmul.f32 %v117, 0.03125
  %v141 = vmul.f32 %v119, 0.03125
  %v142 = vmul.f32 %v121, 0.03125
  %v143 = vmul.f32 %v123, 0.03125
  %v144 = vmul.f32 %v125, 0.03125
  %v145 = vmul.f32 %v127, 0.03125
  %v146 = vmul.f32 %v129, 0.03125
  %v147 = vmul.f32 %v131, 0.03125
  %v148 = vmul.f32 %v68, %v68
  %v149 = vmul.f32 %v69, %v69
  %v150 = vmul.f32 %v70, %v70
  %v151 = vmul.f32 %v71, %v71
  %v152 = vmul.f32 %v72, %v72
  %v153 = vmul.f32 %v73, %v73
  %v154 = vmul.f32 %v74, %v74
  %v155 = vmul.f32 %v75, %v75
  %v156 = vmul.f32 %v76, %v76
  %v157 = vmul.f32 %v77, %v77
  %v158 = vmul.f32 %v78, %v78
  %v159 = vmul.f32 %v79, %v79
  %v160 = vmul.f32 %v80, %v80
  %v161 = vmul.f32 %v81, %v81
  %v162 = vmul.f32 %v82, %v82
  %v163 = vmul.f32 %v83, %v83
  %v164 = vsub.f32 %v132, %v148
  %v165 = vsub.f32 %v133, %v149
  %v166 = vsub.f32 %v134, %v150
  %v167 = vsub.f32 %v135, %v151
  %v168 = vsub.f32 %v136, %v152
  %v169 = vsub.f32 %v137, %v153
  %v170 = vsub.f32 %v138, %v154
  %v171 = vsub.f32 %v139, %v155
  %v172 = vsub.f32 %v140, %v156
  %v173 = vsub.f32 %v141, %v157
  %v174 = vsub.f32 %v142, %v158
  %v175 = vsub.f32 %v143, %v159
  %v176 = vsub.f32 %v144, %v160
  %v177 = vsub.f32 %v145, %v161
  %v178 = vsub.f32 %v146, %v162
  %v179 = vsub.f32 %v147, %v163
  %v180 = vadd.f32 %v164, 1e-05
  %v181 = vadd.f32 %v165, 1e-05
  %v182 = vadd.f32 %v166, 1e-05
  %v183 = vadd.f32 %v167, 1e-05
  %v184 = vadd.f32 %v168, 1e-05
  %v185 = vadd.f32 %v169, 1e-05
  %v186 = vadd.f32 %v170, 1e-05
  %v187 = vadd.f32 %v171, 1e-05
  %v188 = vadd.f32 %v172, 1e-05
  %v189 = vadd.f32 %v173, 1e-05
  %v190 = vadd.f32 %v174, 1e-05
  %v191 = vadd.f32 %v175, 1e-05
  %v192 = vadd.f32 %v176, 1e-05
  %v193 = vadd.f32 %v177, 1e-05
  %v194 = vadd.f32 %v178, 1e-05
  %v195 = vadd.f32 %v179, 1e-05
  %v196 = vrsqrt.pop %v180
  %v197 = vrsqrt.pop %v181
  %v198 = vrsqrt.pop %v182
  %v199 = vrsqrt.pop %v183
  %v200 = vrsqrt.pop %v184
  %v201 = vrsqrt.pop %v185
  %v202 = vrsqrt.pop %v186
  %v203 = vrsqrt.pop %v187
  %v204 = vrsqrt.pop %v188
  %v205 = vrsqrt.pop %v189
  %v206 = vrsqrt.pop %v190
  %v207 = vrsqrt.pop %v191
  %v208 = vrsqrt.pop %v192
  %v209 = vrsqrt.pop %v193
  %v210 = vrsqrt.pop %v194
  %v211 = vrsqrt.pop %v195
  %v212 = vld [vmem:[%s1] sm:$0x3]
  %v213 = vsub.f32 %v20, %v68
  %v214 = vsub.f32 %v21, %v69
  %v215 = vsub.f32 %v22, %v70
  %v216 = vsub.f32 %v23, %v71
  %v217 = vsub.f32 %v24, %v72
  %v218 = vsub.f32 %v25, %v73
  %v219 = vsub.f32 %v26, %v74
  %v220 = vsub.f32 %v27, %v75
  %v221 = vsub.f32 %v28, %v76
  %v222 = vsub.f32 %v29, %v77
  %v223 = vsub.f32 %v30, %v78
  %v224 = vsub.f32 %v31, %v79
  %v225 = vsub.f32 %v32, %v80
  %v226 = vsub.f32 %v33, %v81
  %v227 = vsub.f32 %v34, %v82
  %v228 = vsub.f32 %v35, %v83
  %v229 = vmul.f32 %v213, %v196
  %v230 = vmul.f32 %v214, %v197
  %v231 = vmul.f32 %v215, %v198
  %v232 = vmul.f32 %v216, %v199
  %v233 = vmul.f32 %v217, %v200
  %v234 = vmul.f32 %v218, %v201
  %v235 = vmul.f32 %v219, %v202
  %v236 = vmul.f32 %v220, %v203
  %v237 = vmul.f32 %v221, %v204
  %v238 = vmul.f32 %v222, %v205
  %v239 = vmul.f32 %v223, %v206
  %v240 = vmul.f32 %v224, %v207
  %v241 = vmul.f32 %v225, %v208
  %v242 = vmul.f32 %v226, %v209
  %v243 = vmul.f32 %v227, %v210
  %v244 = vmul.f32 %v228, %v211
  %v245 = vlaneseq
  %v246 = vshrl.u32 %v245, 7
  %v247 = vsub.s32 0, %v246
  %v248 = vrot.slane %v212, %v247
  %v249 = vmul.f32 %v229, %v248
  %v250 = vmul.f32 %v230, %v248
  %v251 = vmul.f32 %v231, %v248
  %v252 = vmul.f32 %v232, %v248
  %v253 = vmul.f32 %v233, %v248
  %v254 = vmul.f32 %v234, %v248
  %v255 = vmul.f32 %v235, %v248
  %v256 = vmul.f32 %v236, %v248
  %v257 = vmul.f32 %v237, %v248
  %v258 = vmul.f32 %v238, %v248
  %v259 = vmul.f32 %v239, %v248
  %v260 = vmul.f32 %v240, %v248
  %v261 = vmul.f32 %v241, %v248
  %v262 = vmul.f32 %v242, %v248
  %v263 = vmul.f32 %v243, %v248
  %v264 = vmul.f32 %v244, %v248
  %v265 = vlaneseq
  %v266 = vshrl.u32 %v265, 7
  %v267 = vsub.s32 1, %v266
  %v268 = vrot.slane %v212, %v267
  %v269 = vadd.f32 %v249, %v268
  %v270 = vadd.f32 %v250, %v268
  %v271 = vadd.f32 %v251, %v268
  %v272 = vadd.f32 %v252, %v268
  %v273 = vadd.f32 %v253, %v268
  %v274 = vadd.f32 %v254, %v268
  %v275 = vadd.f32 %v255, %v268
  %v276 = vadd.f32 %v256, %v268
  %v277 = vadd.f32 %v257, %v268
  %v278 = vadd.f32 %v258, %v268
  %v279 = vadd.f32 %v259, %v268
  %v280 = vadd.f32 %v260, %v268
  %v281 = vadd.f32 %v261, %v268
  %v282 = vadd.f32 %v262, %v268
  %v283 = vadd.f32 %v263, %v268
  %v284 = vadd.f32 %v264, %v268
  %285 = vst [vmem:[%s4] sm:$0xff] %v269
  %286 = vst [vmem:[%s4 + $0x8] sm:$0xff] %v270
  %287 = vst [vmem:[%s4 + $0x10] sm:$0xff] %v271
  %288 = vst [vmem:[%s4 + $0x18] sm:$0xff] %v272
  %289 = vst [vmem:[%s4 + $0x20] sm:$0xff] %v273
  %290 = vst [vmem:[%s4 + $0x28] sm:$0xff] %v274
  %291 = vst [vmem:[%s4 + $0x30] sm:$0xff] %v275
  %292 = vst [vmem:[%s4 + $0x38] sm:$0xff] %v276
  %293 = vst [vmem:[%s4 + $0x40] sm:$0xff] %v277
  %294 = vst [vmem:[%s4 + $0x48] sm:$0xff] %v278
  %295 = vst [vmem:[%s4 + $0x50] sm:$0xff] %v279
  %296 = vst [vmem:[%s4 + $0x58] sm:$0xff] %v280
  %297 = vst [vmem:[%s4 + $0x60] sm:$0xff] %v281
  %298 = vst [vmem:[%s4 + $0x68] sm:$0xff] %v282
  %299 = vst [vmem:[%s4 + $0x70] sm:$0xff] %v283
  %300 = vst [vmem:[%s4 + $0x78] sm:$0xff] %v284
  %v301 = vpack.c.bf16 %v270, %v269
  %v302 = vpack.c.bf16 %v272, %v271
  %v303 = vpack.c.bf16 %v274, %v273
  %v304 = vpack.c.bf16 %v276, %v275
  %v305 = vpack.c.bf16 %v278, %v277
  %v306 = vpack.c.bf16 %v280, %v279
  %v307 = vpack.c.bf16 %v282, %v281
  %v308 = vpack.c.bf16 %v284, %v283
  %v309 = vld [vmem:[%s2] sm:$0xf]
  %v310 = vld [vmem:[%s2 + $0x4] sm:$0xf]
  %v311 = vld [vmem:[%s2 + $0x8] sm:$0xf]
  %v312 = vld [vmem:[%s2 + $0xc] sm:$0xf]
  %v313 = vld [vmem:[%s2 + $0x10] sm:$0xf]
  %v314 = vld [vmem:[%s2 + $0x14] sm:$0xf]
  %v315 = vld [vmem:[%s2 + $0x18] sm:$0xf]
  %v316 = vld [vmem:[%s2 + $0x1c] sm:$0xf]
  %v317 = vld [vmem:[%s2 + $0x20] sm:$0xf]
  %v318 = vld [vmem:[%s2 + $0x24] sm:$0xf]
  %v319 = vld [vmem:[%s2 + $0x28] sm:$0xf]
  %v320 = vld [vmem:[%s2 + $0x2c] sm:$0xf]
  %v321 = vld [vmem:[%s2 + $0x30] sm:$0xf]
  %v322 = vld [vmem:[%s2 + $0x34] sm:$0xf]
  %v323 = vld [vmem:[%s2 + $0x38] sm:$0xf]
  %v324 = vld [vmem:[%s2 + $0x3c] sm:$0xf]
  %v325 = vld [vmem:[%s3] sm:$0x1]
  %v327 = vlaneseq
  %v328 = vshrl.u32 %v327, 7
  %v329 = vsub.s32 0, %v328
  %v330 = vrot.slane %v325, %v329
  %v348 = vunpack.c.l.b16 %v309
  %v349 = vunpack.c.l.b16 %v310
  %v350 = vunpack.c.l.b16 %v311
  %v351 = vunpack.c.l.b16 %v312
  %v352 = vunpack.c.l.b16 %v313
  %v353 = vunpack.c.l.b16 %v314
  %v354 = vunpack.c.l.b16 %v315
  %v355 = vunpack.c.l.b16 %v316
  %v356 = vunpack.c.l.b16 %v317
  %v357 = vunpack.c.l.b16 %v318
  %v358 = vunpack.c.l.b16 %v319
  %v359 = vunpack.c.l.b16 %v320
  %v360 = vunpack.c.l.b16 %v321
  %v361 = vunpack.c.l.b16 %v322
  %v362 = vunpack.c.l.b16 %v323
  %v363 = vunpack.c.l.b16 %v324
  %v364 = vpack.c.b16 %v349, %v348
  %v365 = vpack.c.b16 %v351, %v350
  %v366 = vpack.c.b16 %v353, %v352
  %v367 = vpack.c.b16 %v355, %v354
  %v368 = vpack.c.b16 %v357, %v356
  %v369 = vpack.c.b16 %v359, %v358
  %v370 = vpack.c.b16 %v361, %v360
  %v371 = vpack.c.b16 %v363, %v362
  %380 = vmatprep.subr.bf16.mxu0 0
  %381 = vmatpush1.bf16.msra.mxu0 %v364
  %382 = vmatprep.subr.bf16.mxu0 0
  %383 = vmatpush1.bf16.msra.mxu0 %v365
  %384 = vmatprep.subr.bf16.mxu0 0
  %385 = vmatpush1.bf16.msra.mxu0 %v366
  %386 = vmatprep.subr.bf16.mxu0 0
  %387 = vmatpush1.bf16.msra.mxu0 %v367
  %388 = vmatprep.subr.bf16.mxu0 0
  %389 = vmatpush1.bf16.msra.mxu0 %v368
  %390 = vmatprep.subr.bf16.mxu0 0
  %391 = vmatpush1.bf16.msra.mxu0 %v369
  %392 = vmatprep.subr.bf16.mxu0 0
  %393 = vmatpush1.bf16.msra.mxu0 %v370
  %394 = vmatprep.subr.bf16.mxu0 0
  %395 = vmatpush1.bf16.msra.mxu0 %v371
  %396 = vmatprep.subr.bf16.mxu0 0
  %397 = vmatpush1.bf16.msra.mxu0 0
  %398 = vmatprep.subr.bf16.mxu0 0
  %399 = vmatpush1.bf16.msra.mxu0 0
  %400 = vmatprep.subr.bf16.mxu0 0
  %401 = vmatpush1.bf16.msra.mxu0 0
  %402 = vmatprep.subr.bf16.mxu0 0
  %403 = vmatpush1.bf16.msra.mxu0 0
  %404 = vmatprep.subr.bf16.mxu0 0
  %405 = vmatpush1.bf16.msra.mxu0 0
  %406 = vmatprep.subr.bf16.mxu0 0
  %407 = vmatpush1.bf16.msra.mxu0 0
  %408 = vmatprep.subr.bf16.mxu0 0
  %409 = vmatpush1.bf16.msra.mxu0 0
  %410 = vmatprep.subr.bf16.mxu0 0
  %411 = vmatpush1.bf16.msra.mxu0 0
  %412 = vmatprep.mubr.bf16.mxu0 0
  %413 = vmatmul.mubr.bf16.gmra.mrb[0].mxu0 %v301
  %v414 = vpop.f32.mrb[0].mxu0
  %v415 = vadd.f32 %v330, %v414
  %v416 = vpop.f32.mrb[0].mxu0
  %v417 = vpop.f32.mrb[0].mxu0
  %v418 = vadd.f32 %v330, %v417
  %v419 = vpop.f32.mrb[0].mxu0
  %420 = vmatprep.mubr.bf16.mxu0 0
  %421 = vmatmul.mubr.bf16.gmra.mrb[0].mxu0 %v302
  %v422 = vpop.f32.mrb[0].mxu0
  %v423 = vadd.f32 %v330, %v422
  %v424 = vpop.f32.mrb[0].mxu0
  %v425 = vpop.f32.mrb[0].mxu0
  %v426 = vadd.f32 %v330, %v425
  %v427 = vpop.f32.mrb[0].mxu0
  %428 = vmatprep.mubr.bf16.mxu0 0
  %429 = vmatmul.mubr.bf16.gmra.mrb[0].mxu0 %v303
  %v430 = vpop.f32.mrb[0].mxu0
  %v431 = vadd.f32 %v330, %v430
  %v432 = vpop.f32.mrb[0].mxu0
  %v433 = vpop.f32.mrb[0].mxu0
  %v434 = vadd.f32 %v330, %v433
  %v435 = vpop.f32.mrb[0].mxu0
  %436 = vmatprep.mubr.bf16.mxu0 0
  %437 = vmatmul.mubr.bf16.gmra.mrb[0].mxu0 %v304
  %v438 = vpop.f32.mrb[0].mxu0
  %v439 = vadd.f32 %v330, %v438
  %v440 = vpop.f32.mrb[0].mxu0
  %v441 = vpop.f32.mrb[0].mxu0
  %v442 = vadd.f32 %v330, %v441
  %v443 = vpop.f32.mrb[0].mxu0
  %444 = vmatprep.mubr.bf16.mxu0 0
  %445 = vmatmul.mubr.bf16.gmra.mrb[0].mxu0 %v305
  %v446 = vpop.f32.mrb[0].mxu0
  %v447 = vadd.f32 %v330, %v446
  %v448 = vpop.f32.mrb[0].mxu0
  %v449 = vpop.f32.mrb[0].mxu0
  %v450 = vadd.f32 %v330, %v449
  %v451 = vpop.f32.mrb[0].mxu0
  %452 = vmatprep.mubr.bf16.mxu0 0
  %453 = vmatmul.mubr.bf16.gmra.mrb[0].mxu0 %v306
  %v454 = vpop.f32.mrb[0].mxu0
  %v455 = vadd.f32 %v330, %v454
  %v456 = vpop.f32.mrb[0].mxu0
  %v457 = vpop.f32.mrb[0].mxu0
  %v458 = vadd.f32 %v330, %v457
  %v459 = vpop.f32.mrb[0].mxu0
  %460 = vmatprep.mubr.bf16.mxu0 0
  %461 = vmatmul.mubr.bf16.gmra.mrb[0].mxu0 %v307
  %v462 = vpop.f32.mrb[0].mxu0
  %v463 = vadd.f32 %v330, %v462
  %v464 = vpop.f32.mrb[0].mxu0
  %v465 = vpop.f32.mrb[0].mxu0
  %v466 = vadd.f32 %v330, %v465
  %v467 = vpop.f32.mrb[0].mxu0
  %468 = vmatprep.mubr.bf16.mxu0 0
  %469 = vmatmul.mubr.bf16.gmra.mrb[0].mxu0 %v308
  %v470 = vpop.f32.mrb[0].mxu0
  %v471 = vadd.f32 %v330, %v470
  %v472 = vpop.f32.mrb[0].mxu0
  %v473 = vpop.f32.mrb[0].mxu0
  %v474 = vadd.f32 %v330, %v473
  %v475 = vpop.f32.mrb[0].mxu0
  %476 = vdwg.mxu0
  %477 = vst [vmem:[%s5] sm:$0xff] %v415
  %478 = vst [vmem:[%s5 + $0x8] sm:$0xff] %v418
  %479 = vst [vmem:[%s5 + $0x10] sm:$0xff] %v423
  %480 = vst [vmem:[%s5 + $0x18] sm:$0xff] %v426
  %481 = vst [vmem:[%s5 + $0x20] sm:$0xff] %v431
  %482 = vst [vmem:[%s5 + $0x28] sm:$0xff] %v434
  %483 = vst [vmem:[%s5 + $0x30] sm:$0xff] %v439
  %484 = vst [vmem:[%s5 + $0x38] sm:$0xff] %v442
  %485 = vst [vmem:[%s5 + $0x40] sm:$0xff] %v447
  %486 = vst [vmem:[%s5 + $0x48] sm:$0xff] %v450
  %487 = vst [vmem:[%s5 + $0x50] sm:$0xff] %v455
  %488 = vst [vmem:[%s5 + $0x58] sm:$0xff] %v458
  %489 = vst [vmem:[%s5 + $0x60] sm:$0xff] %v463
  %490 = vst [vmem:[%s5 + $0x68] sm:$0xff] %v466
  %491 = vst [vmem:[%s5 + $0x70] sm:$0xff] %v471
  %492 = vst [vmem:[%s5 + $0x78] sm:$0xff] %v474
  // Predicated region
  $region18: #{swin_block_forward.4} parent=0 // pred_check
    _
  $region19: #{swin_block_forward.4} parent=0 // pred_check_branch
    %494 = sbr.rel (0) target = $region21
  $region20: #{swin_block_forward.4} parent=0 // pred_region
    _
  $region21: #{swin_block_forward.4} parent=0 // pred_fallthru
    _
  // Predicated region
  $region22: #{swin_block_forward.4} parent=0 // pred_check
    _
  $region23: #{swin_block_forward.4} parent=0 // pred_check_branch
    %496 = sbr.rel (0) target = $region25
  $region24: #{swin_block_forward.4} parent=0 // pred_region
    _
  $region25: #{swin_block_forward.4} parent=0 // pred_fallthru
    _
  // Predicated region
  $region26: #{swin_block_forward.4} parent=0 // pred_check
    _
  $region27: #{swin_block_forward.4} parent=0 // pred_check_branch
    %498 = sbr.rel (0) target = $region29
  $region28: #{swin_block_forward.4} parent=0 // pred_region
    _
  $region29: #{swin_block_forward.4} parent=0 // pred_fallthru
    _
  // Predicated region
  $region30: #{swin_block_forward.4} parent=0 // pred_check
    _
  $region31: #{swin_block_forward.4} parent=0 // pred_check_branch
    %500 = sbr.rel (0) target = $region33
  $region32: #{swin_block_forward.4} parent=0 // pred_region
    _
  $region33: #{swin_block_forward.4} parent=0 // pred_fallthru
    _

// kernel: swin_block_forward.5
$region0: #{swin_block_forward.5}
  #allocation0 [shape = 'u32[]', space=smem, size = 0x4, offset = 0x4, fixed_abs, tag = 'smem constant byte address 0x4 - core index']
  #allocation1 [shape = 'u32[144,128]{1,0:T(1,128)}', space=vmem, size = 0x12000, scoped, tag = 'internal scratch']
  %s0 = inlined_call_operand.vmem [shape: f32[4,64,16], index: 0, kind: input, shape index: {}]
  %s1 = inlined_call_operand.vmem [shape: f32[4,64,16], index: 1, kind: input, shape index: {}]
  %s2 = inlined_call_operand.vmem [shape: f32[4,64,16], index: 2, kind: input, shape index: {}]
  %s3 = inlined_call_operand.vmem [shape: f32[4,64,16], index: 3, kind: output, shape index: {}]
  %s4 = sld [smem:[#allocation0]]
  $region22: #{swin_block_forward.5} parent=0
    _
  %s6 = ssub.s32 1, %s4
  %s7 = scalar_select 0, %s6, %s4
  // Predicated region
  $region2: #{swin_block_forward.5} parent=0 // pred_check
    _
  $region3: #{swin_block_forward.5} parent=0 // pred_check_branch
    %9 = sbr.rel (0) target = $region5
  $region4: #{swin_block_forward.5} parent=0 // pred_region
    _
  $region5: #{swin_block_forward.5} parent=0 // pred_fallthru
    _
  // Predicated region
  $region6: #{swin_block_forward.5} parent=0 // pred_check
    _
  $region7: #{swin_block_forward.5} parent=0 // pred_check_branch
    %11 = sbr.rel (0) target = $region9
  $region8: #{swin_block_forward.5} parent=0 // pred_region
    _
  $region9: #{swin_block_forward.5} parent=0 // pred_fallthru
    _
  // Predicated region
  $region10: #{swin_block_forward.5} parent=0 // pred_check
    _
  $region11: #{swin_block_forward.5} parent=0 // pred_check_branch
    %13 = sbr.rel (0) target = $region13
  $region12: #{swin_block_forward.5} parent=0 // pred_region
    _
  $region13: #{swin_block_forward.5} parent=0 // pred_fallthru
    _
  %v15 = vld [vmem:[%s0] sm:$0xff]
  %v16 = vld [vmem:[%s0 + $0x8] sm:$0xff]
  %v17 = vld [vmem:[%s0 + $0x10] sm:$0xff]
  %v18 = vld [vmem:[%s0 + $0x18] sm:$0xff]
  %v19 = vld [vmem:[%s0 + $0x20] sm:$0xff]
  %v20 = vld [vmem:[%s0 + $0x28] sm:$0xff]
  %v21 = vld [vmem:[%s0 + $0x30] sm:$0xff]
  %v22 = vld [vmem:[%s0 + $0x38] sm:$0xff]
  %v23 = vld [vmem:[%s0 + $0x40] sm:$0xff]
  %v24 = vld [vmem:[%s0 + $0x48] sm:$0xff]
  %v25 = vld [vmem:[%s0 + $0x50] sm:$0xff]
  %v26 = vld [vmem:[%s0 + $0x58] sm:$0xff]
  %v27 = vld [vmem:[%s0 + $0x60] sm:$0xff]
  %v28 = vld [vmem:[%s0 + $0x68] sm:$0xff]
  %v29 = vld [vmem:[%s0 + $0x70] sm:$0xff]
  %v30 = vld [vmem:[%s0 + $0x78] sm:$0xff]
  %v31 = vld [vmem:[%s0 + $0x80] sm:$0xff]
  %v32 = vld [vmem:[%s0 + $0x88] sm:$0xff]
  %v33 = vld [vmem:[%s0 + $0x90] sm:$0xff]
  %v34 = vld [vmem:[%s0 + $0x98] sm:$0xff]
  %v35 = vld [vmem:[%s0 + $0xa0] sm:$0xff]
  %v36 = vld [vmem:[%s0 + $0xa8] sm:$0xff]
  %v37 = vld [vmem:[%s0 + $0xb0] sm:$0xff]
  %v38 = vld [vmem:[%s0 + $0xb8] sm:$0xff]
  %v39 = vld [vmem:[%s0 + $0xc0] sm:$0xff]
  %v40 = vld [vmem:[%s0 + $0xc8] sm:$0xff]
  %v41 = vld [vmem:[%s0 + $0xd0] sm:$0xff]
  %v42 = vld [vmem:[%s0 + $0xd8] sm:$0xff]
  %v43 = vld [vmem:[%s0 + $0xe0] sm:$0xff]
  %v44 = vld [vmem:[%s0 + $0xe8] sm:$0xff]
  %v45 = vld [vmem:[%s0 + $0xf0] sm:$0xff]
  %v46 = vld [vmem:[%s0 + $0xf8] sm:$0xff]
  %v47 = vmul.f32 %v15, 0.25
  %v48 = vmul.f32 %v16, 0.25
  %v49 = vmul.f32 %v17, 0.25
  %v50 = vmul.f32 %v18, 0.25
  %v51 = vmul.f32 %v19, 0.25
  %v52 = vmul.f32 %v20, 0.25
  %v53 = vmul.f32 %v21, 0.25
  %v54 = vmul.f32 %v22, 0.25
  %v55 = vmul.f32 %v23, 0.25
  %v56 = vmul.f32 %v24, 0.25
  %v57 = vmul.f32 %v25, 0.25
  %v58 = vmul.f32 %v26, 0.25
  %v59 = vmul.f32 %v27, 0.25
  %v60 = vmul.f32 %v28, 0.25
  %v61 = vmul.f32 %v29, 0.25
  %v62 = vmul.f32 %v30, 0.25
  %v63 = vmul.f32 %v31, 0.25
  %v64 = vmul.f32 %v32, 0.25
  %v65 = vmul.f32 %v33, 0.25
  %v66 = vmul.f32 %v34, 0.25
  %v67 = vmul.f32 %v35, 0.25
  %v68 = vmul.f32 %v36, 0.25
  %v69 = vmul.f32 %v37, 0.25
  %v70 = vmul.f32 %v38, 0.25
  %v71 = vmul.f32 %v39, 0.25
  %v72 = vmul.f32 %v40, 0.25
  %v73 = vmul.f32 %v41, 0.25
  %v74 = vmul.f32 %v42, 0.25
  %v75 = vmul.f32 %v43, 0.25
  %v76 = vmul.f32 %v44, 0.25
  %v77 = vmul.f32 %v45, 0.25
  %v78 = vmul.f32 %v46, 0.25
  %v79 = vpack.c.bf16 %v48, %v47
  %v80 = vpack.c.bf16 %v50, %v49
  %v81 = vpack.c.bf16 %v52, %v51
  %v82 = vpack.c.bf16 %v54, %v53
  %v83 = vpack.c.bf16 %v56, %v55
  %v84 = vpack.c.bf16 %v58, %v57
  %v85 = vpack.c.bf16 %v60, %v59
  %v86 = vpack.c.bf16 %v62, %v61
  %v87 = vpack.c.bf16 %v64, %v63
  %v88 = vpack.c.bf16 %v66, %v65
  %v89 = vpack.c.bf16 %v68, %v67
  %v90 = vpack.c.bf16 %v70, %v69
  %v91 = vpack.c.bf16 %v72, %v71
  %v92 = vpack.c.bf16 %v74, %v73
  %v93 = vpack.c.bf16 %v76, %v75
  %v94 = vpack.c.bf16 %v78, %v77
  %v95 = vld [vmem:[%s1] sm:$0xff]
  %v96 = vld [vmem:[%s1 + $0x8] sm:$0xff]
  %v97 = vld [vmem:[%s1 + $0x10] sm:$0xff]
  %v98 = vld [vmem:[%s1 + $0x18] sm:$0xff]
  %v99 = vld [vmem:[%s1 + $0x20] sm:$0xff]
  %v100 = vld [vmem:[%s1 + $0x28] sm:$0xff]
  %v101 = vld [vmem:[%s1 + $0x30] sm:$0xff]
  %v102 = vld [vmem:[%s1 + $0x38] sm:$0xff]
  %v103 = vld [vmem:[%s1 + $0x40] sm:$0xff]
  %v104 = vld [vmem:[%s1 + $0x48] sm:$0xff]
  %v105 = vld [vmem:[%s1 + $0x50] sm:$0xff]
  %v106 = vld [vmem:[%s1 + $0x58] sm:$0xff]
  %v107 = vld [vmem:[%s1 + $0x60] sm:$0xff]
  %v108 = vld [vmem:[%s1 + $0x68] sm:$0xff]
  %v109 = vld [vmem:[%s1 + $0x70] sm:$0xff]
  %v110 = vld [vmem:[%s1 + $0x78] sm:$0xff]
  %v111 = vld [vmem:[%s1 + $0x80] sm:$0xff]
  %v112 = vld [vmem:[%s1 + $0x88] sm:$0xff]
  %v113 = vld [vmem:[%s1 + $0x90] sm:$0xff]
  %v114 = vld [vmem:[%s1 + $0x98] sm:$0xff]
  %v115 = vld [vmem:[%s1 + $0xa0] sm:$0xff]
  %v116 = vld [vmem:[%s1 + $0xa8] sm:$0xff]
  %v117 = vld [vmem:[%s1 + $0xb0] sm:$0xff]
  %v118 = vld [vmem:[%s1 + $0xb8] sm:$0xff]
  %v119 = vld [vmem:[%s1 + $0xc0] sm:$0xff]
  %v120 = vld [vmem:[%s1 + $0xc8] sm:$0xff]
  %v121 = vld [vmem:[%s1 + $0xd0] sm:$0xff]
  %v122 = vld [vmem:[%s1 + $0xd8] sm:$0xff]
  %v123 = vld [vmem:[%s1 + $0xe0] sm:$0xff]
  %v124 = vld [vmem:[%s1 + $0xe8] sm:$0xff]
  %v125 = vld [vmem:[%s1 + $0xf0] sm:$0xff]
  %v126 = vld [vmem:[%s1 + $0xf8] sm:$0xff]
  %v127 = vpack.c.bf16 %v96, %v95
  %v128 = vpack.c.bf16 %v98, %v97
  %v129 = vpack.c.bf16 %v100, %v99
  %v130 = vpack.c.bf16 %v102, %v101
  %v131 = vpack.c.bf16 %v104, %v103
  %v132 = vpack.c.bf16 %v106, %v105
  %v133 = vpack.c.bf16 %v108, %v107
  %v134 = vpack.c.bf16 %v110, %v109
  %v135 = vpack.c.bf16 %v112, %v111
  %v136 = vpack.c.bf16 %v114, %v113
  %v137 = vpack.c.bf16 %v116, %v115
  %v138 = vpack.c.bf16 %v118, %v117
  %v139 = vpack.c.bf16 %v120, %v119
  %v140 = vpack.c.bf16 %v122, %v121
  %v141 = vpack.c.bf16 %v124, %v123
  %v142 = vpack.c.bf16 %v126, %v125
  %v143 = vld [vmem:[%s2] sm:$0xff]
  %v144 = vld [vmem:[%s2 + $0x8] sm:$0xff]
  %v145 = vld [vmem:[%s2 + $0x10] sm:$0xff]
  %v146 = vld [vmem:[%s2 + $0x18] sm:$0xff]
  %v147 = vld [vmem:[%s2 + $0x20] sm:$0xff]
  %v148 = vld [vmem:[%s2 + $0x28] sm:$0xff]
  %v149 = vld [vmem:[%s2 + $0x30] sm:$0xff]
  %v150 = vld [vmem:[%s2 + $0x38] sm:$0xff]
  %v151 = vld [vmem:[%s2 + $0x40] sm:$0xff]
  %v152 = vld [vmem:[%s2 + $0x48] sm:$0xff]
  %v153 = vld [vmem:[%s2 + $0x50] sm:$0xff]
  %v154 = vld [vmem:[%s2 + $0x58] sm:$0xff]
  %v155 = vld [vmem:[%s2 + $0x60] sm:$0xff]
  %v156 = vld [vmem:[%s2 + $0x68] sm:$0xff]
  %v157 = vld [vmem:[%s2 + $0x70] sm:$0xff]
  %v158 = vld [vmem:[%s2 + $0x78] sm:$0xff]
  %v159 = vld [vmem:[%s2 + $0x80] sm:$0xff]
  %v160 = vld [vmem:[%s2 + $0x88] sm:$0xff]
  %v161 = vld [vmem:[%s2 + $0x90] sm:$0xff]
  %v162 = vld [vmem:[%s2 + $0x98] sm:$0xff]
  %v163 = vld [vmem:[%s2 + $0xa0] sm:$0xff]
  %v164 = vld [vmem:[%s2 + $0xa8] sm:$0xff]
  %v165 = vld [vmem:[%s2 + $0xb0] sm:$0xff]
  %v166 = vld [vmem:[%s2 + $0xb8] sm:$0xff]
  %v167 = vld [vmem:[%s2 + $0xc0] sm:$0xff]
  %v168 = vld [vmem:[%s2 + $0xc8] sm:$0xff]
  %v169 = vld [vmem:[%s2 + $0xd0] sm:$0xff]
  %v170 = vld [vmem:[%s2 + $0xd8] sm:$0xff]
  %v171 = vld [vmem:[%s2 + $0xe0] sm:$0xff]
  %v172 = vld [vmem:[%s2 + $0xe8] sm:$0xff]
  %v173 = vld [vmem:[%s2 + $0xf0] sm:$0xff]
  %v174 = vld [vmem:[%s2 + $0xf8] sm:$0xff]
  %v175 = vpack.c.bf16 %v144, %v143
  %v176 = vpack.c.bf16 %v146, %v145
  %v177 = vpack.c.bf16 %v148, %v147
  %v178 = vpack.c.bf16 %v150, %v149
  %v179 = vpack.c.bf16 %v152, %v151
  %v180 = vpack.c.bf16 %v154, %v153
  %v181 = vpack.c.bf16 %v156, %v155
  %v182 = vpack.c.bf16 %v158, %v157
  %v183 = vpack.c.bf16 %v160, %v159
  %v184 = vpack.c.bf16 %v162, %v161
  %v185 = vpack.c.bf16 %v164, %v163
  %v186 = vpack.c.bf16 %v166, %v165
  %v187 = vpack.c.bf16 %v168, %v167
  %v188 = vpack.c.bf16 %v170, %v169
  %v189 = vpack.c.bf16 %v172, %v171
  %v190 = vpack.c.bf16 %v174, %v173
  %vm191 = vcmask 130048
  %v193 = vsel %vm191, %v79, 0
  %v196 = vsel %vm191, %v80, 0
  %v199 = vsel %vm191, %v81, 0
  %v202 = vsel %vm191, %v82, 0
  %v205 = vsel %vm191, %v127, 0
  %v208 = vsel %vm191, %v128, 0
  %v211 = vsel %vm191, %v129, 0
  %v214 = vsel %vm191, %v130, 0
  %216 = vmatprep.subr.bf16.mxu0 0
  %217 = vmatpush1.bf16.xpose.msra.mxu0 %v205
  %218 = vmatprep.subr.bf16.mxu0 0
  %219 = vmatpush1.bf16.xpose.msra.mxu0 %v208
  %220 = vmatprep.subr.bf16.mxu0 0
  %221 = vmatpush1.bf16.xpose.msra.mxu0 %v211
  %222 = vmatprep.subr.bf16.mxu0 0
  %223 = vmatpush1.bf16.xpose.msra.mxu0 %v214
  %224 = vmatprep.subr.bf16.mxu0 0
  %225 = vmatpush1.bf16.xpose.msra.mxu0 0
  %226 = vmatprep.subr.bf16.mxu0 0
  %227 = vmatpush1.bf16.xpose.msra.mxu0 0
  %228 = vmatprep.subr.bf16.mxu0 0
  %229 = vmatpush1.bf16.xpose.msra.mxu0 0
  %230 = vmatprep.subr.bf16.mxu0 0
  %231 = vmatpush1.bf16.xpose.msra.mxu0 0
  %232 = vmatprep.subr.bf16.mxu0 0
  %233 = vmatpush1.bf16.xpose.msra.mxu0 0
  %234 = vmatprep.subr.bf16.mxu0 0
  %235 = vmatpush1.bf16.xpose.msra.mxu0 0
  %236 = vmatprep.subr.bf16.mxu0 0
  %237 = vmatpush1.bf16.xpose.msra.mxu0 0
  %238 = vmatprep.subr.bf16.mxu0 0
  %239 = vmatpush1.bf16.xpose.msra.mxu0 0
  %240 = vmatprep.subr.bf16.mxu0 0
  %241 = vmatpush1.bf16.xpose.msra.mxu0 0
  %242 = vmatprep.subr.bf16.mxu0 0
  %243 = vmatpush1.bf16.xpose.msra.mxu0 0
  %244 = vmatprep.subr.bf16.mxu0 0
  %245 = vmatpush1.bf16.xpose.msra.mxu0 0
  %246 = vmatprep.subr.bf16.mxu0 0
  %247 = vmatpush1.bf16.xpose.msra.mxu0 0
  %248 = vmatprep.mubr.bf16.mxu0 0
  %249 = vmatmul.mubr.bf16.gmra.mrb[0].mxu0 %v193
  %v250 = vpop.f32.mrb[0].mxu0
  %v251 = vadd.f32 0.0, %v250
  %v252 = vpop.f32.mrb[0].mxu0
  %v253 = vpop.f32.mrb[0].mxu0
  %v254 = vadd.f32 0.0, %v253
  %v255 = vpop.f32.mrb[0].mxu0
  %256 = vmatprep.mubr.bf16.mxu0 0
  %257 = vmatmul.mubr.bf16.gmra.mrb[0].mxu0 %v196
  %v258 = vpop.f32.mrb[0].mxu0
  %v259 = vadd.f32 0.0, %v258
  %v260 = vpop.f32.mrb[0].mxu0
  %v261 = vpop.f32.mrb[0].mxu0
  %v262 = vadd.f32 0.0, %v261
  %v263 = vpop.f32.mrb[0].mxu0
  %264 = vmatprep.mubr.bf16.mxu0 0
  %265 = vmatmul.mubr.bf16.gmra.mrb[0].mxu0 %v199
  %v266 = vpop.f32.mrb[0].mxu0
  %v267 = vadd.f32 0.0, %v266
  %v268 = vpop.f32.mrb[0].mxu0
  %v269 = vpop.f32.mrb[0].mxu0
  %v270 = vadd.f32 0.0, %v269
  %v271 = vpop.f32.mrb[0].mxu0
  %272 = vmatprep.mubr.bf16.mxu0 0
  %273 = vmatmul.mubr.bf16.gmra.mrb[0].mxu0 %v202
  %v274 = vpop.f32.mrb[0].mxu0
  %v275 = vadd.f32 0.0, %v274
  %v276 = vpop.f32.mrb[0].mxu0
  %v277 = vpop.f32.mrb[0].mxu0
  %v278 = vadd.f32 0.0, %v277
  %v279 = vpop.f32.mrb[0].mxu0
  %280 = vdwg.mxu0
  %v282 = vsel %vm191, %v83, 0
  %v285 = vsel %vm191, %v84, 0
  %v288 = vsel %vm191, %v85, 0
  %v291 = vsel %vm191, %v86, 0
  %v294 = vsel %vm191, %v131, 0
  %v297 = vsel %vm191, %v132, 0
  %v300 = vsel %vm191, %v133, 0
  %v303 = vsel %vm191, %v134, 0
  %305 = vmatprep.subr.bf16.mxu0 0
  %306 = vmatpush1.bf16.xpose.msra.mxu0 %v294
  %307 = vmatprep.subr.bf16.mxu0 0
  %308 = vmatpush1.bf16.xpose.msra.mxu0 %v297
  %309 = vmatprep.subr.bf16.mxu0 0
  %310 = vmatpush1.bf16.xpose.msra.mxu0 %v300
  %311 = vmatprep.subr.bf16.mxu0 0
  %312 = vmatpush1.bf16.xpose.msra.mxu0 %v303
  %313 = vmatprep.subr.bf16.mxu0 0
  %314 = vmatpush1.bf16.xpose.msra.mxu0 0
  %315 = vmatprep.subr.bf16.mxu0 0
  %316 = vmatpush1.bf16.xpose.msra.mxu0 0
  %317 = vmatprep.subr.bf16.mxu0 0
  %318 = vmatpush1.bf16.xpose.msra.mxu0 0
  %319 = vmatprep.subr.bf16.mxu0 0
  %320 = vmatpush1.bf16.xpose.msra.mxu0 0
  %321 = vmatprep.subr.bf16.mxu0 0
  %322 = vmatpush1.bf16.xpose.msra.mxu0 0
  %323 = vmatprep.subr.bf16.mxu0 0
  %324 = vmatpush1.bf16.xpose.msra.mxu0 0
  %325 = vmatprep.subr.bf16.mxu0 0
  %326 = vmatpush1.bf16.xpose.msra.mxu0 0
  %327 = vmatprep.subr.bf16.mxu0 0
  %328 = vmatpush1.bf16.xpose.msra.mxu0 0
  %329 = vmatprep.subr.bf16.mxu0 0
  %330 = vmatpush1.bf16.xpose.msra.mxu0 0
  %331 = vmatprep.subr.bf16.mxu0 0
  %332 = vmatpush1.bf16.xpose.msra.mxu0 0
  %333 = vmatprep.subr.bf16.mxu0 0
  %334 = vmatpush1.bf16.xpose.msra.mxu0 0
  %335 = vmatprep.subr.bf16.mxu0 0
  %336 = vmatpush1.bf16.xpose.msra.mxu0 0
  %337 = vmatprep.mubr.bf16.mxu0 0
  %338 = vmatmul.mubr.bf16.gmra.mrb[0].mxu0 %v282
  %v339 = vpop.f32.mrb[0].mxu0
  %v340 = vadd.f32 0.0, %v339
  %v341 = vpop.f32.mrb[0].mxu0
  %v342 = vpop.f32.mrb[0].mxu0
  %v343 = vadd.f32 0.0, %v342
  %v344 = vpop.f32.mrb[0].mxu0
  %345 = vmatprep.mubr.bf16.mxu0 0
  %346 = vmatmul.mubr.bf16.gmra.mrb[0].mxu0 %v285
  %v347 = vpop.f32.mrb[0].mxu0
  %v348 = vadd.f32 0.0, %v347
  %v349 = vpop.f32.mrb[0].mxu0
  %v350 = vpop.f32.mrb[0].mxu0
  %v351 = vadd.f32 0.0, %v350
  %v352 = vpop.f32.mrb[0].mxu0
  %353 = vmatprep.mubr.bf16.mxu0 0
  %354 = vmatmul.mubr.bf16.gmra.mrb[0].mxu0 %v288
  %v355 = vpop.f32.mrb[0].mxu0
  %v356 = vadd.f32 0.0, %v355
  %v357 = vpop.f32.mrb[0].mxu0
  %v358 = vpop.f32.mrb[0].mxu0
  %v359 = vadd.f32 0.0, %v358
  %v360 = vpop.f32.mrb[0].mxu0
  %361 = vmatprep.mubr.bf16.mxu0 0
  %362 = vmatmul.mubr.bf16.gmra.mrb[0].mxu0 %v291
  %v363 = vpop.f32.mrb[0].mxu0
  %v364 = vadd.f32 0.0, %v363
  %v365 = vpop.f32.mrb[0].mxu0
  %v366 = vpop.f32.mrb[0].mxu0
  %v367 = vadd.f32 0.0, %v366
  %v368 = vpop.f32.mrb[0].mxu0
  %369 = vdwg.mxu0
  %v371 = vsel %vm191, %v87, 0
  %v374 = vsel %vm191, %v88, 0
  %v377 = vsel %vm191, %v89, 0
  %v380 = vsel %vm191, %v90, 0
  %v383 = vsel %vm191, %v135, 0
  %v386 = vsel %vm191, %v136, 0
  %v389 = vsel %vm191, %v137, 0
  %v392 = vsel %vm191, %v138, 0
  %394 = vmatprep.subr.bf16.mxu0 0
  %395 = vmatpush1.bf16.xpose.msra.mxu0 %v383
  %396 = vmatprep.subr.bf16.mxu0 0
  %397 = vmatpush1.bf16.xpose.msra.mxu0 %v386
  %398 = vmatprep.subr.bf16.mxu0 0
  %399 = vmatpush1.bf16.xpose.msra.mxu0 %v389
  %400 = vmatprep.subr.bf16.mxu0 0
  %401 = vmatpush1.bf16.xpose.msra.mxu0 %v392
  %402 = vmatprep.subr.bf16.mxu0 0
  %403 = vmatpush1.bf16.xpose.msra.mxu0 0
  %404 = vmatprep.subr.bf16.mxu0 0
  %405 = vmatpush1.bf16.xpose.msra.mxu0 0
  %406 = vmatprep.subr.bf16.mxu0 0
  %407 = vmatpush1.bf16.xpose.msra.mxu0 0
  %408 = vmatprep.subr.bf16.mxu0 0
  %409 = vmatpush1.bf16.xpose.msra.mxu0 0
  %410 = vmatprep.subr.bf16.mxu0 0
  %411 = vmatpush1.bf16.xpose.msra.mxu0 0
  %412 = vmatprep.subr.bf16.mxu0 0
  %413 = vmatpush1.bf16.xpose.msra.mxu0 0
  %414 = vmatprep.subr.bf16.mxu0 0
  %415 = vmatpush1.bf16.xpose.msra.mxu0 0
  %416 = vmatprep.subr.bf16.mxu0 0
  %417 = vmatpush1.bf16.xpose.msra.mxu0 0
  %418 = vmatprep.subr.bf16.mxu0 0
  %419 = vmatpush1.bf16.xpose.msra.mxu0 0
  %420 = vmatprep.subr.bf16.mxu0 0
  %421 = vmatpush1.bf16.xpose.msra.mxu0 0
  %422 = vmatprep.subr.bf16.mxu0 0
  %423 = vmatpush1.bf16.xpose.msra.mxu0 0
  %424 = vmatprep.subr.bf16.mxu0 0
  %425 = vmatpush1.bf16.xpose.msra.mxu0 0
  %426 = vmatprep.mubr.bf16.mxu0 0
  %427 = vmatmul.mubr.bf16.gmra.mrb[0].mxu0 %v371
  %v428 = vpop.f32.mrb[0].mxu0
  %v429 = vadd.f32 0.0, %v428
  %v430 = vpop.f32.mrb[0].mxu0
  %v431 = vpop.f32.mrb[0].mxu0
  %v432 = vadd.f32 0.0, %v431
  %v433 = vpop.f32.mrb[0].mxu0
  %434 = vmatprep.mubr.bf16.mxu0 0
  %435 = vmatmul.mubr.bf16.gmra.mrb[0].mxu0 %v374
  %v436 = vpop.f32.mrb[0].mxu0
  %v437 = vadd.f32 0.0, %v436
  %v438 = vpop.f32.mrb[0].mxu0
  %v439 = vpop.f32.mrb[0].mxu0
  %v440 = vadd.f32 0.0, %v439
  %v441 = vpop.f32.mrb[0].mxu0
  %442 = vmatprep.mubr.bf16.mxu0 0
  %443 = vmatmul.mubr.bf16.gmra.mrb[0].mxu0 %v377
  %v444 = vpop.f32.mrb[0].mxu0
  %v445 = vadd.f32 0.0, %v444
  %v446 = vpop.f32.mrb[0].mxu0
  %v447 = vpop.f32.mrb[0].mxu0
  %v448 = vadd.f32 0.0, %v447
  %v449 = vpop.f32.mrb[0].mxu0
  %450 = vmatprep.mubr.bf16.mxu0 0
  %451 = vmatmul.mubr.bf16.gmra.mrb[0].mxu0 %v380
  %v452 = vpop.f32.mrb[0].mxu0
  %v453 = vadd.f32 0.0, %v452
  %v454 = vpop.f32.mrb[0].mxu0
  %v455 = vpop.f32.mrb[0].mxu0
  %v456 = vadd.f32 0.0, %v455
  %v457 = vpop.f32.mrb[0].mxu0
  %458 = vdwg.mxu0
  %v460 = vsel %vm191, %v91, 0
  %v463 = vsel %vm191, %v92, 0
  %v466 = vsel %vm191, %v93, 0
  %v469 = vsel %vm191, %v94, 0
  %v472 = vsel %vm191, %v139, 0
  %v475 = vsel %vm191, %v140, 0
  %v478 = vsel %vm191, %v141, 0
  %v481 = vsel %vm191, %v142, 0
  %483 = vmatprep.subr.bf16.mxu0 0
  %484 = vmatpush1.bf16.xpose.msra.mxu0 %v472
  %485 = vmatprep.subr.bf16.mxu0 0
  %486 = vmatpush1.bf16.xpose.msra.mxu0 %v475
  %487 = vmatprep.subr.bf16.mxu0 0
  %488 = vmatpush1.bf16.xpose.msra.mxu0 %v478
  %489 = vmatprep.subr.bf16.mxu0 0
  %490 = vmatpush1.bf16.xpose.msra.mxu0 %v481
  %491 = vmatprep.subr.bf16.mxu0 0
  %492 = vmatpush1.bf16.xpose.msra.mxu0 0
  %493 = vmatprep.subr.bf16.mxu0 0
  %494 = vmatpush1.bf16.xpose.msra.mxu0 0
  %495 = vmatprep.subr.bf16.mxu0 0
  %496 = vmatpush1.bf16.xpose.msra.mxu0 0
  %497 = vmatprep.subr.bf16.mxu0 0
  %498 = vmatpush1.bf16.xpose.msra.mxu0 0
  %499 = vmatprep.subr.bf16.mxu0 0
  %500 = vmatpush1.bf16.xpose.msra.mxu0 0
  %501 = vmatprep.subr.bf16.mxu0 0
  %502 = vmatpush1.bf16.xpose.msra.mxu0 0
  %503 = vmatprep.subr.bf16.mxu0 0
  %504 = vmatpush1.bf16.xpose.msra.mxu0 0
  %505 = vmatprep.subr.bf16.mxu0 0
  %506 = vmatpush1.bf16.xpose.msra.mxu0 0
  %507 = vmatprep.subr.bf16.mxu0 0
  %508 = vmatpush1.bf16.xpose.msra.mxu0 0
  %509 = vmatprep.subr.bf16.mxu0 0
  %510 = vmatpush1.bf16.xpose.msra.mxu0 0
  %511 = vmatprep.subr.bf16.mxu0 0
  %512 = vmatpush1.bf16.xpose.msra.mxu0 0
  %513 = vmatprep.subr.bf16.mxu0 0
  %514 = vmatpush1.bf16.xpose.msra.mxu0 0
  %515 = vmatprep.mubr.bf16.mxu0 0
  %516 = vmatmul.mubr.bf16.gmra.mrb[0].mxu0 %v460
  %v517 = vpop.f32.mrb[0].mxu0
  %v518 = vadd.f32 0.0, %v517
  %v519 = vpop.f32.mrb[0].mxu0
  %v520 = vpop.f32.mrb[0].mxu0
  %v521 = vadd.f32 0.0, %v520
  %v522 = vpop.f32.mrb[0].mxu0
  %523 = vmatprep.mubr.bf16.mxu0 0
  %524 = vmatmul.mubr.bf16.gmra.mrb[0].mxu0 %v463
  %v525 = vpop.f32.mrb[0].mxu0
  %v526 = vadd.f32 0.0, %v525
  %v527 = vpop.f32.mrb[0].mxu0
  %v528 = vpop.f32.mrb[0].mxu0
  %v529 = vadd.f32 0.0, %v528
  %v530 = vpop.f32.mrb[0].mxu0
  %531 = vmatprep.mubr.bf16.mxu0 0
  %532 = vmatmul.mubr.bf16.gmra.mrb[0].mxu0 %v466
  %v533 = vpop.f32.mrb[0].mxu0
  %v534 = vadd.f32 0.0, %v533
  %v535 = vpop.f32.mrb[0].mxu0
  %v536 = vpop.f32.mrb[0].mxu0
  %v537 = vadd.f32 0.0, %v536
  %v538 = vpop.f32.mrb[0].mxu0
  %539 = vmatprep.mubr.bf16.mxu0 0
  %540 = vmatmul.mubr.bf16.gmra.mrb[0].mxu0 %v469
  %v541 = vpop.f32.mrb[0].mxu0
  %v542 = vadd.f32 0.0, %v541
  %v543 = vpop.f32.mrb[0].mxu0
  %v544 = vpop.f32.mrb[0].mxu0
  %v545 = vadd.f32 0.0, %v544
  %v546 = vpop.f32.mrb[0].mxu0
  %547 = vdwg.mxu0
  %vm548 = vcmask 523264
  %v549 = vsel %vm548, %v251, -inf
  %550 = vmax.xlane.f32.xlu0 %v549
  %v551 = vpop.xlane.xlu0 %550
  %v552 = vsel %vm548, %v254, -inf
  %553 = vmax.xlane.f32.xlu0 %v552
  %v554 = vpop.xlane.xlu0 %553
  %v555 = vsel %vm548, %v259, -inf
  %556 = vmax.xlane.f32.xlu0 %v555
  %v557 = vpop.xlane.xlu0 %556
  %v558 = vsel %vm548, %v262, -inf
  %559 = vmax.xlane.f32.xlu0 %v558
  %v560 = vpop.xlane.xlu0 %559
  %v561 = vsel %vm548, %v267, -inf
  %562 = vmax.xlane.f32.xlu0 %v561
  %v563 = vpop.xlane.xlu0 %562
  %v564 = vsel %vm548, %v270, -inf
  %565 = vmax.xlane.f32.xlu0 %v564
  %v566 = vpop.xlane.xlu0 %565
  %v567 = vsel %vm548, %v275, -inf
  %568 = vmax.xlane.f32.xlu0 %v567
  %v569 = vpop.xlane.xlu0 %568
  %v570 = vsel %vm548, %v278, -inf
  %571 = vmax.xlane.f32.xlu0 %v570
  %v572 = vpop.xlane.xlu0 %571
  %v573 = vsel %vm548, %v340, -inf
  %574 = vmax.xlane.f32.xlu0 %v573
  %v575 = vpop.xlane.xlu0 %574
  %v576 = vsel %vm548, %v343, -inf
  %577 = vmax.xlane.f32.xlu0 %v576
  %v578 = vpop.xlane.xlu0 %577
  %v579 = vsel %vm548, %v348, -inf
  %580 = vmax.xlane.f32.xlu0 %v579
  %v581 = vpop.xlane.xlu0 %580
  %v582 = vsel %vm548, %v351, -inf
  %583 = vmax.xlane.f32.xlu0 %v582
  %v584 = vpop.xlane.xlu0 %583
  %v585 = vsel %vm548, %v356, -inf
  %586 = vmax.xlane.f32.xlu0 %v585
  %v587 = vpop.xlane.xlu0 %586
  %v588 = vsel %vm548, %v359, -inf
  %589 = vmax.xlane.f32.xlu0 %v588
  %v590 = vpop.xlane.xlu0 %589
  %v591 = vsel %vm548, %v364, -inf
  %592 = vmax.xlane.f32.xlu0 %v591
  %v593 = vpop.xlane.xlu0 %592
  %v594 = vsel %vm548, %v367, -inf
  %595 = vmax.xlane.f32.xlu0 %v594
  %v596 = vpop.xlane.xlu0 %595
  %v597 = vsel %vm548, %v429, -inf
  %598 = vmax.xlane.f32.xlu0 %v597
  %v599 = vpop.xlane.xlu0 %598
  %v600 = vsel %vm548, %v432, -inf
  %601 = vmax.xlane.f32.xlu0 %v600
  %v602 = vpop.xlane.xlu0 %601
  %v603 = vsel %vm548, %v437, -inf
  %604 = vmax.xlane.f32.xlu0 %v603
  %v605 = vpop.xlane.xlu0 %604
  %v606 = vsel %vm548, %v440, -inf
  %607 = vmax.xlane.f32.xlu0 %v606
  %v608 = vpop.xlane.xlu0 %607
  %v609 = vsel %vm548, %v445, -inf
  %610 = vmax.xlane.f32.xlu0 %v609
  %v611 = vpop.xlane.xlu0 %610
  %v612 = vsel %vm548, %v448, -inf
  %613 = vmax.xlane.f32.xlu0 %v612
  %v614 = vpop.xlane.xlu0 %613
  %v615 = vsel %vm548, %v453, -inf
  %616 = vmax.xlane.f32.xlu0 %v615
  %v617 = vpop.xlane.xlu0 %616
  %v618 = vsel %vm548, %v456, -inf
  %619 = vmax.xlane.f32.xlu0 %v618
  %v620 = vpop.xlane.xlu0 %619
  %v621 = vsel %vm548, %v518, -inf
  %622 = vmax.xlane.f32.xlu0 %v621
  %v623 = vpop.xlane.xlu0 %622
  %v624 = vsel %vm548, %v521, -inf
  %625 = vmax.xlane.f32.xlu0 %v624
  %v626 = vpop.xlane.xlu0 %625
  %v627 = vsel %vm548, %v526, -inf
  %628 = vmax.xlane.f32.xlu0 %v627
  %v629 = vpop.xlane.xlu0 %628
  %v630 = vsel %vm548, %v529, -inf
  %631 = vmax.xlane.f32.xlu0 %v630
  %v632 = vpop.xlane.xlu0 %631
  %v633 = vsel %vm548, %v534, -inf
  %634 = vmax.xlane.f32.xlu0 %v633
  %v635 = vpop.xlane.xlu0 %634
  %v636 = vsel %vm548, %v537, -inf
  %637 = vmax.xlane.f32.xlu0 %v636
  %v638 = vpop.xlane.xlu0 %637
  %v639 = vsel %vm548, %v542, -inf
  %640 = vmax.xlane.f32.xlu0 %v639
  %v641 = vpop.xlane.xlu0 %640
  %v642 = vsel %vm548, %v545, -inf
  %643 = vmax.xlane.f32.xlu0 %v642
  %v644 = vpop.xlane.xlu0 %643
  %v645 = vsub.f32 %v251, %v551
  %v646 = vsub.f32 %v254, %v554
  %v647 = vsub.f32 %v259, %v557
  %v648 = vsub.f32 %v262, %v560
  %v649 = vsub.f32 %v267, %v563
  %v650 = vsub.f32 %v270, %v566
  %v651 = vsub.f32 %v275, %v569
  %v652 = vsub.f32 %v278, %v572
  %v653 = vsub.f32 %v340, %v575
  %v654 = vsub.f32 %v343, %v578
  %v655 = vsub.f32 %v348, %v581
  %v656 = vsub.f32 %v351, %v584
  %v657 = vsub.f32 %v356, %v587
  %v658 = vsub.f32 %v359, %v590
  %v659 = vsub.f32 %v364, %v593
  %v660 = vsub.f32 %v367, %v596
  %v661 = vsub.f32 %v429, %v599
  %v662 = vsub.f32 %v432, %v602
  %v663 = vsub.f32 %v437, %v605
  %v664 = vsub.f32 %v440, %v608
  %v665 = vsub.f32 %v445, %v611
  %v666 = vsub.f32 %v448, %v614
  %v667 = vsub.f32 %v453, %v617
  %v668 = vsub.f32 %v456, %v620
  %v669 = vsub.f32 %v518, %v623
  %v670 = vsub.f32 %v521, %v626
  %v671 = vsub.f32 %v526, %v629
  %v672 = vsub.f32 %v529, %v632
  %v673 = vsub.f32 %v534, %v635
  %v674 = vsub.f32 %v537, %v638
  %v675 = vsub.f32 %v542, %v641
  %v676 = vsub.f32 %v545, %v644
  %v677 = vmul.f32 %v645, 1.442695
  %v678 = vpow.pop %v677
  %v679 = vmul.f32 %v646, 1.442695
  %v680 = vpow.pop %v679
  %v681 = vmul.f32 %v647, 1.442695
  %v682 = vpow.pop %v681
  %v683 = vmul.f32 %v648, 1.442695
  %v684 = vpow.pop %v683
  %v685 = vmul.f32 %v649, 1.442695
  %v686 = vpow.pop %v685
  %v687 = vmul.f32 %v650, 1.442695
  %v688 = vpow.pop %v687
  %v689 = vmul.f32 %v651, 1.442695
  %v690 = vpow.pop %v689
  %v691 = vmul.f32 %v652, 1.442695
  %v692 = vpow.pop %v691
  %v693 = vmul.f32 %v653, 1.442695
  %v694 = vpow.pop %v693
  %v695 = vmul.f32 %v654, 1.442695
  %v696 = vpow.pop %v695
  %v697 = vmul.f32 %v655, 1.442695
  %v698 = vpow.pop %v697
  %v699 = vmul.f32 %v656, 1.442695
  %v700 = vpow.pop %v699
  %v701 = vmul.f32 %v657, 1.442695
  %v702 = vpow.pop %v701
  %v703 = vmul.f32 %v658, 1.442695
  %v704 = vpow.pop %v703
  %v705 = vmul.f32 %v659, 1.442695
  %v706 = vpow.pop %v705
  %v707 = vmul.f32 %v660, 1.442695
  %v708 = vpow.pop %v707
  %v709 = vmul.f32 %v661, 1.442695
  %v710 = vpow.pop %v709
  %v711 = vmul.f32 %v662, 1.442695
  %v712 = vpow.pop %v711
  %v713 = vmul.f32 %v663, 1.442695
  %v714 = vpow.pop %v713
  %v715 = vmul.f32 %v664, 1.442695
  %v716 = vpow.pop %v715
  %v717 = vmul.f32 %v665, 1.442695
  %v718 = vpow.pop %v717
  %v719 = vmul.f32 %v666, 1.442695
  %v720 = vpow.pop %v719
  %v721 = vmul.f32 %v667, 1.442695
  %v722 = vpow.pop %v721
  %v723 = vmul.f32 %v668, 1.442695
  %v724 = vpow.pop %v723
  %v725 = vmul.f32 %v669, 1.442695
  %v726 = vpow.pop %v725
  %v727 = vmul.f32 %v670, 1.442695
  %v728 = vpow.pop %v727
  %v729 = vmul.f32 %v671, 1.442695
  %v730 = vpow.pop %v729
  %v731 = vmul.f32 %v672, 1.442695
  %v732 = vpow.pop %v731
  %v733 = vmul.f32 %v673, 1.442695
  %v734 = vpow.pop %v733
  %v735 = vmul.f32 %v674, 1.442695
  %v736 = vpow.pop %v735
  %v737 = vmul.f32 %v675, 1.442695
  %v738 = vpow.pop %v737
  %v739 = vmul.f32 %v676, 1.442695
  %v740 = vpow.pop %v739
  %v741 = vsel %vm548, %v678, 0.0
  %742 = vadd.xlane.f32.xlu0 %v741
  %v743 = vpop.xlane.xlu0 %742
  %v744 = vsel %vm548, %v680, 0.0
  %745 = vadd.xlane.f32.xlu0 %v744
  %v746 = vpop.xlane.xlu0 %745
  %v747 = vsel %vm548, %v682, 0.0
  %748 = vadd.xlane.f32.xlu0 %v747
  %v749 = vpop.xlane.xlu0 %748
  %v750 = vsel %vm548, %v684, 0.0
  %751 = vadd.xlane.f32.xlu0 %v750
  %v752 = vpop.xlane.xlu0 %751
  %v753 = vsel %vm548, %v686, 0.0
  %754 = vadd.xlane.f32.xlu0 %v753
  %v755 = vpop.xlane.xlu0 %754
  %v756 = vsel %vm548, %v688, 0.0
  %757 = vadd.xlane.f32.xlu0 %v756
  %v758 = vpop.xlane.xlu0 %757
  %v759 = vsel %vm548, %v690, 0.0
  %760 = vadd.xlane.f32.xlu0 %v759
  %v761 = vpop.xlane.xlu0 %760
  %v762 = vsel %vm548, %v692, 0.0
  %763 = vadd.xlane.f32.xlu0 %v762
  %v764 = vpop.xlane.xlu0 %763
  %v765 = vsel %vm548, %v694, 0.0
  %766 = vadd.xlane.f32.xlu0 %v765
  %v767 = vpop.xlane.xlu0 %766
  %v768 = vsel %vm548, %v696, 0.0
  %769 = vadd.xlane.f32.xlu0 %v768
  %v770 = vpop.xlane.xlu0 %769
  %v771 = vsel %vm548, %v698, 0.0
  %772 = vadd.xlane.f32.xlu0 %v771
  %v773 = vpop.xlane.xlu0 %772
  %v774 = vsel %vm548, %v700, 0.0
  %775 = vadd.xlane.f32.xlu0 %v774
  %v776 = vpop.xlane.xlu0 %775
  %v777 = vsel %vm548, %v702, 0.0
  %778 = vadd.xlane.f32.xlu0 %v777
  %v779 = vpop.xlane.xlu0 %778
  %v780 = vsel %vm548, %v704, 0.0
  %781 = vadd.xlane.f32.xlu0 %v780
  %v782 = vpop.xlane.xlu0 %781
  %v783 = vsel %vm548, %v706, 0.0
  %784 = vadd.xlane.f32.xlu0 %v783
  %v785 = vpop.xlane.xlu0 %784
  %v786 = vsel %vm548, %v708, 0.0
  %787 = vadd.xlane.f32.xlu0 %v786
  %v788 = vpop.xlane.xlu0 %787
  %v789 = vsel %vm548, %v710, 0.0
  %790 = vadd.xlane.f32.xlu0 %v789
  %v791 = vpop.xlane.xlu0 %790
  %v792 = vsel %vm548, %v712, 0.0
  %793 = vadd.xlane.f32.xlu0 %v792
  %v794 = vpop.xlane.xlu0 %793
  %v795 = vsel %vm548, %v714, 0.0
  %796 = vadd.xlane.f32.xlu0 %v795
  %v797 = vpop.xlane.xlu0 %796
  %v798 = vsel %vm548, %v716, 0.0
  %799 = vadd.xlane.f32.xlu0 %v798
  %v800 = vpop.xlane.xlu0 %799
  %v801 = vsel %vm548, %v718, 0.0
  %802 = vadd.xlane.f32.xlu0 %v801
  %v803 = vpop.xlane.xlu0 %802
  %v804 = vsel %vm548, %v720, 0.0
  %805 = vadd.xlane.f32.xlu0 %v804
  %v806 = vpop.xlane.xlu0 %805
  %v807 = vsel %vm548, %v722, 0.0
  %808 = vadd.xlane.f32.xlu0 %v807
  %v809 = vpop.xlane.xlu0 %808
  %v810 = vsel %vm548, %v724, 0.0
  %811 = vadd.xlane.f32.xlu0 %v810
  %v812 = vpop.xlane.xlu0 %811
  %v813 = vsel %vm548, %v726, 0.0
  %814 = vadd.xlane.f32.xlu0 %v813
  %v815 = vpop.xlane.xlu0 %814
  %v816 = vsel %vm548, %v728, 0.0
  %817 = vadd.xlane.f32.xlu0 %v816
  %v818 = vpop.xlane.xlu0 %817
  %v819 = vsel %vm548, %v730, 0.0
  %820 = vadd.xlane.f32.xlu0 %v819
  %v821 = vpop.xlane.xlu0 %820
  %v822 = vsel %vm548, %v732, 0.0
  %823 = vadd.xlane.f32.xlu0 %v822
  %v824 = vpop.xlane.xlu0 %823
  %v825 = vsel %vm548, %v734, 0.0
  %826 = vadd.xlane.f32.xlu0 %v825
  %v827 = vpop.xlane.xlu0 %826
  %v828 = vsel %vm548, %v736, 0.0
  %829 = vadd.xlane.f32.xlu0 %v828
  %v830 = vpop.xlane.xlu0 %829
  %v831 = vsel %vm548, %v738, 0.0
  %832 = vadd.xlane.f32.xlu0 %v831
  %v833 = vpop.xlane.xlu0 %832
  %v834 = vsel %vm548, %v740, 0.0
  %835 = vadd.xlane.f32.xlu0 %v834
  %v836 = vpop.xlane.xlu0 %835
  %v837 = vrcp.pop %v743
  %v838 = vrcp.pop %v746
  %v839 = vrcp.pop %v749
  %v840 = vrcp.pop %v752
  %v841 = vrcp.pop %v755
  %v842 = vrcp.pop %v758
  %v843 = vrcp.pop %v761
  %v844 = vrcp.pop %v764
  %v845 = vrcp.pop %v767
  %v846 = vrcp.pop %v770
  %v847 = vrcp.pop %v773
  %v848 = vrcp.pop %v776
  %v849 = vrcp.pop %v779
  %v850 = vrcp.pop %v782
  %v851 = vrcp.pop %v785
  %v852 = vrcp.pop %v788
  %v853 = vrcp.pop %v791
  %v854 = vrcp.pop %v794
  %v855 = vrcp.pop %v797
  %v856 = vrcp.pop %v800
  %v857 = vrcp.pop %v803
  %v858 = vrcp.pop %v806
  %v859 = vrcp.pop %v809
  %v860 = vrcp.pop %v812
  %v861 = vrcp.pop %v815
  %v862 = vrcp.pop %v818
  %v863 = vrcp.pop %v821
  %v864 = vrcp.pop %v824
  %v865 = vrcp.pop %v827
  %v866 = vrcp.pop %v830
  %v867 = vrcp.pop %v833
  %v868 = vrcp.pop %v836
  %v869 = vmul.f32 %v678, %v837
  %v870 = vmul.f32 %v680, %v838
  %v871 = vmul.f32 %v682, %v839
  %v872 = vmul.f32 %v684, %v840
  %v873 = vmul.f32 %v686, %v841
  %v874 = vmul.f32 %v688, %v842
  %v875 = vmul.f32 %v690, %v843
  %v876 = vmul.f32 %v692, %v844
  %v877 = vmul.f32 %v694, %v845
  %v878 = vmul.f32 %v696, %v846
  %v879 = vmul.f32 %v698, %v847
  %v880 = vmul.f32 %v700, %v848
  %v881 = vmul.f32 %v702, %v849
  %v882 = vmul.f32 %v704, %v850
  %v883 = vmul.f32 %v706, %v851
  %v884 = vmul.f32 %v708, %v852
  %v885 = vmul.f32 %v710, %v853
  %v886 = vmul.f32 %v712, %v854
  %v887 = vmul.f32 %v714, %v855
  %v888 = vmul.f32 %v716, %v856
  %v889 = vmul.f32 %v718, %v857
  %v890 = vmul.f32 %v720, %v858
  %v891 = vmul.f32 %v722, %v859
  %v892 = vmul.f32 %v724, %v860
  %v893 = vmul.f32 %v726, %v861
  %v894 = vmul.f32 %v728, %v862
  %v895 = vmul.f32 %v730, %v863
  %v896 = vmul.f32 %v732, %v864
  %v897 = vmul.f32 %v734, %v865
  %v898 = vmul.f32 %v736, %v866
  %v899 = vmul.f32 %v738, %v867
  %v900 = vmul.f32 %v740, %v868
  %v901 = vpack.c.bf16 %v870, %v869
  %v902 = vpack.c.bf16 %v872, %v871
  %v903 = vpack.c.bf16 %v874, %v873
  %v904 = vpack.c.bf16 %v876, %v875
  %v905 = vpack.c.bf16 %v878, %v877
  %v906 = vpack.c.bf16 %v880, %v879
  %v907 = vpack.c.bf16 %v882, %v881
  %v908 = vpack.c.bf16 %v884, %v883
  %v909 = vpack.c.bf16 %v886, %v885
  %v910 = vpack.c.bf16 %v888, %v887
  %v911 = vpack.c.bf16 %v890, %v889
  %v912 = vpack.c.bf16 %v892, %v891
  %v913 = vpack.c.bf16 %v894, %v893
  %v914 = vpack.c.bf16 %v896, %v895
  %v915 = vpack.c.bf16 %v898, %v897
  %v916 = vpack.c.bf16 %v900, %v899
  %v918 = vsel %vm548, %v901, 0
  %v921 = vsel %vm548, %v902, 0
  %v924 = vsel %vm548, %v903, 0
  %v927 = vsel %vm548, %v904, 0
  %929 = vmatprep.subr.bf16.mxu0 0
  %930 = vmatpush1.bf16.msra.mxu0 %v175
  %931 = vmatprep.subr.bf16.mxu0 0
  %932 = vmatpush1.bf16.msra.mxu0 %v176
  %933 = vmatprep.subr.bf16.mxu0 0
  %934 = vmatpush1.bf16.msra.mxu0 %v177
  %935 = vmatprep.subr.bf16.mxu0 0
  %936 = vmatpush1.bf16.msra.mxu0 %v178
  %937 = vmatprep.subr.bf16.mxu0 0
  %938 = vmatpush1.bf16.msra.mxu0 0
  %939 = vmatprep.subr.bf16.mxu0 0
  %940 = vmatpush1.bf16.msra.mxu0 0
  %941 = vmatprep.subr.bf16.mxu0 0
  %942 = vmatpush1.bf16.msra.mxu0 0
  %943 = vmatprep.subr.bf16.mxu0 0
  %944 = vmatpush1.bf16.msra.mxu0 0
  %945 = vmatprep.subr.bf16.mxu0 0
  %946 = vmatpush1.bf16.msra.mxu0 0
  %947 = vmatprep.subr.bf16.mxu0 0
  %948 = vmatpush1.bf16.msra.mxu0 0
  %949 = vmatprep.subr.bf16.mxu0 0
  %950 = vmatpush1.bf16.msra.mxu0 0
  %951 = vmatprep.subr.bf16.mxu0 0
  %952 = vmatpush1.bf16.msra.mxu0 0
  %953 = vmatprep.subr.bf16.mxu0 0
  %954 = vmatpush1.bf16.msra.mxu0 0
  %955 = vmatprep.subr.bf16.mxu0 0
  %956 = vmatpush1.bf16.msra.mxu0 0
  %957 = vmatprep.subr.bf16.mxu0 0
  %958 = vmatpush1.bf16.msra.mxu0 0
  %959 = vmatprep.subr.bf16.mxu0 0
  %960 = vmatpush1.bf16.msra.mxu0 0
  %961 = vmatprep.mubr.bf16.mxu0 0
  %962 = vmatmul.mubr.bf16.gmra.mrb[0].mxu0 %v918
  %v963 = vpop.f32.mrb[0].mxu0
  %v964 = vadd.f32 0.0, %v963
  %v965 = vpop.f32.mrb[0].mxu0
  %v966 = vpop.f32.mrb[0].mxu0
  %v967 = vadd.f32 0.0, %v966
  %v968 = vpop.f32.mrb[0].mxu0
  %969 = vmatprep.mubr.bf16.mxu0 0
  %970 = vmatmul.mubr.bf16.gmra.mrb[0].mxu0 %v921
  %v971 = vpop.f32.mrb[0].mxu0
  %v972 = vadd.f32 0.0, %v971
  %v973 = vpop.f32.mrb[0].mxu0
  %v974 = vpop.f32.mrb[0].mxu0
  %v975 = vadd.f32 0.0, %v974
  %v976 = vpop.f32.mrb[0].mxu0
  %977 = vmatprep.mubr.bf16.mxu0 0
  %978 = vmatmul.mubr.bf16.gmra.mrb[0].mxu0 %v924
  %v979 = vpop.f32.mrb[0].mxu0
  %v980 = vadd.f32 0.0, %v979
  %v981 = vpop.f32.mrb[0].mxu0
  %v982 = vpop.f32.mrb[0].mxu0
  %v983 = vadd.f32 0.0, %v982
  %v984 = vpop.f32.mrb[0].mxu0
  %985 = vmatprep.mubr.bf16.mxu0 0
  %986 = vmatmul.mubr.bf16.gmra.mrb[0].mxu0 %v927
  %v987 = vpop.f32.mrb[0].mxu0
  %v988 = vadd.f32 0.0, %v987
  %v989 = vpop.f32.mrb[0].mxu0
  %v990 = vpop.f32.mrb[0].mxu0
  %v991 = vadd.f32 0.0, %v990
  %v992 = vpop.f32.mrb[0].mxu0
  %993 = vdwg.mxu0
  %v995 = vsel %vm548, %v905, 0
  %v998 = vsel %vm548, %v906, 0
  %v1001 = vsel %vm548, %v907, 0
  %v1004 = vsel %vm548, %v908, 0
  %1006 = vmatprep.subr.bf16.mxu0 0
  %1007 = vmatpush1.bf16.msra.mxu0 %v179
  %1008 = vmatprep.subr.bf16.mxu0 0
  %1009 = vmatpush1.bf16.msra.mxu0 %v180
  %1010 = vmatprep.subr.bf16.mxu0 0
  %1011 = vmatpush1.bf16.msra.mxu0 %v181
  %1012 = vmatprep.subr.bf16.mxu0 0
  %1013 = vmatpush1.bf16.msra.mxu0 %v182
  %1014 = vmatprep.subr.bf16.mxu0 0
  %1015 = vmatpush1.bf16.msra.mxu0 0
  %1016 = vmatprep.subr.bf16.mxu0 0
  %1017 = vmatpush1.bf16.msra.mxu0 0
  %1018 = vmatprep.subr.bf16.mxu0 0
  %1019 = vmatpush1.bf16.msra.mxu0 0
  %1020 = vmatprep.subr.bf16.mxu0 0
  %1021 = vmatpush1.bf16.msra.mxu0 0
  %1022 = vmatprep.subr.bf16.mxu0 0
  %1023 = vmatpush1.bf16.msra.mxu0 0
  %1024 = vmatprep.subr.bf16.mxu0 0
  %1025 = vmatpush1.bf16.msra.mxu0 0
  %1026 = vmatprep.subr.bf16.mxu0 0
  %1027 = vmatpush1.bf16.msra.mxu0 0
  %1028 = vmatprep.subr.bf16.mxu0 0
  %1029 = vmatpush1.bf16.msra.mxu0 0
  %1030 = vmatprep.subr.bf16.mxu0 0
  %1031 = vmatpush1.bf16.msra.mxu0 0
  %1032 = vmatprep.subr.bf16.mxu0 0
  %1033 = vmatpush1.bf16.msra.mxu0 0
  %1034 = vmatprep.subr.bf16.mxu0 0
  %1035 = vmatpush1.bf16.msra.mxu0 0
  %1036 = vmatprep.subr.bf16.mxu0 0
  %1037 = vmatpush1.bf16.msra.mxu0 0
  %1038 = vmatprep.mubr.bf16.mxu0 0
  %1039 = vmatmul.mubr.bf16.gmra.mrb[0].mxu0 %v995
  %v1040 = vpop.f32.mrb[0].mxu0
  %v1041 = vadd.f32 0.0, %v1040
  %v1042 = vpop.f32.mrb[0].mxu0
  %v1043 = vpop.f32.mrb[0].mxu0
  %v1044 = vadd.f32 0.0, %v1043
  %v1045 = vpop.f32.mrb[0].mxu0
  %1046 = vmatprep.mubr.bf16.mxu0 0
  %1047 = vmatmul.mubr.bf16.gmra.mrb[0].mxu0 %v998
  %v1048 = vpop.f32.mrb[0].mxu0
  %v1049 = vadd.f32 0.0, %v1048
  %v1050 = vpop.f32.mrb[0].mxu0
  %v1051 = vpop.f32.mrb[0].mxu0
  %v1052 = vadd.f32 0.0, %v1051
  %v1053 = vpop.f32.mrb[0].mxu0
  %1054 = vmatprep.mubr.bf16.mxu0 0
  %1055 = vmatmul.mubr.bf16.gmra.mrb[0].mxu0 %v1001
  %v1056 = vpop.f32.mrb[0].mxu0
  %v1057 = vadd.f32 0.0, %v1056
  %v1058 = vpop.f32.mrb[0].mxu0
  %v1059 = vpop.f32.mrb[0].mxu0
  %v1060 = vadd.f32 0.0, %v1059
  %v1061 = vpop.f32.mrb[0].mxu0
  %1062 = vmatprep.mubr.bf16.mxu0 0
  %1063 = vmatmul.mubr.bf16.gmra.mrb[0].mxu0 %v1004
  %v1064 = vpop.f32.mrb[0].mxu0
  %v1065 = vadd.f32 0.0, %v1064
  %v1066 = vpop.f32.mrb[0].mxu0
  %v1067 = vpop.f32.mrb[0].mxu0
  %v1068 = vadd.f32 0.0, %v1067
  %v1069 = vpop.f32.mrb[0].mxu0
  %1070 = vdwg.mxu0
  %v1072 = vsel %vm548, %v909, 0
  %v1075 = vsel %vm548, %v910, 0
  %v1078 = vsel %vm548, %v911, 0
  %v1081 = vsel %vm548, %v912, 0
  %1083 = vmatprep.subr.bf16.mxu0 0
  %1084 = vmatpush1.bf16.msra.mxu0 %v183
  %1085 = vmatprep.subr.bf16.mxu0 0
  %1086 = vmatpush1.bf16.msra.mxu0 %v184
  %1087 = vmatprep.subr.bf16.mxu0 0
  %1088 = vmatpush1.bf16.msra.mxu0 %v185
  %1089 = vmatprep.subr.bf16.mxu0 0
  %1090 = vmatpush1.bf16.msra.mxu0 %v186
  %1091 = vmatprep.subr.bf16.mxu0 0
  %1092 = vmatpush1.bf16.msra.mxu0 0
  %1093 = vmatprep.subr.bf16.mxu0 0
  %1094 = vmatpush1.bf16.msra.mxu0 0
  %1095 = vmatprep.subr.bf16.mxu0 0
  %1096 = vmatpush1.bf16.msra.mxu0 0
  %1097 = vmatprep.subr.bf16.mxu0 0
  %1098 = vmatpush1.bf16.msra.mxu0 0
  %1099 = vmatprep.subr.bf16.mxu0 0
  %1100 = vmatpush1.bf16.msra.mxu0 0
  %1101 = vmatprep.subr.bf16.mxu0 0
  %1102 = vmatpush1.bf16.msra.mxu0 0
  %1103 = vmatprep.subr.bf16.mxu0 0
  %1104 = vmatpush1.bf16.msra.mxu0 0
  %1105 = vmatprep.subr.bf16.mxu0 0
  %1106 = vmatpush1.bf16.msra.mxu0 0
  %1107 = vmatprep.subr.bf16.mxu0 0
  %1108 = vmatpush1.bf16.msra.mxu0 0
  %1109 = vmatprep.subr.bf16.mxu0 0
  %1110 = vmatpush1.bf16.msra.mxu0 0
  %1111 = vmatprep.subr.bf16.mxu0 0
  %1112 = vmatpush1.bf16.msra.mxu0 0
  %1113 = vmatprep.subr.bf16.mxu0 0
  %1114 = vmatpush1.bf16.msra.mxu0 0
  %1115 = vmatprep.mubr.bf16.mxu0 0
  %1116 = vmatmul.mubr.bf16.gmra.mrb[0].mxu0 %v1072
  %v1117 = vpop.f32.mrb[0].mxu0
  %v1118 = vadd.f32 0.0, %v1117
  %v1119 = vpop.f32.mrb[0].mxu0
  %v1120 = vpop.f32.mrb[0].mxu0
  %v1121 = vadd.f32 0.0, %v1120
  %v1122 = vpop.f32.mrb[0].mxu0
  %1123 = vmatprep.mubr.bf16.mxu0 0
  %1124 = vmatmul.mubr.bf16.gmra.mrb[0].mxu0 %v1075
  %v1125 = vpop.f32.mrb[0].mxu0
  %v1126 = vadd.f32 0.0, %v1125
  %v1127 = vpop.f32.mrb[0].mxu0
  %v1128 = vpop.f32.mrb[0].mxu0
  %v1129 = vadd.f32 0.0, %v1128
  %v1130 = vpop.f32.mrb[0].mxu0
  %1131 = vmatprep.mubr.bf16.mxu0 0
  %1132 = vmatmul.mubr.bf16.gmra.mrb[0].mxu0 %v1078
  %v1133 = vpop.f32.mrb[0].mxu0
  %v1134 = vadd.f32 0.0, %v1133
  %v1135 = vpop.f32.mrb[0].mxu0
  %v1136 = vpop.f32.mrb[0].mxu0
  %v1137 = vadd.f32 0.0, %v1136
  %v1138 = vpop.f32.mrb[0].mxu0
  %1139 = vmatprep.mubr.bf16.mxu0 0
  %1140 = vmatmul.mubr.bf16.gmra.mrb[0].mxu0 %v1081
  %v1141 = vpop.f32.mrb[0].mxu0
  %v1142 = vadd.f32 0.0, %v1141
  %v1143 = vpop.f32.mrb[0].mxu0
  %v1144 = vpop.f32.mrb[0].mxu0
  %v1145 = vadd.f32 0.0, %v1144
  %v1146 = vpop.f32.mrb[0].mxu0
  %1147 = vdwg.mxu0
  %v1149 = vsel %vm548, %v913, 0
  %v1152 = vsel %vm548, %v914, 0
  %v1155 = vsel %vm548, %v915, 0
  %v1158 = vsel %vm548, %v916, 0
  %1160 = vmatprep.subr.bf16.mxu0 0
  %1161 = vmatpush1.bf16.msra.mxu0 %v187
  %1162 = vmatprep.subr.bf16.mxu0 0
  %1163 = vmatpush1.bf16.msra.mxu0 %v188
  %1164 = vmatprep.subr.bf16.mxu0 0
  %1165 = vmatpush1.bf16.msra.mxu0 %v189
  %1166 = vmatprep.subr.bf16.mxu0 0
  %1167 = vmatpush1.bf16.msra.mxu0 %v190
  %1168 = vmatprep.subr.bf16.mxu0 0
  %1169 = vmatpush1.bf16.msra.mxu0 0
  %1170 = vmatprep.subr.bf16.mxu0 0
  %1171 = vmatpush1.bf16.msra.mxu0 0
  %1172 = vmatprep.subr.bf16.mxu0 0
  %1173 = vmatpush1.bf16.msra.mxu0 0
  %1174 = vmatprep.subr.bf16.mxu0 0
  %1175 = vmatpush1.bf16.msra.mxu0 0
  %1176 = vmatprep.subr.bf16.mxu0 0
  %1177 = vmatpush1.bf16.msra.mxu0 0
  %1178 = vmatprep.subr.bf16.mxu0 0
  %1179 = vmatpush1.bf16.msra.mxu0 0
  %1180 = vmatprep.subr.bf16.mxu0 0
  %1181 = vmatpush1.bf16.msra.mxu0 0
  %1182 = vmatprep.subr.bf16.mxu0 0
  %1183 = vmatpush1.bf16.msra.mxu0 0
  %1184 = vmatprep.subr.bf16.mxu0 0
  %1185 = vmatpush1.bf16.msra.mxu0 0
  %1186 = vmatprep.subr.bf16.mxu0 0
  %1187 = vmatpush1.bf16.msra.mxu0 0
  %1188 = vmatprep.subr.bf16.mxu0 0
  %1189 = vmatpush1.bf16.msra.mxu0 0
  %1190 = vmatprep.subr.bf16.mxu0 0
  %1191 = vmatpush1.bf16.msra.mxu0 0
  %1192 = vmatprep.mubr.bf16.mxu0 0
  %1193 = vmatmul.mubr.bf16.gmra.mrb[0].mxu0 %v1149
  %v1194 = vpop.f32.mrb[0].mxu0
  %v1195 = vadd.f32 0.0, %v1194
  %v1196 = vpop.f32.mrb[0].mxu0
  %v1197 = vpop.f32.mrb[0].mxu0
  %v1198 = vadd.f32 0.0, %v1197
  %v1199 = vpop.f32.mrb[0].mxu0
  %1200 = vmatprep.mubr.bf16.mxu0 0
  %1201 = vmatmul.mubr.bf16.gmra.mrb[0].mxu0 %v1152
  %v1202 = vpop.f32.mrb[0].mxu0
  %v1203 = vadd.f32 0.0, %v1202
  %v1204 = vpop.f32.mrb[0].mxu0
  %v1205 = vpop.f32.mrb[0].mxu0
  %v1206 = vadd.f32 0.0, %v1205
  %v1207 = vpop.f32.mrb[0].mxu0
  %1208 = vmatprep.mubr.bf16.mxu0 0
  %1209 = vmatmul.mubr.bf16.gmra.mrb[0].mxu0 %v1155
  %v1210 = vpop.f32.mrb[0].mxu0
  %v1211 = vadd.f32 0.0, %v1210
  %v1212 = vpop.f32.mrb[0].mxu0
  %v1213 = vpop.f32.mrb[0].mxu0
  %v1214 = vadd.f32 0.0, %v1213
  %v1215 = vpop.f32.mrb[0].mxu0
  %1216 = vmatprep.mubr.bf16.mxu0 0
  %1217 = vmatmul.mubr.bf16.gmra.mrb[0].mxu0 %v1158
  %v1218 = vpop.f32.mrb[0].mxu0
  %v1219 = vadd.f32 0.0, %v1218
  %v1220 = vpop.f32.mrb[0].mxu0
  %v1221 = vpop.f32.mrb[0].mxu0
  %v1222 = vadd.f32 0.0, %v1221
  %v1223 = vpop.f32.mrb[0].mxu0
  %1224 = vdwg.mxu0
  %1225 = vst.msk [vmem:[%s3] sm:$0xff] %vm191, %v964
  %1226 = vst.msk [vmem:[%s3 + $0x8] sm:$0xff] %vm191, %v967
  %1227 = vst.msk [vmem:[%s3 + $0x10] sm:$0xff] %vm191, %v972
  %1228 = vst.msk [vmem:[%s3 + $0x18] sm:$0xff] %vm191, %v975
  %1229 = vst.msk [vmem:[%s3 + $0x20] sm:$0xff] %vm191, %v980
  %1230 = vst.msk [vmem:[%s3 + $0x28] sm:$0xff] %vm191, %v983
  %1231 = vst.msk [vmem:[%s3 + $0x30] sm:$0xff] %vm191, %v988
  %1232 = vst.msk [vmem:[%s3 + $0x38] sm:$0xff] %vm191, %v991
  %1233 = vst.msk [vmem:[%s3 + $0x40] sm:$0xff] %vm191, %v1041
  %1234 = vst.msk [vmem:[%s3 + $0x48] sm:$0xff] %vm191, %v1044
  %1235 = vst.msk [vmem:[%s3 + $0x50] sm:$0xff] %vm191, %v1049
  %1236 = vst.msk [vmem:[%s3 + $0x58] sm:$0xff] %vm191, %v1052
  %1237 = vst.msk [vmem:[%s3 + $0x60] sm:$0xff] %vm191, %v1057
  %1238 = vst.msk [vmem:[%s3 + $0x68] sm:$0xff] %vm191, %v1060
  %1239 = vst.msk [vmem:[%s3 + $0x70] sm:$0xff] %vm191, %v1065
  %1240 = vst.msk [vmem:[%s3 + $0x78] sm:$0xff] %vm191, %v1068
  %1241 = vst.msk [vmem:[%s3 + $0x80] sm:$0xff] %vm191, %v1118
  %1242 = vst.msk [vmem:[%s3 + $0x88] sm:$0xff] %vm191, %v1121
  %1243 = vst.msk [vmem:[%s3 + $0x90] sm:$0xff] %vm191, %v1126
  %1244 = vst.msk [vmem:[%s3 + $0x98] sm:$0xff] %vm191, %v1129
  %1245 = vst.msk [vmem:[%s3 + $0xa0] sm:$0xff] %vm191, %v1134
  %1246 = vst.msk [vmem:[%s3 + $0xa8] sm:$0xff] %vm191, %v1137
  %1247 = vst.msk [vmem:[%s3 + $0xb0] sm:$0xff] %vm191, %v1142
  %1248 = vst.msk [vmem:[%s3 + $0xb8] sm:$0xff] %vm191, %v1145
  %1249 = vst.msk [vmem:[%s3 + $0xc0] sm:$0xff] %vm191, %v1195
  %1250 = vst.msk [vmem:[%s3 + $0xc8] sm:$0xff] %vm191, %v1198
  %1251 = vst.msk [vmem:[%s3 + $0xd0] sm:$0xff] %vm191, %v1203
  %1252 = vst.msk [vmem:[%s3 + $0xd8] sm:$0xff] %vm191, %v1206
  %1253 = vst.msk [vmem:[%s3 + $0xe0] sm:$0xff] %vm191, %v1211
  %1254 = vst.msk [vmem:[%s3 + $0xe8] sm:$0xff] %vm191, %v1214
  %1255 = vst.msk [vmem:[%s3 + $0xf0] sm:$0xff] %vm191, %v1219
  %1256 = vst.msk [vmem:[%s3 + $0xf8] sm:$0xff] %vm191, %v1222
  // Predicated region
  $region14: #{swin_block_forward.5} parent=0 // pred_check
    _
  $region15: #{swin_block_forward.5} parent=0 // pred_check_branch
    %1258 = sbr.rel (0) target = $region17
  $region16: #{swin_block_forward.5} parent=0 // pred_region
    _
  $region17: #{swin_block_forward.5} parent=0 // pred_fallthru
    _
  // Predicated region
  $region18: #{swin_block_forward.5} parent=0 // pred_check
    _
  $region19: #{swin_block_forward.5} parent=0 // pred_check_branch
    %1260 = sbr.rel (0) target = $region21
  $region20: #{swin_block_forward.5} parent=0 // pred_region
    _
  $region21: #{swin_block_forward.5} parent=0 // pred_fallthru
    _

// kernel: swin_block_forward.6
$region0: #{swin_block_forward.6}
  #allocation0 [shape = 'u32[]', space=smem, size = 0x4, offset = 0x4, fixed_abs, tag = 'smem constant byte address 0x4 - core index']
  #allocation1 [shape = 'u32[144,128]{1,0:T(1,128)}', space=vmem, size = 0x12000, scoped, tag = 'internal scratch']
  %s0 = inlined_call_operand.vmem [shape: f32[128,128], index: 0, kind: input, shape index: {}]
  %s1 = inlined_call_operand.vmem [shape: f32[128,128], index: 1, kind: input, shape index: {}]
  %s2 = inlined_call_operand.vmem [shape: bf16[128,128], index: 2, kind: input, shape index: {}]
  %s3 = inlined_call_operand.vmem [shape: f32[1,128], index: 3, kind: input, shape index: {}]
  %s4 = inlined_call_operand.vmem [shape: f32[128,128], index: 4, kind: output, shape index: {}]
  %s5 = sld [smem:[#allocation0]]
  $region26: #{swin_block_forward.6} parent=0
    _
  %s7 = ssub.s32 1, %s5
  %s8 = scalar_select 0, %s7, %s5
  // Predicated region
  $region2: #{swin_block_forward.6} parent=0 // pred_check
    _
  $region3: #{swin_block_forward.6} parent=0 // pred_check_branch
    %10 = sbr.rel (0) target = $region5
  $region4: #{swin_block_forward.6} parent=0 // pred_region
    _
  $region5: #{swin_block_forward.6} parent=0 // pred_fallthru
    _
  // Predicated region
  $region6: #{swin_block_forward.6} parent=0 // pred_check
    _
  $region7: #{swin_block_forward.6} parent=0 // pred_check_branch
    %12 = sbr.rel (0) target = $region9
  $region8: #{swin_block_forward.6} parent=0 // pred_region
    _
  $region9: #{swin_block_forward.6} parent=0 // pred_fallthru
    _
  // Predicated region
  $region10: #{swin_block_forward.6} parent=0 // pred_check
    _
  $region11: #{swin_block_forward.6} parent=0 // pred_check_branch
    %14 = sbr.rel (0) target = $region13
  $region12: #{swin_block_forward.6} parent=0 // pred_region
    _
  $region13: #{swin_block_forward.6} parent=0 // pred_fallthru
    _
  // Predicated region
  $region14: #{swin_block_forward.6} parent=0 // pred_check
    _
  $region15: #{swin_block_forward.6} parent=0 // pred_check_branch
    %16 = sbr.rel (0) target = $region17
  $region16: #{swin_block_forward.6} parent=0 // pred_region
    _
  $region17: #{swin_block_forward.6} parent=0 // pred_fallthru
    _
  %v18 = vld [vmem:[%s0] sm:$0xff]
  %v19 = vld [vmem:[%s0 + $0x8] sm:$0xff]
  %v20 = vld [vmem:[%s0 + $0x10] sm:$0xff]
  %v21 = vld [vmem:[%s0 + $0x18] sm:$0xff]
  %v22 = vld [vmem:[%s0 + $0x20] sm:$0xff]
  %v23 = vld [vmem:[%s0 + $0x28] sm:$0xff]
  %v24 = vld [vmem:[%s0 + $0x30] sm:$0xff]
  %v25 = vld [vmem:[%s0 + $0x38] sm:$0xff]
  %v26 = vld [vmem:[%s0 + $0x40] sm:$0xff]
  %v27 = vld [vmem:[%s0 + $0x48] sm:$0xff]
  %v28 = vld [vmem:[%s0 + $0x50] sm:$0xff]
  %v29 = vld [vmem:[%s0 + $0x58] sm:$0xff]
  %v30 = vld [vmem:[%s0 + $0x60] sm:$0xff]
  %v31 = vld [vmem:[%s0 + $0x68] sm:$0xff]
  %v32 = vld [vmem:[%s0 + $0x70] sm:$0xff]
  %v33 = vld [vmem:[%s0 + $0x78] sm:$0xff]
  %v34 = vpack.c.bf16 %v19, %v18
  %v35 = vpack.c.bf16 %v21, %v20
  %v36 = vpack.c.bf16 %v23, %v22
  %v37 = vpack.c.bf16 %v25, %v24
  %v38 = vpack.c.bf16 %v27, %v26
  %v39 = vpack.c.bf16 %v29, %v28
  %v40 = vpack.c.bf16 %v31, %v30
  %v41 = vpack.c.bf16 %v33, %v32
  %v42 = vld [vmem:[%s2] sm:$0xf]
  %v43 = vld [vmem:[%s2 + $0x4] sm:$0xf]
  %v44 = vld [vmem:[%s2 + $0x8] sm:$0xf]
  %v45 = vld [vmem:[%s2 + $0xc] sm:$0xf]
  %v46 = vld [vmem:[%s2 + $0x10] sm:$0xf]
  %v47 = vld [vmem:[%s2 + $0x14] sm:$0xf]
  %v48 = vld [vmem:[%s2 + $0x18] sm:$0xf]
  %v49 = vld [vmem:[%s2 + $0x1c] sm:$0xf]
  %v50 = vld [vmem:[%s2 + $0x20] sm:$0xf]
  %v51 = vld [vmem:[%s2 + $0x24] sm:$0xf]
  %v52 = vld [vmem:[%s2 + $0x28] sm:$0xf]
  %v53 = vld [vmem:[%s2 + $0x2c] sm:$0xf]
  %v54 = vld [vmem:[%s2 + $0x30] sm:$0xf]
  %v55 = vld [vmem:[%s2 + $0x34] sm:$0xf]
  %v56 = vld [vmem:[%s2 + $0x38] sm:$0xf]
  %v57 = vld [vmem:[%s2 + $0x3c] sm:$0xf]
  %v58 = vld [vmem:[%s3] sm:$0x1]
  %v60 = vlaneseq
  %v61 = vshrl.u32 %v60, 7
  %v62 = vsub.s32 0, %v61
  %v63 = vrot.slane %v58, %v62
  %v81 = vunpack.c.l.b16 %v42
  %v82 = vunpack.c.l.b16 %v43
  %v83 = vunpack.c.l.b16 %v44
  %v84 = vunpack.c.l.b16 %v45
  %v85 = vunpack.c.l.b16 %v46
  %v86 = vunpack.c.l.b16 %v47
  %v87 = vunpack.c.l.b16 %v48
  %v88 = vunpack.c.l.b16 %v49
  %v89 = vunpack.c.l.b16 %v50
  %v90 = vunpack.c.l.b16 %v51
  %v91 = vunpack.c.l.b16 %v52
  %v92 = vunpack.c.l.b16 %v53
  %v93 = vunpack.c.l.b16 %v54
  %v94 = vunpack.c.l.b16 %v55
  %v95 = vunpack.c.l.b16 %v56
  %v96 = vunpack.c.l.b16 %v57
  %v97 = vpack.c.b16 %v82, %v81
  %v98 = vpack.c.b16 %v84, %v83
  %v99 = vpack.c.b16 %v86, %v85
  %v100 = vpack.c.b16 %v88, %v87
  %v101 = vpack.c.b16 %v90, %v89
  %v102 = vpack.c.b16 %v92, %v91
  %v103 = vpack.c.b16 %v94, %v93
  %v104 = vpack.c.b16 %v96, %v95
  %113 = vmatprep.subr.bf16.mxu0 0
  %114 = vmatpush1.bf16.msra.mxu0 %v97
  %115 = vmatprep.subr.bf16.mxu0 0
  %116 = vmatpush1.bf16.msra.mxu0 %v98
  %117 = vmatprep.subr.bf16.mxu0 0
  %118 = vmatpush1.bf16.msra.mxu0 %v99
  %119 = vmatprep.subr.bf16.mxu0 0
  %120 = vmatpush1.bf16.msra.mxu0 %v100
  %121 = vmatprep.subr.bf16.mxu0 0
  %122 = vmatpush1.bf16.msra.mxu0 %v101
  %123 = vmatprep.subr.bf16.mxu0 0
  %124 = vmatpush1.bf16.msra.mxu0 %v102
  %125 = vmatprep.subr.bf16.mxu0 0
  %126 = vmatpush1.bf16.msra.mxu0 %v103
  %127 = vmatprep.subr.bf16.mxu0 0
  %128 = vmatpush1.bf16.msra.mxu0 %v104
  %129 = vmatprep.subr.bf16.mxu0 0
  %130 = vmatpush1.bf16.msra.mxu0 0
  %131 = vmatprep.subr.bf16.mxu0 0
  %132 = vmatpush1.bf16.msra.mxu0 0
  %133 = vmatprep.subr.bf16.mxu0 0
  %134 = vmatpush1.bf16.msra.mxu0 0
  %135 = vmatprep.subr.bf16.mxu0 0
  %136 = vmatpush1.bf16.msra.mxu0 0
  %137 = vmatprep.subr.bf16.mxu0 0
  %138 = vmatpush1.bf16.msra.mxu0 0
  %139 = vmatprep.subr.bf16.mxu0 0
  %140 = vmatpush1.bf16.msra.mxu0 0
  %141 = vmatprep.subr.bf16.mxu0 0
  %142 = vmatpush1.bf16.msra.mxu0 0
  %143 = vmatprep.subr.bf16.mxu0 0
  %144 = vmatpush1.bf16.msra.mxu0 0
  %145 = vmatprep.mubr.bf16.mxu0 0
  %146 = vmatmul.mubr.bf16.gmra.mrb[0].mxu0 %v34
  %v147 = vpop.f32.mrb[0].mxu0
  %v148 = vadd.f32 %v63, %v147
  %v149 = vpop.f32.mrb[0].mxu0
  %v150 = vpop.f32.mrb[0].mxu0
  %v151 = vadd.f32 %v63, %v150
  %v152 = vpop.f32.mrb[0].mxu0
  %153 = vmatprep.mubr.bf16.mxu0 0
  %154 = vmatmul.mubr.bf16.gmra.mrb[0].mxu0 %v35
  %v155 = vpop.f32.mrb[0].mxu0
  %v156 = vadd.f32 %v63, %v155
  %v157 = vpop.f32.mrb[0].mxu0
  %v158 = vpop.f32.mrb[0].mxu0
  %v159 = vadd.f32 %v63, %v158
  %v160 = vpop.f32.mrb[0].mxu0
  %161 = vmatprep.mubr.bf16.mxu0 0
  %162 = vmatmul.mubr.bf16.gmra.mrb[0].mxu0 %v36
  %v163 = vpop.f32.mrb[0].mxu0
  %v164 = vadd.f32 %v63, %v163
  %v165 = vpop.f32.mrb[0].mxu0
  %v166 = vpop.f32.mrb[0].mxu0
  %v167 = vadd.f32 %v63, %v166
  %v168 = vpop.f32.mrb[0].mxu0
  %169 = vmatprep.mubr.bf16.mxu0 0
  %170 = vmatmul.mubr.bf16.gmra.mrb[0].mxu0 %v37
  %v171 = vpop.f32.mrb[0].mxu0
  %v172 = vadd.f32 %v63, %v171
  %v173 = vpop.f32.mrb[0].mxu0
  %v174 = vpop.f32.mrb[0].mxu0
  %v175 = vadd.f32 %v63, %v174
  %v176 = vpop.f32.mrb[0].mxu0
  %177 = vmatprep.mubr.bf16.mxu0 0
  %178 = vmatmul.mubr.bf16.gmra.mrb[0].mxu0 %v38
  %v179 = vpop.f32.mrb[0].mxu0
  %v180 = vadd.f32 %v63, %v179
  %v181 = vpop.f32.mrb[0].mxu0
  %v182 = vpop.f32.mrb[0].mxu0
  %v183 = vadd.f32 %v63, %v182
  %v184 = vpop.f32.mrb[0].mxu0
  %185 = vmatprep.mubr.bf16.mxu0 0
  %186 = vmatmul.mubr.bf16.gmra.mrb[0].mxu0 %v39
  %v187 = vpop.f32.mrb[0].mxu0
  %v188 = vadd.f32 %v63, %v187
  %v189 = vpop.f32.mrb[0].mxu0
  %v190 = vpop.f32.mrb[0].mxu0
  %v191 = vadd.f32 %v63, %v190
  %v192 = vpop.f32.mrb[0].mxu0
  %193 = vmatprep.mubr.bf16.mxu0 0
  %194 = vmatmul.mubr.bf16.gmra.mrb[0].mxu0 %v40
  %v195 = vpop.f32.mrb[0].mxu0
  %v196 = vadd.f32 %v63, %v195
  %v197 = vpop.f32.mrb[0].mxu0
  %v198 = vpop.f32.mrb[0].mxu0
  %v199 = vadd.f32 %v63, %v198
  %v200 = vpop.f32.mrb[0].mxu0
  %201 = vmatprep.mubr.bf16.mxu0 0
  %202 = vmatmul.mubr.bf16.gmra.mrb[0].mxu0 %v41
  %v203 = vpop.f32.mrb[0].mxu0
  %v204 = vadd.f32 %v63, %v203
  %v205 = vpop.f32.mrb[0].mxu0
  %v206 = vpop.f32.mrb[0].mxu0
  %v207 = vadd.f32 %v63, %v206
  %v208 = vpop.f32.mrb[0].mxu0
  %209 = vdwg.mxu0
  %v210 = vld [vmem:[%s1] sm:$0xff]
  %v211 = vld [vmem:[%s1 + $0x8] sm:$0xff]
  %v212 = vld [vmem:[%s1 + $0x10] sm:$0xff]
  %v213 = vld [vmem:[%s1 + $0x18] sm:$0xff]
  %v214 = vld [vmem:[%s1 + $0x20] sm:$0xff]
  %v215 = vld [vmem:[%s1 + $0x28] sm:$0xff]
  %v216 = vld [vmem:[%s1 + $0x30] sm:$0xff]
  %v217 = vld [vmem:[%s1 + $0x38] sm:$0xff]
  %v218 = vld [vmem:[%s1 + $0x40] sm:$0xff]
  %v219 = vld [vmem:[%s1 + $0x48] sm:$0xff]
  %v220 = vld [vmem:[%s1 + $0x50] sm:$0xff]
  %v221 = vld [vmem:[%s1 + $0x58] sm:$0xff]
  %v222 = vld [vmem:[%s1 + $0x60] sm:$0xff]
  %v223 = vld [vmem:[%s1 + $0x68] sm:$0xff]
  %v224 = vld [vmem:[%s1 + $0x70] sm:$0xff]
  %v225 = vld [vmem:[%s1 + $0x78] sm:$0xff]
  %v226 = vadd.f32 %v148, %v210
  %v227 = vadd.f32 %v151, %v211
  %v228 = vadd.f32 %v156, %v212
  %v229 = vadd.f32 %v159, %v213
  %v230 = vadd.f32 %v164, %v214
  %v231 = vadd.f32 %v167, %v215
  %v232 = vadd.f32 %v172, %v216
  %v233 = vadd.f32 %v175, %v217
  %v234 = vadd.f32 %v180, %v218
  %v235 = vadd.f32 %v183, %v219
  %v236 = vadd.f32 %v188, %v220
  %v237 = vadd.f32 %v191, %v221
  %v238 = vadd.f32 %v196, %v222
  %v239 = vadd.f32 %v199, %v223
  %v240 = vadd.f32 %v204, %v224
  %v241 = vadd.f32 %v207, %v225
  %242 = vst [vmem:[%s4] sm:$0xff] %v226
  %243 = vst [vmem:[%s4 + $0x8] sm:$0xff] %v227
  %244 = vst [vmem:[%s4 + $0x10] sm:$0xff] %v228
  %245 = vst [vmem:[%s4 + $0x18] sm:$0xff] %v229
  %246 = vst [vmem:[%s4 + $0x20] sm:$0xff] %v230
  %247 = vst [vmem:[%s4 + $0x28] sm:$0xff] %v231
  %248 = vst [vmem:[%s4 + $0x30] sm:$0xff] %v232
  %249 = vst [vmem:[%s4 + $0x38] sm:$0xff] %v233
  %250 = vst [vmem:[%s4 + $0x40] sm:$0xff] %v234
  %251 = vst [vmem:[%s4 + $0x48] sm:$0xff] %v235
  %252 = vst [vmem:[%s4 + $0x50] sm:$0xff] %v236
  %253 = vst [vmem:[%s4 + $0x58] sm:$0xff] %v237
  %254 = vst [vmem:[%s4 + $0x60] sm:$0xff] %v238
  %255 = vst [vmem:[%s4 + $0x68] sm:$0xff] %v239
  %256 = vst [vmem:[%s4 + $0x70] sm:$0xff] %v240
  %257 = vst [vmem:[%s4 + $0x78] sm:$0xff] %v241
  // Predicated region
  $region18: #{swin_block_forward.6} parent=0 // pred_check
    _
  $region19: #{swin_block_forward.6} parent=0 // pred_check_branch
    %259 = sbr.rel (0) target = $region21
  $region20: #{swin_block_forward.6} parent=0 // pred_region
    _
  $region21: #{swin_block_forward.6} parent=0 // pred_fallthru
    _
  // Predicated region
  $region22: #{swin_block_forward.6} parent=0 // pred_check
    _
  $region23: #{swin_block_forward.6} parent=0 // pred_check_branch
    %261 = sbr.rel (0) target = $region25
  $region24: #{swin_block_forward.6} parent=0 // pred_region
    _
  $region25: #{swin_block_forward.6} parent=0 // pred_fallthru
    _

// kernel: swin_block_forward.7
$region0: #{swin_block_forward.7}
  #allocation0 [shape = 'u32[]', space=smem, size = 0x4, offset = 0x4, fixed_abs, tag = 'smem constant byte address 0x4 - core index']
  #allocation1 [shape = 'u32[144,128]{1,0:T(1,128)}', space=vmem, size = 0x12000, scoped, tag = 'internal scratch']
  %s0 = inlined_call_operand.vmem [shape: f32[128,128], index: 0, kind: input, shape index: {}]
  %s1 = inlined_call_operand.vmem [shape: f32[2,128], index: 1, kind: input, shape index: {}]
  %s2 = inlined_call_operand.vmem [shape: bf16[128,128], index: 2, kind: input, shape index: {}]
  %s3 = inlined_call_operand.vmem [shape: f32[1,128], index: 3, kind: input, shape index: {}]
  %s4 = inlined_call_operand.vmem [shape: bf16[128,128], index: 4, kind: input, shape index: {}]
  %s5 = inlined_call_operand.vmem [shape: f32[1,128], index: 5, kind: input, shape index: {}]
  %s6 = inlined_call_operand.vmem [shape: f32[128,128], index: 6, kind: output, shape index: {}]
  %s7 = sld [smem:[#allocation0]]
  $region34: #{swin_block_forward.7} parent=0
    _
  %s9 = ssub.s32 1, %s7
  %s10 = scalar_select 0, %s9, %s7
  // Predicated region
  $region2: #{swin_block_forward.7} parent=0 // pred_check
    _
  $region3: #{swin_block_forward.7} parent=0 // pred_check_branch
    %12 = sbr.rel (0) target = $region5
  $region4: #{swin_block_forward.7} parent=0 // pred_region
    _
  $region5: #{swin_block_forward.7} parent=0 // pred_fallthru
    _
  // Predicated region
  $region6: #{swin_block_forward.7} parent=0 // pred_check
    _
  $region7: #{swin_block_forward.7} parent=0 // pred_check_branch
    %14 = sbr.rel (0) target = $region9
  $region8: #{swin_block_forward.7} parent=0 // pred_region
    _
  $region9: #{swin_block_forward.7} parent=0 // pred_fallthru
    _
  // Predicated region
  $region10: #{swin_block_forward.7} parent=0 // pred_check
    _
  $region11: #{swin_block_forward.7} parent=0 // pred_check_branch
    %16 = sbr.rel (0) target = $region13
  $region12: #{swin_block_forward.7} parent=0 // pred_region
    _
  $region13: #{swin_block_forward.7} parent=0 // pred_fallthru
    _
  // Predicated region
  $region14: #{swin_block_forward.7} parent=0 // pred_check
    _
  $region15: #{swin_block_forward.7} parent=0 // pred_check_branch
    %18 = sbr.rel (0) target = $region17
  $region16: #{swin_block_forward.7} parent=0 // pred_region
    _
  $region17: #{swin_block_forward.7} parent=0 // pred_fallthru
    _
  // Predicated region
  $region18: #{swin_block_forward.7} parent=0 // pred_check
    _
  $region19: #{swin_block_forward.7} parent=0 // pred_check_branch
    %20 = sbr.rel (0) target = $region21
  $region20: #{swin_block_forward.7} parent=0 // pred_region
    _
  $region21: #{swin_block_forward.7} parent=0 // pred_fallthru
    _
  // Predicated region
  $region22: #{swin_block_forward.7} parent=0 // pred_check
    _
  $region23: #{swin_block_forward.7} parent=0 // pred_check_branch
    %22 = sbr.rel (0) target = $region25
  $region24: #{swin_block_forward.7} parent=0 // pred_region
    _
  $region25: #{swin_block_forward.7} parent=0 // pred_fallthru
    _
  %v24 = vld [vmem:[%s0] sm:$0xff]
  %v25 = vld [vmem:[%s0 + $0x8] sm:$0xff]
  %v26 = vld [vmem:[%s0 + $0x10] sm:$0xff]
  %v27 = vld [vmem:[%s0 + $0x18] sm:$0xff]
  %v28 = vld [vmem:[%s0 + $0x20] sm:$0xff]
  %v29 = vld [vmem:[%s0 + $0x28] sm:$0xff]
  %v30 = vld [vmem:[%s0 + $0x30] sm:$0xff]
  %v31 = vld [vmem:[%s0 + $0x38] sm:$0xff]
  %v32 = vld [vmem:[%s0 + $0x40] sm:$0xff]
  %v33 = vld [vmem:[%s0 + $0x48] sm:$0xff]
  %v34 = vld [vmem:[%s0 + $0x50] sm:$0xff]
  %v35 = vld [vmem:[%s0 + $0x58] sm:$0xff]
  %v36 = vld [vmem:[%s0 + $0x60] sm:$0xff]
  %v37 = vld [vmem:[%s0 + $0x68] sm:$0xff]
  %v38 = vld [vmem:[%s0 + $0x70] sm:$0xff]
  %v39 = vld [vmem:[%s0 + $0x78] sm:$0xff]
  %40 = vadd.xlane.f32.xlu0 %v24
  %v41 = vpop.xlane.xlu0 %40
  %42 = vadd.xlane.f32.xlu0 %v25
  %v43 = vpop.xlane.xlu0 %42
  %44 = vadd.xlane.f32.xlu0 %v26
  %v45 = vpop.xlane.xlu0 %44
  %46 = vadd.xlane.f32.xlu0 %v27
  %v47 = vpop.xlane.xlu0 %46
  %48 = vadd.xlane.f32.xlu0 %v28
  %v49 = vpop.xlane.xlu0 %48
  %50 = vadd.xlane.f32.xlu0 %v29
  %v51 = vpop.xlane.xlu0 %50
  %52 = vadd.xlane.f32.xlu0 %v30
  %v53 = vpop.xlane.xlu0 %52
  %54 = vadd.xlane.f32.xlu0 %v31
  %v55 = vpop.xlane.xlu0 %54
  %56 = vadd.xlane.f32.xlu0 %v32
  %v57 = vpop.xlane.xlu0 %56
  %58 = vadd.xlane.f32.xlu0 %v33
  %v59 = vpop.xlane.xlu0 %58
  %60 = vadd.xlane.f32.xlu0 %v34
  %v61 = vpop.xlane.xlu0 %60
  %62 = vadd.xlane.f32.xlu0 %v35
  %v63 = vpop.xlane.xlu0 %62
  %64 = vadd.xlane.f32.xlu0 %v36
  %v65 = vpop.xlane.xlu0 %64
  %66 = vadd.xlane.f32.xlu0 %v37
  %v67 = vpop.xlane.xlu0 %66
  %68 = vadd.xlane.f32.xlu0 %v38
  %v69 = vpop.xlane.xlu0 %68
  %70 = vadd.xlane.f32.xlu0 %v39
  %v71 = vpop.xlane.xlu0 %70
  %v72 = vmul.f32 %v41, 0.03125
  %v73 = vmul.f32 %v43, 0.03125
  %v74 = vmul.f32 %v45, 0.03125
  %v75 = vmul.f32 %v47, 0.03125
  %v76 = vmul.f32 %v49, 0.03125
  %v77 = vmul.f32 %v51, 0.03125
  %v78 = vmul.f32 %v53, 0.03125
  %v79 = vmul.f32 %v55, 0.03125
  %v80 = vmul.f32 %v57, 0.03125
  %v81 = vmul.f32 %v59, 0.03125
  %v82 = vmul.f32 %v61, 0.03125
  %v83 = vmul.f32 %v63, 0.03125
  %v84 = vmul.f32 %v65, 0.03125
  %v85 = vmul.f32 %v67, 0.03125
  %v86 = vmul.f32 %v69, 0.03125
  %v87 = vmul.f32 %v71, 0.03125
  %v88 = vmul.f32 %v24, %v24
  %v89 = vmul.f32 %v25, %v25
  %v90 = vmul.f32 %v26, %v26
  %v91 = vmul.f32 %v27, %v27
  %v92 = vmul.f32 %v28, %v28
  %v93 = vmul.f32 %v29, %v29
  %v94 = vmul.f32 %v30, %v30
  %v95 = vmul.f32 %v31, %v31
  %v96 = vmul.f32 %v32, %v32
  %v97 = vmul.f32 %v33, %v33
  %v98 = vmul.f32 %v34, %v34
  %v99 = vmul.f32 %v35, %v35
  %v100 = vmul.f32 %v36, %v36
  %v101 = vmul.f32 %v37, %v37
  %v102 = vmul.f32 %v38, %v38
  %v103 = vmul.f32 %v39, %v39
  %104 = vadd.xlane.f32.xlu0 %v88
  %v105 = vpop.xlane.xlu0 %104
  %106 = vadd.xlane.f32.xlu0 %v89
  %v107 = vpop.xlane.xlu0 %106
  %108 = vadd.xlane.f32.xlu0 %v90
  %v109 = vpop.xlane.xlu0 %108
  %110 = vadd.xlane.f32.xlu0 %v91
  %v111 = vpop.xlane.xlu0 %110
  %112 = vadd.xlane.f32.xlu0 %v92
  %v113 = vpop.xlane.xlu0 %112
  %114 = vadd.xlane.f32.xlu0 %v93
  %v115 = vpop.xlane.xlu0 %114
  %116 = vadd.xlane.f32.xlu0 %v94
  %v117 = vpop.xlane.xlu0 %116
  %118 = vadd.xlane.f32.xlu0 %v95
  %v119 = vpop.xlane.xlu0 %118
  %120 = vadd.xlane.f32.xlu0 %v96
  %v121 = vpop.xlane.xlu0 %120
  %122 = vadd.xlane.f32.xlu0 %v97
  %v123 = vpop.xlane.xlu0 %122
  %124 = vadd.xlane.f32.xlu0 %v98
  %v125 = vpop.xlane.xlu0 %124
  %126 = vadd.xlane.f32.xlu0 %v99
  %v127 = vpop.xlane.xlu0 %126
  %128 = vadd.xlane.f32.xlu0 %v100
  %v129 = vpop.xlane.xlu0 %128
  %130 = vadd.xlane.f32.xlu0 %v101
  %v131 = vpop.xlane.xlu0 %130
  %132 = vadd.xlane.f32.xlu0 %v102
  %v133 = vpop.xlane.xlu0 %132
  %134 = vadd.xlane.f32.xlu0 %v103
  %v135 = vpop.xlane.xlu0 %134
  %v136 = vmul.f32 %v105, 0.03125
  %v137 = vmul.f32 %v107, 0.03125
  %v138 = vmul.f32 %v109, 0.03125
  %v139 = vmul.f32 %v111, 0.03125
  %v140 = vmul.f32 %v113, 0.03125
  %v141 = vmul.f32 %v115, 0.03125
  %v142 = vmul.f32 %v117, 0.03125
  %v143 = vmul.f32 %v119, 0.03125
  %v144 = vmul.f32 %v121, 0.03125
  %v145 = vmul.f32 %v123, 0.03125
  %v146 = vmul.f32 %v125, 0.03125
  %v147 = vmul.f32 %v127, 0.03125
  %v148 = vmul.f32 %v129, 0.03125
  %v149 = vmul.f32 %v131, 0.03125
  %v150 = vmul.f32 %v133, 0.03125
  %v151 = vmul.f32 %v135, 0.03125
  %v152 = vmul.f32 %v72, %v72
  %v153 = vmul.f32 %v73, %v73
  %v154 = vmul.f32 %v74, %v74
  %v155 = vmul.f32 %v75, %v75
  %v156 = vmul.f32 %v76, %v76
  %v157 = vmul.f32 %v77, %v77
  %v158 = vmul.f32 %v78, %v78
  %v159 = vmul.f32 %v79, %v79
  %v160 = vmul.f32 %v80, %v80
  %v161 = vmul.f32 %v81, %v81
  %v162 = vmul.f32 %v82, %v82
  %v163 = vmul.f32 %v83, %v83
  %v164 = vmul.f32 %v84, %v84
  %v165 = vmul.f32 %v85, %v85
  %v166 = vmul.f32 %v86, %v86
  %v167 = vmul.f32 %v87, %v87
  %v168 = vsub.f32 %v136, %v152
  %v169 = vsub.f32 %v137, %v153
  %v170 = vsub.f32 %v138, %v154
  %v171 = vsub.f32 %v139, %v155
  %v172 = vsub.f32 %v140, %v156
  %v173 = vsub.f32 %v141, %v157
  %v174 = vsub.f32 %v142, %v158
  %v175 = vsub.f32 %v143, %v159
  %v176 = vsub.f32 %v144, %v160
  %v177 = vsub.f32 %v145, %v161
  %v178 = vsub.f32 %v146, %v162
  %v179 = vsub.f32 %v147, %v163
  %v180 = vsub.f32 %v148, %v164
  %v181 = vsub.f32 %v149, %v165
  %v182 = vsub.f32 %v150, %v166
  %v183 = vsub.f32 %v151, %v167
  %v184 = vadd.f32 %v168, 1e-05
  %v185 = vadd.f32 %v169, 1e-05
  %v186 = vadd.f32 %v170, 1e-05
  %v187 = vadd.f32 %v171, 1e-05
  %v188 = vadd.f32 %v172, 1e-05
  %v189 = vadd.f32 %v173, 1e-05
  %v190 = vadd.f32 %v174, 1e-05
  %v191 = vadd.f32 %v175, 1e-05
  %v192 = vadd.f32 %v176, 1e-05
  %v193 = vadd.f32 %v177, 1e-05
  %v194 = vadd.f32 %v178, 1e-05
  %v195 = vadd.f32 %v179, 1e-05
  %v196 = vadd.f32 %v180, 1e-05
  %v197 = vadd.f32 %v181, 1e-05
  %v198 = vadd.f32 %v182, 1e-05
  %v199 = vadd.f32 %v183, 1e-05
  %v200 = vrsqrt.pop %v184
  %v201 = vrsqrt.pop %v185
  %v202 = vrsqrt.pop %v186
  %v203 = vrsqrt.pop %v187
  %v204 = vrsqrt.pop %v188
  %v205 = vrsqrt.pop %v189
  %v206 = vrsqrt.pop %v190
  %v207 = vrsqrt.pop %v191
  %v208 = vrsqrt.pop %v192
  %v209 = vrsqrt.pop %v193
  %v210 = vrsqrt.pop %v194
  %v211 = vrsqrt.pop %v195
  %v212 = vrsqrt.pop %v196
  %v213 = vrsqrt.pop %v197
  %v214 = vrsqrt.pop %v198
  %v215 = vrsqrt.pop %v199
  %v216 = vld [vmem:[%s1] sm:$0x3]
  %v217 = vsub.f32 %v24, %v72
  %v218 = vsub.f32 %v25, %v73
  %v219 = vsub.f32 %v26, %v74
  %v220 = vsub.f32 %v27, %v75
  %v221 = vsub.f32 %v28, %v76
  %v222 = vsub.f32 %v29, %v77
  %v223 = vsub.f32 %v30, %v78
  %v224 = vsub.f32 %v31, %v79
  %v225 = vsub.f32 %v32, %v80
  %v226 = vsub.f32 %v33, %v81
  %v227 = vsub.f32 %v34, %v82
  %v228 = vsub.f32 %v35, %v83
  %v229 = vsub.f32 %v36, %v84
  %v230 = vsub.f32 %v37, %v85
  %v231 = vsub.f32 %v38, %v86
  %v232 = vsub.f32 %v39, %v87
  %v233 = vmul.f32 %v217, %v200
  %v234 = vmul.f32 %v218, %v201
  %v235 = vmul.f32 %v219, %v202
  %v236 = vmul.f32 %v220, %v203
  %v237 = vmul.f32 %v221, %v204
  %v238 = vmul.f32 %v222, %v205
  %v239 = vmul.f32 %v223, %v206
  %v240 = vmul.f32 %v224, %v207
  %v241 = vmul.f32 %v225, %v208
  %v242 = vmul.f32 %v226, %v209
  %v243 = vmul.f32 %v227, %v210
  %v244 = vmul.f32 %v228, %v211
  %v245 = vmul.f32 %v229, %v212
  %v246 = vmul.f32 %v230, %v213
  %v247 = vmul.f32 %v231, %v214
  %v248 = vmul.f32 %v232, %v215
  %v249 = vlaneseq
  %v250 = vshrl.u32 %v249, 7
  %v251 = vsub.s32 0, %v250
  %v252 = vrot.slane %v216, %v251
  %v253 = vmul.f32 %v233, %v252
  %v254 = vmul.f32 %v234, %v252
  %v255 = vmul.f32 %v235, %v252
  %v256 = vmul.f32 %v236, %v252
  %v257 = vmul.f32 %v237, %v252
  %v258 = vmul.f32 %v238, %v252
  %v259 = vmul.f32 %v239, %v252
  %v260 = vmul.f32 %v240, %v252
  %v261 = vmul.f32 %v241, %v252
  %v262 = vmul.f32 %v242, %v252
  %v263 = vmul.f32 %v243, %v252
  %v264 = vmul.f32 %v244, %v252
  %v265 = vmul.f32 %v245, %v252
  %v266 = vmul.f32 %v246, %v252
  %v267 = vmul.f32 %v247, %v252
  %v268 = vmul.f32 %v248, %v252
  %v269 = vlaneseq
  %v270 = vshrl.u32 %v269, 7
  %v271 = vsub.s32 1, %v270
  %v272 = vrot.slane %v216, %v271
  %v273 = vadd.f32 %v253, %v272
  %v274 = vadd.f32 %v254, %v272
  %v275 = vadd.f32 %v255, %v272
  %v276 = vadd.f32 %v256, %v272
  %v277 = vadd.f32 %v257, %v272
  %v278 = vadd.f32 %v258, %v272
  %v279 = vadd.f32 %v259, %v272
  %v280 = vadd.f32 %v260, %v272
  %v281 = vadd.f32 %v261, %v272
  %v282 = vadd.f32 %v262, %v272
  %v283 = vadd.f32 %v263, %v272
  %v284 = vadd.f32 %v264, %v272
  %v285 = vadd.f32 %v265, %v272
  %v286 = vadd.f32 %v266, %v272
  %v287 = vadd.f32 %v267, %v272
  %v288 = vadd.f32 %v268, %v272
  %v289 = vpack.c.bf16 %v274, %v273
  %v290 = vpack.c.bf16 %v276, %v275
  %v291 = vpack.c.bf16 %v278, %v277
  %v292 = vpack.c.bf16 %v280, %v279
  %v293 = vpack.c.bf16 %v282, %v281
  %v294 = vpack.c.bf16 %v284, %v283
  %v295 = vpack.c.bf16 %v286, %v285
  %v296 = vpack.c.bf16 %v288, %v287
  %v297 = vld [vmem:[%s2] sm:$0xf]
  %v298 = vld [vmem:[%s2 + $0x4] sm:$0xf]
  %v299 = vld [vmem:[%s2 + $0x8] sm:$0xf]
  %v300 = vld [vmem:[%s2 + $0xc] sm:$0xf]
  %v301 = vld [vmem:[%s2 + $0x10] sm:$0xf]
  %v302 = vld [vmem:[%s2 + $0x14] sm:$0xf]
  %v303 = vld [vmem:[%s2 + $0x18] sm:$0xf]
  %v304 = vld [vmem:[%s2 + $0x1c] sm:$0xf]
  %v305 = vld [vmem:[%s2 + $0x20] sm:$0xf]
  %v306 = vld [vmem:[%s2 + $0x24] sm:$0xf]
  %v307 = vld [vmem:[%s2 + $0x28] sm:$0xf]
  %v308 = vld [vmem:[%s2 + $0x2c] sm:$0xf]
  %v309 = vld [vmem:[%s2 + $0x30] sm:$0xf]
  %v310 = vld [vmem:[%s2 + $0x34] sm:$0xf]
  %v311 = vld [vmem:[%s2 + $0x38] sm:$0xf]
  %v312 = vld [vmem:[%s2 + $0x3c] sm:$0xf]
  %v313 = vld [vmem:[%s3] sm:$0x1]
  %v315 = vlaneseq
  %v316 = vshrl.u32 %v315, 7
  %v317 = vsub.s32 0, %v316
  %v318 = vrot.slane %v313, %v317
  %v336 = vunpack.c.l.b16 %v297
  %v337 = vunpack.c.l.b16 %v298
  %v338 = vunpack.c.l.b16 %v299
  %v339 = vunpack.c.l.b16 %v300
  %v340 = vunpack.c.l.b16 %v301
  %v341 = vunpack.c.l.b16 %v302
  %v342 = vunpack.c.l.b16 %v303
  %v343 = vunpack.c.l.b16 %v304
  %v344 = vunpack.c.l.b16 %v305
  %v345 = vunpack.c.l.b16 %v306
  %v346 = vunpack.c.l.b16 %v307
  %v347 = vunpack.c.l.b16 %v308
  %v348 = vunpack.c.l.b16 %v309
  %v349 = vunpack.c.l.b16 %v310
  %v350 = vunpack.c.l.b16 %v311
  %v351 = vunpack.c.l.b16 %v312
  %v352 = vpack.c.b16 %v337, %v336
  %v353 = vpack.c.b16 %v339, %v338
  %v354 = vpack.c.b16 %v341, %v340
  %v355 = vpack.c.b16 %v343, %v342
  %v356 = vpack.c.b16 %v345, %v344
  %v357 = vpack.c.b16 %v347, %v346
  %v358 = vpack.c.b16 %v349, %v348
  %v359 = vpack.c.b16 %v351, %v350
  %368 = vmatprep.subr.bf16.mxu0 0
  %369 = vmatpush1.bf16.msra.mxu0 %v352
  %370 = vmatprep.subr.bf16.mxu0 0
  %371 = vmatpush1.bf16.msra.mxu0 %v353
  %372 = vmatprep.subr.bf16.mxu0 0
  %373 = vmatpush1.bf16.msra.mxu0 %v354
  %374 = vmatprep.subr.bf16.mxu0 0
  %375 = vmatpush1.bf16.msra.mxu0 %v355
  %376 = vmatprep.subr.bf16.mxu0 0
  %377 = vmatpush1.bf16.msra.mxu0 %v356
  %378 = vmatprep.subr.bf16.mxu0 0
  %379 = vmatpush1.bf16.msra.mxu0 %v357
  %380 = vmatprep.subr.bf16.mxu0 0
  %381 = vmatpush1.bf16.msra.mxu0 %v358
  %382 = vmatprep.subr.bf16.mxu0 0
  %383 = vmatpush1.bf16.msra.mxu0 %v359
  %384 = vmatprep.subr.bf16.mxu0 0
  %385 = vmatpush1.bf16.msra.mxu0 0
  %386 = vmatprep.subr.bf16.mxu0 0
  %387 = vmatpush1.bf16.msra.mxu0 0
  %388 = vmatprep.subr.bf16.mxu0 0
  %389 = vmatpush1.bf16.msra.mxu0 0
  %390 = vmatprep.subr.bf16.mxu0 0
  %391 = vmatpush1.bf16.msra.mxu0 0
  %392 = vmatprep.subr.bf16.mxu0 0
  %393 = vmatpush1.bf16.msra.mxu0 0
  %394 = vmatprep.subr.bf16.mxu0 0
  %395 = vmatpush1.bf16.msra.mxu0 0
  %396 = vmatprep.subr.bf16.mxu0 0
  %397 = vmatpush1.bf16.msra.mxu0 0
  %398 = vmatprep.subr.bf16.mxu0 0
  %399 = vmatpush1.bf16.msra.mxu0 0
  %400 = vmatprep.mubr.bf16.mxu0 0
  %401 = vmatmul.mubr.bf16.gmra.mrb[0].mxu0 %v289
  %v402 = vpop.f32.mrb[0].mxu0
  %v403 = vadd.f32 %v318, %v402
  %v404 = vpop.f32.mrb[0].mxu0
  %v405 = vpop.f32.mrb[0].mxu0
  %v406 = vadd.f32 %v318, %v405
  %v407 = vpop.f32.mrb[0].mxu0
  %408 = vmatprep.mubr.bf16.mxu0 0
  %409 = vmatmul.mubr.bf16.gmra.mrb[0].mxu0 %v290
  %v410 = vpop.f32.mrb[0].mxu0
  %v411 = vadd.f32 %v318, %v410
  %v412 = vpop.f32.mrb[0].mxu0
  %v413 = vpop.f32.mrb[0].mxu0
  %v414 = vadd.f32 %v318, %v413
  %v415 = vpop.f32.mrb[0].mxu0
  %416 = vmatprep.mubr.bf16.mxu0 0
  %417 = vmatmul.mubr.bf16.gmra.mrb[0].mxu0 %v291
  %v418 = vpop.f32.mrb[0].mxu0
  %v419 = vadd.f32 %v318, %v418
  %v420 = vpop.f32.mrb[0].mxu0
  %v421 = vpop.f32.mrb[0].mxu0
  %v422 = vadd.f32 %v318, %v421
  %v423 = vpop.f32.mrb[0].mxu0
  %424 = vmatprep.mubr.bf16.mxu0 0
  %425 = vmatmul.mubr.bf16.gmra.mrb[0].mxu0 %v292
  %v426 = vpop.f32.mrb[0].mxu0
  %v427 = vadd.f32 %v318, %v426
  %v428 = vpop.f32.mrb[0].mxu0
  %v429 = vpop.f32.mrb[0].mxu0
  %v430 = vadd.f32 %v318, %v429
  %v431 = vpop.f32.mrb[0].mxu0
  %432 = vmatprep.mubr.bf16.mxu0 0
  %433 = vmatmul.mubr.bf16.gmra.mrb[0].mxu0 %v293
  %v434 = vpop.f32.mrb[0].mxu0
  %v435 = vadd.f32 %v318, %v434
  %v436 = vpop.f32.mrb[0].mxu0
  %v437 = vpop.f32.mrb[0].mxu0
  %v438 = vadd.f32 %v318, %v437
  %v439 = vpop.f32.mrb[0].mxu0
  %440 = vmatprep.mubr.bf16.mxu0 0
  %441 = vmatmul.mubr.bf16.gmra.mrb[0].mxu0 %v294
  %v442 = vpop.f32.mrb[0].mxu0
  %v443 = vadd.f32 %v318, %v442
  %v444 = vpop.f32.mrb[0].mxu0
  %v445 = vpop.f32.mrb[0].mxu0
  %v446 = vadd.f32 %v318, %v445
  %v447 = vpop.f32.mrb[0].mxu0
  %448 = vmatprep.mubr.bf16.mxu0 0
  %449 = vmatmul.mubr.bf16.gmra.mrb[0].mxu0 %v295
  %v450 = vpop.f32.mrb[0].mxu0
  %v451 = vadd.f32 %v318, %v450
  %v452 = vpop.f32.mrb[0].mxu0
  %v453 = vpop.f32.mrb[0].mxu0
  %v454 = vadd.f32 %v318, %v453
  %v455 = vpop.f32.mrb[0].mxu0
  %456 = vmatprep.mubr.bf16.mxu0 0
  %457 = vmatmul.mubr.bf16.gmra.mrb[0].mxu0 %v296
  %v458 = vpop.f32.mrb[0].mxu0
  %v459 = vadd.f32 %v318, %v458
  %v460 = vpop.f32.mrb[0].mxu0
  %v461 = vpop.f32.mrb[0].mxu0
  %v462 = vadd.f32 %v318, %v461
  %v463 = vpop.f32.mrb[0].mxu0
  %464 = vdwg.mxu0
  %v465 = vmul.f32 %v403, %v403
  %v466 = vmul.f32 %v406, %v406
  %v467 = vmul.f32 %v411, %v411
  %v468 = vmul.f32 %v414, %v414
  %v469 = vmul.f32 %v419, %v419
  %v470 = vmul.f32 %v422, %v422
  %v471 = vmul.f32 %v427, %v427
  %v472 = vmul.f32 %v430, %v430
  %v473 = vmul.f32 %v435, %v435
  %v474 = vmul.f32 %v438, %v438
  %v475 = vmul.f32 %v443, %v443
  %v476 = vmul.f32 %v446, %v446
  %v477 = vmul.f32 %v451, %v451
  %v478 = vmul.f32 %v454, %v454
  %v479 = vmul.f32 %v459, %v459
  %v480 = vmul.f32 %v462, %v462
  %v481 = vmul.f32 %v403, %v465
  %v482 = vmul.f32 %v406, %v466
  %v483 = vmul.f32 %v411, %v467
  %v484 = vmul.f32 %v414, %v468
  %v485 = vmul.f32 %v419, %v469
  %v486 = vmul.f32 %v422, %v470
  %v487 = vmul.f32 %v427, %v471
  %v488 = vmul.f32 %v430, %v472
  %v489 = vmul.f32 %v435, %v473
  %v490 = vmul.f32 %v438, %v474
  %v491 = vmul.f32 %v443, %v475
  %v492 = vmul.f32 %v446, %v476
  %v493 = vmul.f32 %v451, %v477
  %v494 = vmul.f32 %v454, %v478
  %v495 = vmul.f32 %v459, %v479
  %v496 = vmul.f32 %v462, %v480
  %v497 = vmul.f32 %v481, 0.044715
  %v498 = vmul.f32 %v482, 0.044715
  %v499 = vmul.f32 %v483, 0.044715
  %v500 = vmul.f32 %v484, 0.044715
  %v501 = vmul.f32 %v485, 0.044715
  %v502 = vmul.f32 %v486, 0.044715
  %v503 = vmul.f32 %v487, 0.044715
  %v504 = vmul.f32 %v488, 0.044715
  %v505 = vmul.f32 %v489, 0.044715
  %v506 = vmul.f32 %v490, 0.044715
  %v507 = vmul.f32 %v491, 0.044715
  %v508 = vmul.f32 %v492, 0.044715
  %v509 = vmul.f32 %v493, 0.044715
  %v510 = vmul.f32 %v494, 0.044715
  %v511 = vmul.f32 %v495, 0.044715
  %v512 = vmul.f32 %v496, 0.044715
  %v513 = vadd.f32 %v403, %v497
  %v514 = vadd.f32 %v406, %v498
  %v515 = vadd.f32 %v411, %v499
  %v516 = vadd.f32 %v414, %v500
  %v517 = vadd.f32 %v419, %v501
  %v518 = vadd.f32 %v422, %v502
  %v519 = vadd.f32 %v427, %v503
  %v520 = vadd.f32 %v430, %v504
  %v521 = vadd.f32 %v435, %v505
  %v522 = vadd.f32 %v438, %v506
  %v523 = vadd.f32 %v443, %v507
  %v524 = vadd.f32 %v446, %v508
  %v525 = vadd.f32 %v451, %v509
  %v526 = vadd.f32 %v454, %v510
  %v527 = vadd.f32 %v459, %v511
  %v528 = vadd.f32 %v462, %v512
  %v529 = vmul.f32 %v513, 0.7978846
  %v530 = vmul.f32 %v514, 0.7978846
  %v531 = vmul.f32 %v515, 0.7978846
  %v532 = vmul.f32 %v516, 0.7978846
  %v533 = vmul.f32 %v517, 0.7978846
  %v534 = vmul.f32 %v518, 0.7978846
  %v535 = vmul.f32 %v519, 0.7978846
  %v536 = vmul.f32 %v520, 0.7978846
  %v537 = vmul.f32 %v521, 0.7978846
  %v538 = vmul.f32 %v522, 0.7978846
  %v539 = vmul.f32 %v523, 0.7978846
  %v540 = vmul.f32 %v524, 0.7978846
  %v541 = vmul.f32 %v525, 0.7978846
  %v542 = vmul.f32 %v526, 0.7978846
  %v543 = vmul.f32 %v527, 0.7978846
  %v544 = vmul.f32 %v528, 0.7978846
  %v545 = vtanh.pop %v529
  %v546 = vtanh.pop %v530
  %v547 = vtanh.pop %v531
  %v548 = vtanh.pop %v532
  %v549 = vtanh.pop %v533
  %v550 = vtanh.pop %v534
  %v551 = vtanh.pop %v535
  %v552 = vtanh.pop %v536
  %v553 = vtanh.pop %v537
  %v554 = vtanh.pop %v538
  %v555 = vtanh.pop %v539
  %v556 = vtanh.pop %v540
  %v557 = vtanh.pop %v541
  %v558 = vtanh.pop %v542
  %v559 = vtanh.pop %v543
  %v560 = vtanh.pop %v544
  %v561 = vadd.f32 %v545, 1.0
  %v562 = vadd.f32 %v546, 1.0
  %v563 = vadd.f32 %v547, 1.0
  %v564 = vadd.f32 %v548, 1.0
  %v565 = vadd.f32 %v549, 1.0
  %v566 = vadd.f32 %v550, 1.0
  %v567 = vadd.f32 %v551, 1.0
  %v568 = vadd.f32 %v552, 1.0
  %v569 = vadd.f32 %v553, 1.0
  %v570 = vadd.f32 %v554, 1.0
  %v571 = vadd.f32 %v555, 1.0
  %v572 = vadd.f32 %v556, 1.0
  %v573 = vadd.f32 %v557, 1.0
  %v574 = vadd.f32 %v558, 1.0
  %v575 = vadd.f32 %v559, 1.0
  %v576 = vadd.f32 %v560, 1.0
  %v577 = vmul.f32 %v561, 0.5
  %v578 = vmul.f32 %v562, 0.5
  %v579 = vmul.f32 %v563, 0.5
  %v580 = vmul.f32 %v564, 0.5
  %v581 = vmul.f32 %v565, 0.5
  %v582 = vmul.f32 %v566, 0.5
  %v583 = vmul.f32 %v567, 0.5
  %v584 = vmul.f32 %v568, 0.5
  %v585 = vmul.f32 %v569, 0.5
  %v586 = vmul.f32 %v570, 0.5
  %v587 = vmul.f32 %v571, 0.5
  %v588 = vmul.f32 %v572, 0.5
  %v589 = vmul.f32 %v573, 0.5
  %v590 = vmul.f32 %v574, 0.5
  %v591 = vmul.f32 %v575, 0.5
  %v592 = vmul.f32 %v576, 0.5
  %v593 = vmul.f32 %v403, %v577
  %v594 = vmul.f32 %v406, %v578
  %v595 = vmul.f32 %v411, %v579
  %v596 = vmul.f32 %v414, %v580
  %v597 = vmul.f32 %v419, %v581
  %v598 = vmul.f32 %v422, %v582
  %v599 = vmul.f32 %v427, %v583
  %v600 = vmul.f32 %v430, %v584
  %v601 = vmul.f32 %v435, %v585
  %v602 = vmul.f32 %v438, %v586
  %v603 = vmul.f32 %v443, %v587
  %v604 = vmul.f32 %v446, %v588
  %v605 = vmul.f32 %v451, %v589
  %v606 = vmul.f32 %v454, %v590
  %v607 = vmul.f32 %v459, %v591
  %v608 = vmul.f32 %v462, %v592
  %v609 = vpack.c.bf16 %v594, %v593
  %v610 = vpack.c.bf16 %v596, %v595
  %v611 = vpack.c.bf16 %v598, %v597
  %v612 = vpack.c.bf16 %v600, %v599
  %v613 = vpack.c.bf16 %v602, %v601
  %v614 = vpack.c.bf16 %v604, %v603
  %v615 = vpack.c.bf16 %v606, %v605
  %v616 = vpack.c.bf16 %v608, %v607
  %v617 = vld [vmem:[%s4] sm:$0xf]
  %v618 = vld [vmem:[%s4 + $0x4] sm:$0xf]
  %v619 = vld [vmem:[%s4 + $0x8] sm:$0xf]
  %v620 = vld [vmem:[%s4 + $0xc] sm:$0xf]
  %v621 = vld [vmem:[%s4 + $0x10] sm:$0xf]
  %v622 = vld [vmem:[%s4 + $0x14] sm:$0xf]
  %v623 = vld [vmem:[%s4 + $0x18] sm:$0xf]
  %v624 = vld [vmem:[%s4 + $0x1c] sm:$0xf]
  %v625 = vld [vmem:[%s4 + $0x20] sm:$0xf]
  %v626 = vld [vmem:[%s4 + $0x24] sm:$0xf]
  %v627 = vld [vmem:[%s4 + $0x28] sm:$0xf]
  %v628 = vld [vmem:[%s4 + $0x2c] sm:$0xf]
  %v629 = vld [vmem:[%s4 + $0x30] sm:$0xf]
  %v630 = vld [vmem:[%s4 + $0x34] sm:$0xf]
  %v631 = vld [vmem:[%s4 + $0x38] sm:$0xf]
  %v632 = vld [vmem:[%s4 + $0x3c] sm:$0xf]
  %v633 = vld [vmem:[%s5] sm:$0x1]
  %v635 = vlaneseq
  %v636 = vshrl.u32 %v635, 7
  %v637 = vsub.s32 0, %v636
  %v638 = vrot.slane %v633, %v637
  %v656 = vunpack.c.l.b16 %v617
  %v657 = vunpack.c.l.b16 %v618
  %v658 = vunpack.c.l.b16 %v619
  %v659 = vunpack.c.l.b16 %v620
  %v660 = vunpack.c.l.b16 %v621
  %v661 = vunpack.c.l.b16 %v622
  %v662 = vunpack.c.l.b16 %v623
  %v663 = vunpack.c.l.b16 %v624
  %v664 = vunpack.c.l.b16 %v625
  %v665 = vunpack.c.l.b16 %v626
  %v666 = vunpack.c.l.b16 %v627
  %v667 = vunpack.c.l.b16 %v628
  %v668 = vunpack.c.l.b16 %v629
  %v669 = vunpack.c.l.b16 %v630
  %v670 = vunpack.c.l.b16 %v631
  %v671 = vunpack.c.l.b16 %v632
  %v672 = vpack.c.b16 %v657, %v656
  %v673 = vpack.c.b16 %v659, %v658
  %v674 = vpack.c.b16 %v661, %v660
  %v675 = vpack.c.b16 %v663, %v662
  %v676 = vpack.c.b16 %v665, %v664
  %v677 = vpack.c.b16 %v667, %v666
  %v678 = vpack.c.b16 %v669, %v668
  %v679 = vpack.c.b16 %v671, %v670
  %688 = vmatprep.subr.bf16.mxu0 0
  %689 = vmatpush1.bf16.msra.mxu0 %v672
  %690 = vmatprep.subr.bf16.mxu0 0
  %691 = vmatpush1.bf16.msra.mxu0 %v673
  %692 = vmatprep.subr.bf16.mxu0 0
  %693 = vmatpush1.bf16.msra.mxu0 %v674
  %694 = vmatprep.subr.bf16.mxu0 0
  %695 = vmatpush1.bf16.msra.mxu0 %v675
  %696 = vmatprep.subr.bf16.mxu0 0
  %697 = vmatpush1.bf16.msra.mxu0 %v676
  %698 = vmatprep.subr.bf16.mxu0 0
  %699 = vmatpush1.bf16.msra.mxu0 %v677
  %700 = vmatprep.subr.bf16.mxu0 0
  %701 = vmatpush1.bf16.msra.mxu0 %v678
  %702 = vmatprep.subr.bf16.mxu0 0
  %703 = vmatpush1.bf16.msra.mxu0 %v679
  %704 = vmatprep.subr.bf16.mxu0 0
  %705 = vmatpush1.bf16.msra.mxu0 0
  %706 = vmatprep.subr.bf16.mxu0 0
  %707 = vmatpush1.bf16.msra.mxu0 0
  %708 = vmatprep.subr.bf16.mxu0 0
  %709 = vmatpush1.bf16.msra.mxu0 0
  %710 = vmatprep.subr.bf16.mxu0 0
  %711 = vmatpush1.bf16.msra.mxu0 0
  %712 = vmatprep.subr.bf16.mxu0 0
  %713 = vmatpush1.bf16.msra.mxu0 0
  %714 = vmatprep.subr.bf16.mxu0 0
  %715 = vmatpush1.bf16.msra.mxu0 0
  %716 = vmatprep.subr.bf16.mxu0 0
  %717 = vmatpush1.bf16.msra.mxu0 0
  %718 = vmatprep.subr.bf16.mxu0 0
  %719 = vmatpush1.bf16.msra.mxu0 0
  %720 = vmatprep.mubr.bf16.mxu0 0
  %721 = vmatmul.mubr.bf16.gmra.mrb[0].mxu0 %v609
  %v722 = vpop.f32.mrb[0].mxu0
  %v723 = vadd.f32 %v638, %v722
  %v724 = vpop.f32.mrb[0].mxu0
  %v725 = vpop.f32.mrb[0].mxu0
  %v726 = vadd.f32 %v638, %v725
  %v727 = vpop.f32.mrb[0].mxu0
  %728 = vmatprep.mubr.bf16.mxu0 0
  %729 = vmatmul.mubr.bf16.gmra.mrb[0].mxu0 %v610
  %v730 = vpop.f32.mrb[0].mxu0
  %v731 = vadd.f32 %v638, %v730
  %v732 = vpop.f32.mrb[0].mxu0
  %v733 = vpop.f32.mrb[0].mxu0
  %v734 = vadd.f32 %v638, %v733
  %v735 = vpop.f32.mrb[0].mxu0
  %736 = vmatprep.mubr.bf16.mxu0 0
  %737 = vmatmul.mubr.bf16.gmra.mrb[0].mxu0 %v611
  %v738 = vpop.f32.mrb[0].mxu0
  %v739 = vadd.f32 %v638, %v738
  %v740 = vpop.f32.mrb[0].mxu0
  %v741 = vpop.f32.mrb[0].mxu0
  %v742 = vadd.f32 %v638, %v741
  %v743 = vpop.f32.mrb[0].mxu0
  %744 = vmatprep.mubr.bf16.mxu0 0
  %745 = vmatmul.mubr.bf16.gmra.mrb[0].mxu0 %v612
  %v746 = vpop.f32.mrb[0].mxu0
  %v747 = vadd.f32 %v638, %v746
  %v748 = vpop.f32.mrb[0].mxu0
  %v749 = vpop.f32.mrb[0].mxu0
  %v750 = vadd.f32 %v638, %v749
  %v751 = vpop.f32.mrb[0].mxu0
  %752 = vmatprep.mubr.bf16.mxu0 0
  %753 = vmatmul.mubr.bf16.gmra.mrb[0].mxu0 %v613
  %v754 = vpop.f32.mrb[0].mxu0
  %v755 = vadd.f32 %v638, %v754
  %v756 = vpop.f32.mrb[0].mxu0
  %v757 = vpop.f32.mrb[0].mxu0
  %v758 = vadd.f32 %v638, %v757
  %v759 = vpop.f32.mrb[0].mxu0
  %760 = vmatprep.mubr.bf16.mxu0 0
  %761 = vmatmul.mubr.bf16.gmra.mrb[0].mxu0 %v614
  %v762 = vpop.f32.mrb[0].mxu0
  %v763 = vadd.f32 %v638, %v762
  %v764 = vpop.f32.mrb[0].mxu0
  %v765 = vpop.f32.mrb[0].mxu0
  %v766 = vadd.f32 %v638, %v765
  %v767 = vpop.f32.mrb[0].mxu0
  %768 = vmatprep.mubr.bf16.mxu0 0
  %769 = vmatmul.mubr.bf16.gmra.mrb[0].mxu0 %v615
  %v770 = vpop.f32.mrb[0].mxu0
  %v771 = vadd.f32 %v638, %v770
  %v772 = vpop.f32.mrb[0].mxu0
  %v773 = vpop.f32.mrb[0].mxu0
  %v774 = vadd.f32 %v638, %v773
  %v775 = vpop.f32.mrb[0].mxu0
  %776 = vmatprep.mubr.bf16.mxu0 0
  %777 = vmatmul.mubr.bf16.gmra.mrb[0].mxu0 %v616
  %v778 = vpop.f32.mrb[0].mxu0
  %v779 = vadd.f32 %v638, %v778
  %v780 = vpop.f32.mrb[0].mxu0
  %v781 = vpop.f32.mrb[0].mxu0
  %v782 = vadd.f32 %v638, %v781
  %v783 = vpop.f32.mrb[0].mxu0
  %784 = vdwg.mxu0
  %v785 = vadd.f32 %v24, %v273
  %v786 = vadd.f32 %v25, %v274
  %v787 = vadd.f32 %v26, %v275
  %v788 = vadd.f32 %v27, %v276
  %v789 = vadd.f32 %v28, %v277
  %v790 = vadd.f32 %v29, %v278
  %v791 = vadd.f32 %v30, %v279
  %v792 = vadd.f32 %v31, %v280
  %v793 = vadd.f32 %v32, %v281
  %v794 = vadd.f32 %v33, %v282
  %v795 = vadd.f32 %v34, %v283
  %v796 = vadd.f32 %v35, %v284
  %v797 = vadd.f32 %v36, %v285
  %v798 = vadd.f32 %v37, %v286
  %v799 = vadd.f32 %v38, %v287
  %v800 = vadd.f32 %v39, %v288
  %v801 = vadd.f32 %v785, %v723
  %v802 = vadd.f32 %v786, %v726
  %v803 = vadd.f32 %v787, %v731
  %v804 = vadd.f32 %v788, %v734
  %v805 = vadd.f32 %v789, %v739
  %v806 = vadd.f32 %v790, %v742
  %v807 = vadd.f32 %v791, %v747
  %v808 = vadd.f32 %v792, %v750
  %v809 = vadd.f32 %v793, %v755
  %v810 = vadd.f32 %v794, %v758
  %v811 = vadd.f32 %v795, %v763
  %v812 = vadd.f32 %v796, %v766
  %v813 = vadd.f32 %v797, %v771
  %v814 = vadd.f32 %v798, %v774
  %v815 = vadd.f32 %v799, %v779
  %v816 = vadd.f32 %v800, %v782
  %817 = vst [vmem:[%s6] sm:$0xff] %v801
  %818 = vst [vmem:[%s6 + $0x8] sm:$0xff] %v802
  %819 = vst [vmem:[%s6 + $0x10] sm:$0xff] %v803
  %820 = vst [vmem:[%s6 + $0x18] sm:$0xff] %v804
  %821 = vst [vmem:[%s6 + $0x20] sm:$0xff] %v805
  %822 = vst [vmem:[%s6 + $0x28] sm:$0xff] %v806
  %823 = vst [vmem:[%s6 + $0x30] sm:$0xff] %v807
  %824 = vst [vmem:[%s6 + $0x38] sm:$0xff] %v808
  %825 = vst [vmem:[%s6 + $0x40] sm:$0xff] %v809
  %826 = vst [vmem:[%s6 + $0x48] sm:$0xff] %v810
  %827 = vst [vmem:[%s6 + $0x50] sm:$0xff] %v811
  %828 = vst [vmem:[%s6 + $0x58] sm:$0xff] %v812
  %829 = vst [vmem:[%s6 + $0x60] sm:$0xff] %v813
  %830 = vst [vmem:[%s6 + $0x68] sm:$0xff] %v814
  %831 = vst [vmem:[%s6 + $0x70] sm:$0xff] %v815
  %832 = vst [vmem:[%s6 + $0x78] sm:$0xff] %v816
  // Predicated region
  $region26: #{swin_block_forward.7} parent=0 // pred_check
    _
  $region27: #{swin_block_forward.7} parent=0 // pred_check_branch
    %834 = sbr.rel (0) target = $region29
  $region28: #{swin_block_forward.7} parent=0 // pred_region
    _
  $region29: #{swin_block_forward.7} parent=0 // pred_fallthru
    _
  // Predicated region
  $region30: #{swin_block_forward.7} parent=0 // pred_check
    _
  $region31: #{swin_block_forward.7} parent=0 // pred_check_branch
    %836 = sbr.rel (0) target = $region33
  $region32: #{swin_block_forward.7} parent=0 // pred_region
    _
  $region33: #{swin_block_forward.7} parent=0 // pred_fallthru
    _

</llo_original>
